<compile_context>
chip_gen: v6e
topology: v6e:2x2x1
jax: 0.10.0
libtpu: 0.0.40
codegen_flags: <defaults>
</compile_context>

<pallas_src>
import math

import jax
import jax.numpy as jnp
from jax.experimental import pallas as pl
from jax.experimental.pallas import tpu as pltpu

# ----------------------- model hyper-parameters -----------------------------
NUM_LAYERS = 2
D_MODEL = 32
NHEAD = 4
HEAD_DIM = D_MODEL // NHEAD
DIM_FF = 64
SEQ = 16          # e.g. 4x4 feature map flattened
BATCH = 2
LN_EPS = 1e-5

# rows of the packed per-layer vector table (biases / LN params)
(_VEC_BQK, _VEC_B1, _VEC_BV, _VEC_BO, _VEC_B2,
 _VEC_G1, _VEC_BE1, _VEC_G2, _VEC_BE2) = range(9)
NVEC = 9
VEC_W = max(2 * D_MODEL, DIM_FF)


# ----------------------------- Pallas kernel --------------------------------
def encoder_kernel(x_ref, pos_ref, wqk_ref, wv_ref, wo_ref, w1_ref, w2_ref,
                   vec_ref, out_ref):
    """Full DETR encoder (all layers, full batch) in one invocation."""
    f32 = jnp.float32
    bf16 = jnp.bfloat16
    B, S, D = x_ref.shape
    BS = B * S

    x2d = x_ref[...].astype(f32).reshape(BS, D)      # value / residual stream
    pos2d = pos_ref[...].astype(f32).reshape(BS, D)  # positional embedding
    scale = 1.0 / math.sqrt(HEAD_DIM)

    def layer_norm(v, gamma, beta):
        mu = jnp.mean(v, axis=-1, keepdims=True)
        var = jnp.mean((v - mu) ** 2, axis=-1, keepdims=True)
        return (v - mu) * jax.lax.rsqrt(var + LN_EPS) * gamma + beta

    h = x2d
    for l in range(NUM_LAYERS):                       # static unrolled layer loop
        w_qk = wqk_ref[l]                             # (D, 2D)  bf16
        w_v = wv_ref[l]                               # (D, D)   bf16
        w_o = wo_ref[l]                               # (D, D)   bf16
        w_1 = w1_ref[l]                               # (D, F)   bf16
        w_2 = w2_ref[l]                               # (F, D)   bf16
        vec = vec_ref[l].astype(f32)                  # (NVEC, VEC_W) f32
        b_qk = vec[_VEC_BQK:_VEC_BQK + 1, :2 * D]
        b1 = vec[_VEC_B1:_VEC_B1 + 1, :DIM_FF]
        bv = vec[_VEC_BV:_VEC_BV + 1, :D]
        bo = vec[_VEC_BO:_VEC_BO + 1, :D]
        b2 = vec[_VEC_B2:_VEC_B2 + 1, :D]
        g1 = vec[_VEC_G1:_VEC_G1 + 1, :D]
        be1 = vec[_VEC_BE1:_VEC_BE1 + 1, :D]
        g2 = vec[_VEC_G2:_VEC_G2 + 1, :D]
        be2 = vec[_VEC_BE2:_VEC_BE2 + 1, :D]

        # q = k = src + pos, value = src; fused Q|K projection.
        qk_in = h + pos2d
        qk = jnp.dot(qk_in.astype(bf16), w_qk, preferred_element_type=f32) + b_qk
        v = jnp.dot(h.astype(bf16), w_v, preferred_element_type=f32) + bv
        q2d = qk[:, :D]
        k2d = qk[:, D:]

        # Multi-head attention: per-head loop, batched over B via 3-D einsum.
        head_outs = []
        for hh in range(NHEAD):
            lo = hh * HEAD_DIM
            hi = lo + HEAD_DIM
            qh = q2d[:, lo:hi].reshape(B, S, HEAD_DIM).astype(bf16)
            kh = k2d[:, lo:hi].reshape(B, S, HEAD_DIM).astype(bf16)
            vh = v[:, lo:hi].reshape(B, S, HEAD_DIM).astype(bf16)
            s = jnp.einsum("bqd,bkd->bqk", qh, kh,
                           preferred_element_type=f32) * scale        # (B,S,S)
            m = jnp.max(s, axis=-1, keepdims=True)
            p = jnp.exp(s - m)
            p = p * pl.reciprocal(jnp.sum(p, axis=-1, keepdims=True), approx=True)
            o = jnp.einsum("bqk,bkd->bqd", p.astype(bf16), vh,
                           preferred_element_type=f32)                # (B,S,hd)
            head_outs.append(o.reshape(BS, HEAD_DIM))
        attn = jnp.concatenate(head_outs, axis=-1)                    # (BS, D)
        attn = jnp.dot(attn.astype(bf16), w_o, preferred_element_type=f32) + bo

        # Residual + LayerNorm 1
        h1 = layer_norm(h + attn, g1, be1)

        # Feed-forward (ReLU) + residual + LayerNorm 2
        ff = jnp.dot(h1.astype(bf16), w_1, preferred_element_type=f32) + b1
        ff = jnp.maximum(ff, 0.0)
        ff = jnp.dot(ff.astype(bf16), w_2, preferred_element_type=f32) + b2
        h = layer_norm(h1 + ff, g2, be2)

    out_ref[...] = h.reshape(B, S, D).astype(out_ref.dtype)


# ------------------------------- wrapper -------------------------------------
def _full_spec(shape):
    n = len(shape)
    return pl.BlockSpec(shape, lambda i, _n=n: (0,) * _n)


def _stack_params(layer_params_list):
    """Stack per-layer params along a leading L axis; fuse Q|K; pack vectors."""
    def st(name):
        return jnp.stack([p[name] for p in layer_params_list], axis=0)

    w_qk = jnp.concatenate([st("wq"), st("wk")], axis=-1).astype(jnp.bfloat16)
    w_v = st("wv").astype(jnp.bfloat16)
    w_o = st("wo").astype(jnp.bfloat16)
    w_1 = st("w1").astype(jnp.bfloat16)
    w_2 = st("w2").astype(jnp.bfloat16)

    def pad_row(r):
        return jnp.pad(r, ((0, 0), (0, VEC_W - r.shape[-1])))

    rows = [
        jnp.concatenate([st("bq"), st("bk")], axis=-1),   # _VEC_BQK
        st("b1"),                                         # _VEC_B1
        st("bv"), st("bo"), st("b2"),                     # _VEC_BV/_BO/_B2
        st("g1"), st("be1"), st("g2"), st("be2"),         # LN params
    ]
    vec = jnp.stack([pad_row(r) for r in rows], axis=1).astype(jnp.float32)
    return w_qk, w_v, w_o, w_1, w_2, vec


def transformer_encoder(src, pos, layer_params_list):
    """src, pos: (S, B, D) as in DETR. Returns (S, B, D)."""
    # TODO(synk): attention mask / src_key_padding_mask support (None in this path).
    S, B, D = src.shape
    x = jnp.transpose(src, (1, 0, 2))   # (B, S, D)
    p = jnp.transpose(pos, (1, 0, 2))
    w_qk, w_v, w_o, w_1, w_2, vec = _stack_params(layer_params_list)

    args = (x, p, w_qk, w_v, w_o, w_1, w_2, vec)
    out = pl.pallas_call(
        encoder_kernel,
        out_shape=jax.ShapeDtypeStruct((B, S, D), x.dtype),
        grid_spec=pltpu.PrefetchScalarGridSpec(
            num_scalar_prefetch=0,
            grid=(1,),                                   # single fused step
            in_specs=[_full_spec(a.shape) for a in args],
            out_specs=_full_spec((B, S, D)),
        ),
        compiler_params=pltpu.CompilerParams(
            dimension_semantics=("arbitrary",),
        ),
    )(*args)
    return jnp.transpose(out, (1, 0, 2))


# --------------------------- pure-JAX reference ------------------------------
def encoder_ref(src, pos, layer_params_list):
    """f32 reference for DETR's post-norm encoder. src/pos: (S, B, D)."""
    x = jnp.transpose(src, (1, 0, 2))
    pe = jnp.transpose(pos, (1, 0, 2))
    B, S, D = x.shape

    def ln(v, g, b):
        mu = jnp.mean(v, axis=-1, keepdims=True)
        var = jnp.mean((v - mu) ** 2, axis=-1, keepdims=True)
        return (v - mu) * jax.lax.rsqrt(var + LN_EPS) * g + b

    def heads(t):
        return t.reshape(B, S, NHEAD, HEAD_DIM).transpose(0, 2, 1, 3)

    h = x
    for p in layer_params_list:
        qk_in = h + pe
        q = heads(qk_in @ p["wq"] + p["bq"])
        k = heads(qk_in @ p["wk"] + p["bk"])
        v = heads(h @ p["wv"] + p["bv"])
        s = jnp.einsum("bhqd,bhkd->bhqk", q, k) / math.sqrt(HEAD_DIM)
        a = jax.nn.softmax(s, axis=-1)
        o = jnp.einsum("bhqk,bhkd->bhqd", a, v).transpose(0, 2, 1, 3).reshape(B, S, D)
        o = o @ p["wo"] + p["bo"]
        h1 = ln(h + o, p["g1"], p["be1"])
        ff = jnp.maximum(h1 @ p["w1"] + p["b1"], 0.0) @ p["w2"] + p["b2"]
        h = ln(h1 + ff, p["g2"], p["be2"])
    return jnp.transpose(h, (1, 0, 2))


# --------------------------- parameter creation ------------------------------
def init_layer_params(key):
    ks = jax.random.split(key, 16)
    s = 0.05
    D, F = D_MODEL, DIM_FF
    n = jax.random.normal
    return {
        "wq": s * n(ks[0], (D, D), jnp.float32),
        "bq": 0.1 * n(ks[1], (D,), jnp.float32),
        "wk": s * n(ks[2], (D, D), jnp.float32),
        "bk": 0.1 * n(ks[3], (D,), jnp.float32),
        "wv": s * n(ks[4], (D, D), jnp.float32),
        "bv": 0.1 * n(ks[5], (D,), jnp.float32),
        "wo": s * n(ks[6], (D, D), jnp.float32),
        "bo": 0.1 * n(ks[7], (D,), jnp.float32),
        "w1": s * n(ks[8], (D, F), jnp.float32),
        "b1": 0.1 * n(ks[9], (F,), jnp.float32),
        "w2": s * n(ks[10], (F, D), jnp.float32),
        "b2": 0.1 * n(ks[11], (D,), jnp.float32),
        "g1": 1.0 + 0.1 * n(ks[12], (D,), jnp.float32),
        "be1": 0.1 * n(ks[13], (D,), jnp.float32),
        "g2": 1.0 + 0.1 * n(ks[14], (D,), jnp.float32),
        "be2": 0.1 * n(ks[15], (D,), jnp.float32),
    }


if __name__ == "__main__":
    root = jax.random.PRNGKey(0)
    k_src, k_pos, k_layers = jax.random.split(root, 3)

    src = jax.random.normal(k_src, (SEQ, BATCH, D_MODEL), jnp.float32)
    pos = jax.random.normal(k_pos, (SEQ, BATCH, D_MODEL), jnp.float32)

    layer_keys = jax.random.split(k_layers, NUM_LAYERS)
    layer_params = [init_layer_params(k) for k in layer_keys]

    out = jax.jit(transformer_encoder)(src, pos, layer_params)
    out = jax.block_until_ready(out)
    assert out.shape == (SEQ, BATCH, D_MODEL)
    assert bool(jnp.all(jnp.isfinite(out)))

    # Correctness vs. pure-JAX f32 reference (loose tolerance for bf16 matmuls).
    ref = encoder_ref(src, pos, layer_params)
    err = float(jnp.max(jnp.abs(out - ref)))
    assert bool(jnp.allclose(out, ref, atol=5e-2, rtol=5e-2)), err

    print("KERNEL_OK")
</pallas_src>

<mosaic_0001>
module attributes {stable_mosaic.version = 11 : i64} {
  func.func @encoder_kernel(%arg0: i32, %arg1: memref<2x16x32xf32, #tpu.memory_space<vmem>>, %arg2: memref<2x16x32xf32, #tpu.memory_space<vmem>>, %arg3: memref<2x32x64xbf16, #tpu.memory_space<vmem>>, %arg4: memref<2x32x32xbf16, #tpu.memory_space<vmem>>, %arg5: memref<2x32x32xbf16, #tpu.memory_space<vmem>>, %arg6: memref<2x32x64xbf16, #tpu.memory_space<vmem>>, %arg7: memref<2x64x32xbf16, #tpu.memory_space<vmem>>, %arg8: memref<2x9x64xf32, #tpu.memory_space<vmem>>, %arg9: memref<2x16x32xf32, #tpu.memory_space<vmem>>) attributes {dimension_semantics = [#tpu.dimension_semantics<arbitrary>], iteration_bounds = array<i64: 1>, scalar_prefetch = 0 : i64, scratch_operands = 0 : i64, tpu.core_type = #tpu.core_type<tc>, window_params = [{pipeline_mode = #tpu.pipeline_mode<synchronous>, transform_indices = @transform_0, window_bounds = array<i64: 2, 16, 32>}, {pipeline_mode = #tpu.pipeline_mode<synchronous>, transform_indices = @transform_1, window_bounds = array<i64: 2, 16, 32>}, {pipeline_mode = #tpu.pipeline_mode<synchronous>, transform_indices = @transform_2, window_bounds = array<i64: 2, 32, 64>}, {pipeline_mode = #tpu.pipeline_mode<synchronous>, transform_indices = @transform_3, window_bounds = array<i64: 2, 32, 32>}, {pipeline_mode = #tpu.pipeline_mode<synchronous>, transform_indices = @transform_4, window_bounds = array<i64: 2, 32, 32>}, {pipeline_mode = #tpu.pipeline_mode<synchronous>, transform_indices = @transform_5, window_bounds = array<i64: 2, 32, 64>}, {pipeline_mode = #tpu.pipeline_mode<synchronous>, transform_indices = @transform_6, window_bounds = array<i64: 2, 64, 32>}, {pipeline_mode = #tpu.pipeline_mode<synchronous>, transform_indices = @transform_7, window_bounds = array<i64: 2, 9, 64>}, {pipeline_mode = #tpu.pipeline_mode<synchronous>, transform_indices = @transform_8, window_bounds = array<i64: 2, 16, 32>}]} {
    %c0 = arith.constant 0 : index
    %c0_0 = arith.constant 0 : index
    %c0_1 = arith.constant 0 : index
    %0 = vector.load %arg1[%c0, %c0_0, %c0_1] : memref<2x16x32xf32, #tpu.memory_space<vmem>>, vector<2x16x32xf32>
    %1 = vector.shape_cast %0 : vector<2x16x32xf32> to vector<32x32xf32>
    %c0_2 = arith.constant 0 : index
    %c0_3 = arith.constant 0 : index
    %c0_4 = arith.constant 0 : index
    %2 = vector.load %arg2[%c0_2, %c0_3, %c0_4] : memref<2x16x32xf32, #tpu.memory_space<vmem>>, vector<2x16x32xf32>
    %3 = vector.shape_cast %2 : vector<2x16x32xf32> to vector<32x32xf32>
    %c0_5 = arith.constant 0 : index
    %c0_6 = arith.constant 0 : index
    %c0_7 = arith.constant 0 : index
    %4 = vector.load %arg3[%c0_5, %c0_6, %c0_7] : memref<2x32x64xbf16, #tpu.memory_space<vmem>>, vector<1x32x64xbf16>
    %5 = vector.shape_cast %4 : vector<1x32x64xbf16> to vector<32x64xbf16>
    %c0_8 = arith.constant 0 : index
    %c0_9 = arith.constant 0 : index
    %c0_10 = arith.constant 0 : index
    %6 = vector.load %arg4[%c0_8, %c0_9, %c0_10] : memref<2x32x32xbf16, #tpu.memory_space<vmem>>, vector<1x32x32xbf16>
    %7 = vector.shape_cast %6 : vector<1x32x32xbf16> to vector<32x32xbf16>
    %c0_11 = arith.constant 0 : index
    %c0_12 = arith.constant 0 : index
    %c0_13 = arith.constant 0 : index
    %8 = vector.load %arg5[%c0_11, %c0_12, %c0_13] : memref<2x32x32xbf16, #tpu.memory_space<vmem>>, vector<1x32x32xbf16>
    %9 = vector.shape_cast %8 : vector<1x32x32xbf16> to vector<32x32xbf16>
    %c0_14 = arith.constant 0 : index
    %c0_15 = arith.constant 0 : index
    %c0_16 = arith.constant 0 : index
    %10 = vector.load %arg6[%c0_14, %c0_15, %c0_16] : memref<2x32x64xbf16, #tpu.memory_space<vmem>>, vector<1x32x64xbf16>
    %11 = vector.shape_cast %10 : vector<1x32x64xbf16> to vector<32x64xbf16>
    %c0_17 = arith.constant 0 : index
    %c0_18 = arith.constant 0 : index
    %c0_19 = arith.constant 0 : index
    %12 = vector.load %arg7[%c0_17, %c0_18, %c0_19] : memref<2x64x32xbf16, #tpu.memory_space<vmem>>, vector<1x64x32xbf16>
    %13 = vector.shape_cast %12 : vector<1x64x32xbf16> to vector<64x32xbf16>
    %c0_20 = arith.constant 0 : index
    %c0_21 = arith.constant 0 : index
    %c0_22 = arith.constant 0 : index
    %14 = vector.load %arg8[%c0_20, %c0_21, %c0_22] : memref<2x9x64xf32, #tpu.memory_space<vmem>>, vector<1x9x64xf32>
    %15 = vector.shape_cast %14 : vector<1x9x64xf32> to vector<9x64xf32>
    %16 = vector.extract_strided_slice %15 {offsets = [0, 0], sizes = [1, 64], strides = [1, 1]} : vector<9x64xf32> to vector<1x64xf32>
    %17 = vector.extract_strided_slice %15 {offsets = [1, 0], sizes = [1, 64], strides = [1, 1]} : vector<9x64xf32> to vector<1x64xf32>
    %18 = vector.extract_strided_slice %15 {offsets = [2, 0], sizes = [1, 32], strides = [1, 1]} : vector<9x64xf32> to vector<1x32xf32>
    %19 = vector.extract_strided_slice %15 {offsets = [3, 0], sizes = [1, 32], strides = [1, 1]} : vector<9x64xf32> to vector<1x32xf32>
    %20 = vector.extract_strided_slice %15 {offsets = [4, 0], sizes = [1, 32], strides = [1, 1]} : vector<9x64xf32> to vector<1x32xf32>
    %21 = vector.extract_strided_slice %15 {offsets = [5, 0], sizes = [1, 32], strides = [1, 1]} : vector<9x64xf32> to vector<1x32xf32>
    %22 = vector.extract_strided_slice %15 {offsets = [6, 0], sizes = [1, 32], strides = [1, 1]} : vector<9x64xf32> to vector<1x32xf32>
    %23 = vector.extract_strided_slice %15 {offsets = [7, 0], sizes = [1, 32], strides = [1, 1]} : vector<9x64xf32> to vector<1x32xf32>
    %24 = vector.extract_strided_slice %15 {offsets = [8, 0], sizes = [1, 32], strides = [1, 1]} : vector<9x64xf32> to vector<1x32xf32>
    %25 = arith.addf %1, %3 : vector<32x32xf32>
    %26 = arith.truncf %25 : vector<32x32xf32> to vector<32x32xbf16>
    %cst = arith.constant dense<0.000000e+00> : vector<32x64xf32>
    %27 = tpu.matmul %26, %5, %cst {dimension_numbers = #tpu.dot_dimension_numbers<[1], [0], [0], [1], [0, 0, 1, 1], [], []>} : vector<32x32xbf16>, vector<32x64xbf16>, vector<32x64xf32> -> vector<32x64xf32>
    %28 = vector.broadcast %16 : vector<1x64xf32> to vector<32x64xf32>
    %29 = arith.addf %27, %28 : vector<32x64xf32>
    %30 = arith.truncf %1 : vector<32x32xf32> to vector<32x32xbf16>
    %cst_23 = arith.constant dense<0.000000e+00> : vector<32x32xf32>
    %31 = tpu.matmul %30, %7, %cst_23 {dimension_numbers = #tpu.dot_dimension_numbers<[1], [0], [0], [1], [0, 0, 1, 1], [], []>} : vector<32x32xbf16>, vector<32x32xbf16>, vector<32x32xf32> -> vector<32x32xf32>
    %32 = vector.broadcast %18 : vector<1x32xf32> to vector<32x32xf32>
    %33 = arith.addf %31, %32 : vector<32x32xf32>
    %34 = vector.extract_strided_slice %29 {offsets = [0, 0], sizes = [32, 32], strides = [1, 1]} : vector<32x64xf32> to vector<32x32xf32>
    %35 = vector.extract_strided_slice %29 {offsets = [0, 32], sizes = [32, 32], strides = [1, 1]} : vector<32x64xf32> to vector<32x32xf32>
    %36 = vector.extract_strided_slice %34 {offsets = [0, 0], sizes = [32, 8], strides = [1, 1]} : vector<32x32xf32> to vector<32x8xf32>
    %37 = vector.shape_cast %36 : vector<32x8xf32> to vector<2x16x8xf32>
    %38 = arith.truncf %37 : vector<2x16x8xf32> to vector<2x16x8xbf16>
    %39 = vector.extract_strided_slice %35 {offsets = [0, 0], sizes = [32, 8], strides = [1, 1]} : vector<32x32xf32> to vector<32x8xf32>
    %40 = vector.shape_cast %39 : vector<32x8xf32> to vector<2x16x8xf32>
    %41 = arith.truncf %40 : vector<2x16x8xf32> to vector<2x16x8xbf16>
    %42 = vector.extract_strided_slice %33 {offsets = [0, 0], sizes = [32, 8], strides = [1, 1]} : vector<32x32xf32> to vector<32x8xf32>
    %43 = vector.shape_cast %42 : vector<32x8xf32> to vector<2x16x8xf32>
    %44 = arith.truncf %43 : vector<2x16x8xf32> to vector<2x16x8xbf16>
    "tpu.trace_start"() <{level = 10 : i32, message = "bqd,bkd->bqk"}> : () -> ()
    %cst_24 = arith.constant dense<0.000000e+00> : vector<2x16x16xf32>
    %45 = tpu.matmul %38, %41, %cst_24 {dimension_numbers = #tpu.dot_dimension_numbers<[2], [2], [1], [1], [0, 0, 0, 1, 1, 1], [0], [0]>} : vector<2x16x8xbf16>, vector<2x16x8xbf16>, vector<2x16x16xf32> -> vector<2x16x16xf32>
    "tpu.trace_stop"() : () -> ()
    %cst_25 = arith.constant 0.353553385 : f32
    %46 = vector.broadcast %cst_25 : f32 to vector<2x16x16xf32>
    %47 = arith.mulf %45, %46 : vector<2x16x16xf32>
    %cst_26 = arith.constant dense<0xFF800000> : vector<2x16xf32>
    %48 = vector.multi_reduction <maximumf>, %47, %cst_26 [2] : vector<2x16x16xf32> to vector<2x16xf32>
    %49 = vector.shape_cast %48 : vector<2x16xf32> to vector<2x16x1xf32>
    %50 = vector.broadcast %49 : vector<2x16x1xf32> to vector<2x16x16xf32>
    %51 = arith.subf %47, %50 : vector<2x16x16xf32>
    %52 = math.exp %51 : vector<2x16x16xf32>
    %cst_27 = arith.constant dense<0.000000e+00> : vector<2x16xf32>
    %53 = vector.multi_reduction <add>, %52, %cst_27 [2] : vector<2x16x16xf32> to vector<2x16xf32>
    %54 = vector.shape_cast %53 : vector<2x16xf32> to vector<2x16x1xf32>
    %55 = tpu.reciprocal %54 {approx = true} : vector<2x16x1xf32> -> vector<2x16x1xf32>
    %56 = vector.broadcast %55 : vector<2x16x1xf32> to vector<2x16x16xf32>
    %57 = arith.mulf %52, %56 : vector<2x16x16xf32>
    %58 = arith.truncf %57 : vector<2x16x16xf32> to vector<2x16x16xbf16>
    "tpu.trace_start"() <{level = 10 : i32, message = "bqk,bkd->bqd"}> : () -> ()
    %cst_28 = arith.constant dense<0.000000e+00> : vector<2x16x8xf32>
    %59 = tpu.matmul %58, %44, %cst_28 {dimension_numbers = #tpu.dot_dimension_numbers<[2], [1], [1], [2], [0, 0, 0, 1, 1, 2], [0], [0]>} : vector<2x16x16xbf16>, vector<2x16x8xbf16>, vector<2x16x8xf32> -> vector<2x16x8xf32>
    "tpu.trace_stop"() : () -> ()
    %60 = vector.shape_cast %59 : vector<2x16x8xf32> to vector<32x8xf32>
    %61 = vector.extract_strided_slice %34 {offsets = [0, 8], sizes = [32, 8], strides = [1, 1]} : vector<32x32xf32> to vector<32x8xf32>
    %62 = vector.shape_cast %61 : vector<32x8xf32> to vector<2x16x8xf32>
    %63 = arith.truncf %62 : vector<2x16x8xf32> to vector<2x16x8xbf16>
    %64 = vector.extract_strided_slice %35 {offsets = [0, 8], sizes = [32, 8], strides = [1, 1]} : vector<32x32xf32> to vector<32x8xf32>
    %65 = vector.shape_cast %64 : vector<32x8xf32> to vector<2x16x8xf32>
    %66 = arith.truncf %65 : vector<2x16x8xf32> to vector<2x16x8xbf16>
    %67 = vector.extract_strided_slice %33 {offsets = [0, 8], sizes = [32, 8], strides = [1, 1]} : vector<32x32xf32> to vector<32x8xf32>
    %68 = vector.shape_cast %67 : vector<32x8xf32> to vector<2x16x8xf32>
    %69 = arith.truncf %68 : vector<2x16x8xf32> to vector<2x16x8xbf16>
    "tpu.trace_start"() <{level = 10 : i32, message = "bqd,bkd->bqk"}> : () -> ()
    %cst_29 = arith.constant dense<0.000000e+00> : vector<2x16x16xf32>
    %70 = tpu.matmul %63, %66, %cst_29 {dimension_numbers = #tpu.dot_dimension_numbers<[2], [2], [1], [1], [0, 0, 0, 1, 1, 1], [0], [0]>} : vector<2x16x8xbf16>, vector<2x16x8xbf16>, vector<2x16x16xf32> -> vector<2x16x16xf32>
    "tpu.trace_stop"() : () -> ()
    %cst_30 = arith.constant 0.353553385 : f32
    %71 = vector.broadcast %cst_30 : f32 to vector<2x16x16xf32>
    %72 = arith.mulf %70, %71 : vector<2x16x16xf32>
    %cst_31 = arith.constant dense<0xFF800000> : vector<2x16xf32>
    %73 = vector.multi_reduction <maximumf>, %72, %cst_31 [2] : vector<2x16x16xf32> to vector<2x16xf32>
    %74 = vector.shape_cast %73 : vector<2x16xf32> to vector<2x16x1xf32>
    %75 = vector.broadcast %74 : vector<2x16x1xf32> to vector<2x16x16xf32>
    %76 = arith.subf %72, %75 : vector<2x16x16xf32>
    %77 = math.exp %76 : vector<2x16x16xf32>
    %cst_32 = arith.constant dense<0.000000e+00> : vector<2x16xf32>
    %78 = vector.multi_reduction <add>, %77, %cst_32 [2] : vector<2x16x16xf32> to vector<2x16xf32>
    %79 = vector.shape_cast %78 : vector<2x16xf32> to vector<2x16x1xf32>
    %80 = tpu.reciprocal %79 {approx = true} : vector<2x16x1xf32> -> vector<2x16x1xf32>
    %81 = vector.broadcast %80 : vector<2x16x1xf32> to vector<2x16x16xf32>
    %82 = arith.mulf %77, %81 : vector<2x16x16xf32>
    %83 = arith.truncf %82 : vector<2x16x16xf32> to vector<2x16x16xbf16>
    "tpu.trace_start"() <{level = 10 : i32, message = "bqk,bkd->bqd"}> : () -> ()
    %cst_33 = arith.constant dense<0.000000e+00> : vector<2x16x8xf32>
    %84 = tpu.matmul %83, %69, %cst_33 {dimension_numbers = #tpu.dot_dimension_numbers<[2], [1], [1], [2], [0, 0, 0, 1, 1, 2], [0], [0]>} : vector<2x16x16xbf16>, vector<2x16x8xbf16>, vector<2x16x8xf32> -> vector<2x16x8xf32>
    "tpu.trace_stop"() : () -> ()
    %85 = vector.shape_cast %84 : vector<2x16x8xf32> to vector<32x8xf32>
    %86 = vector.extract_strided_slice %34 {offsets = [0, 16], sizes = [32, 8], strides = [1, 1]} : vector<32x32xf32> to vector<32x8xf32>
    %87 = vector.shape_cast %86 : vector<32x8xf32> to vector<2x16x8xf32>
    %88 = arith.truncf %87 : vector<2x16x8xf32> to vector<2x16x8xbf16>
    %89 = vector.extract_strided_slice %35 {offsets = [0, 16], sizes = [32, 8], strides = [1, 1]} : vector<32x32xf32> to vector<32x8xf32>
    %90 = vector.shape_cast %89 : vector<32x8xf32> to vector<2x16x8xf32>
    %91 = arith.truncf %90 : vector<2x16x8xf32> to vector<2x16x8xbf16>
    %92 = vector.extract_strided_slice %33 {offsets = [0, 16], sizes = [32, 8], strides = [1, 1]} : vector<32x32xf32> to vector<32x8xf32>
    %93 = vector.shape_cast %92 : vector<32x8xf32> to vector<2x16x8xf32>
    %94 = arith.truncf %93 : vector<2x16x8xf32> to vector<2x16x8xbf16>
    "tpu.trace_start"() <{level = 10 : i32, message = "bqd,bkd->bqk"}> : () -> ()
    %cst_34 = arith.constant dense<0.000000e+00> : vector<2x16x16xf32>
    %95 = tpu.matmul %88, %91, %cst_34 {dimension_numbers = #tpu.dot_dimension_numbers<[2], [2], [1], [1], [0, 0, 0, 1, 1, 1], [0], [0]>} : vector<2x16x8xbf16>, vector<2x16x8xbf16>, vector<2x16x16xf32> -> vector<2x16x16xf32>
    "tpu.trace_stop"() : () -> ()
    %cst_35 = arith.constant 0.353553385 : f32
    %96 = vector.broadcast %cst_35 : f32 to vector<2x16x16xf32>
    %97 = arith.mulf %95, %96 : vector<2x16x16xf32>
    %cst_36 = arith.constant dense<0xFF800000> : vector<2x16xf32>
    %98 = vector.multi_reduction <maximumf>, %97, %cst_36 [2] : vector<2x16x16xf32> to vector<2x16xf32>
    %99 = vector.shape_cast %98 : vector<2x16xf32> to vector<2x16x1xf32>
    %100 = vector.broadcast %99 : vector<2x16x1xf32> to vector<2x16x16xf32>
    %101 = arith.subf %97, %100 : vector<2x16x16xf32>
    %102 = math.exp %101 : vector<2x16x16xf32>
    %cst_37 = arith.constant dense<0.000000e+00> : vector<2x16xf32>
    %103 = vector.multi_reduction <add>, %102, %cst_37 [2] : vector<2x16x16xf32> to vector<2x16xf32>
    %104 = vector.shape_cast %103 : vector<2x16xf32> to vector<2x16x1xf32>
    %105 = tpu.reciprocal %104 {approx = true} : vector<2x16x1xf32> -> vector<2x16x1xf32>
    %106 = vector.broadcast %105 : vector<2x16x1xf32> to vector<2x16x16xf32>
    %107 = arith.mulf %102, %106 : vector<2x16x16xf32>
    %108 = arith.truncf %107 : vector<2x16x16xf32> to vector<2x16x16xbf16>
    "tpu.trace_start"() <{level = 10 : i32, message = "bqk,bkd->bqd"}> : () -> ()
    %cst_38 = arith.constant dense<0.000000e+00> : vector<2x16x8xf32>
    %109 = tpu.matmul %108, %94, %cst_38 {dimension_numbers = #tpu.dot_dimension_numbers<[2], [1], [1], [2], [0, 0, 0, 1, 1, 2], [0], [0]>} : vector<2x16x16xbf16>, vector<2x16x8xbf16>, vector<2x16x8xf32> -> vector<2x16x8xf32>
    "tpu.trace_stop"() : () -> ()
    %110 = vector.shape_cast %109 : vector<2x16x8xf32> to vector<32x8xf32>
    %111 = vector.extract_strided_slice %34 {offsets = [0, 24], sizes = [32, 8], strides = [1, 1]} : vector<32x32xf32> to vector<32x8xf32>
    %112 = vector.shape_cast %111 : vector<32x8xf32> to vector<2x16x8xf32>
    %113 = arith.truncf %112 : vector<2x16x8xf32> to vector<2x16x8xbf16>
    %114 = vector.extract_strided_slice %35 {offsets = [0, 24], sizes = [32, 8], strides = [1, 1]} : vector<32x32xf32> to vector<32x8xf32>
    %115 = vector.shape_cast %114 : vector<32x8xf32> to vector<2x16x8xf32>
    %116 = arith.truncf %115 : vector<2x16x8xf32> to vector<2x16x8xbf16>
    %117 = vector.extract_strided_slice %33 {offsets = [0, 24], sizes = [32, 8], strides = [1, 1]} : vector<32x32xf32> to vector<32x8xf32>
    %118 = vector.shape_cast %117 : vector<32x8xf32> to vector<2x16x8xf32>
    %119 = arith.truncf %118 : vector<2x16x8xf32> to vector<2x16x8xbf16>
    "tpu.trace_start"() <{level = 10 : i32, message = "bqd,bkd->bqk"}> : () -> ()
    %cst_39 = arith.constant dense<0.000000e+00> : vector<2x16x16xf32>
    %120 = tpu.matmul %113, %116, %cst_39 {dimension_numbers = #tpu.dot_dimension_numbers<[2], [2], [1], [1], [0, 0, 0, 1, 1, 1], [0], [0]>} : vector<2x16x8xbf16>, vector<2x16x8xbf16>, vector<2x16x16xf32> -> vector<2x16x16xf32>
    "tpu.trace_stop"() : () -> ()
    %cst_40 = arith.constant 0.353553385 : f32
    %121 = vector.broadcast %cst_40 : f32 to vector<2x16x16xf32>
    %122 = arith.mulf %120, %121 : vector<2x16x16xf32>
    %cst_41 = arith.constant dense<0xFF800000> : vector<2x16xf32>
    %123 = vector.multi_reduction <maximumf>, %122, %cst_41 [2] : vector<2x16x16xf32> to vector<2x16xf32>
    %124 = vector.shape_cast %123 : vector<2x16xf32> to vector<2x16x1xf32>
    %125 = vector.broadcast %124 : vector<2x16x1xf32> to vector<2x16x16xf32>
    %126 = arith.subf %122, %125 : vector<2x16x16xf32>
    %127 = math.exp %126 : vector<2x16x16xf32>
    %cst_42 = arith.constant dense<0.000000e+00> : vector<2x16xf32>
    %128 = vector.multi_reduction <add>, %127, %cst_42 [2] : vector<2x16x16xf32> to vector<2x16xf32>
    %129 = vector.shape_cast %128 : vector<2x16xf32> to vector<2x16x1xf32>
    %130 = tpu.reciprocal %129 {approx = true} : vector<2x16x1xf32> -> vector<2x16x1xf32>
    %131 = vector.broadcast %130 : vector<2x16x1xf32> to vector<2x16x16xf32>
    %132 = arith.mulf %127, %131 : vector<2x16x16xf32>
    %133 = arith.truncf %132 : vector<2x16x16xf32> to vector<2x16x16xbf16>
    "tpu.trace_start"() <{level = 10 : i32, message = "bqk,bkd->bqd"}> : () -> ()
    %cst_43 = arith.constant dense<0.000000e+00> : vector<2x16x8xf32>
    %134 = tpu.matmul %133, %119, %cst_43 {dimension_numbers = #tpu.dot_dimension_numbers<[2], [1], [1], [2], [0, 0, 0, 1, 1, 2], [0], [0]>} : vector<2x16x16xbf16>, vector<2x16x8xbf16>, vector<2x16x8xf32> -> vector<2x16x8xf32>
    "tpu.trace_stop"() : () -> ()
    %135 = vector.shape_cast %134 : vector<2x16x8xf32> to vector<32x8xf32>
    %136 = tpu.concatenate %60, %85, %110, %135 in 1 : vector<32x8xf32>, vector<32x8xf32>, vector<32x8xf32>, vector<32x8xf32> -> vector<32x32xf32>
    %137 = arith.truncf %136 : vector<32x32xf32> to vector<32x32xbf16>
    %cst_44 = arith.constant dense<0.000000e+00> : vector<32x32xf32>
    %138 = tpu.matmul %137, %9, %cst_44 {dimension_numbers = #tpu.dot_dimension_numbers<[1], [0], [0], [1], [0, 0, 1, 1], [], []>} : vector<32x32xbf16>, vector<32x32xbf16>, vector<32x32xf32> -> vector<32x32xf32>
    %139 = vector.broadcast %19 : vector<1x32xf32> to vector<32x32xf32>
    %140 = arith.addf %138, %139 : vector<32x32xf32>
    %141 = arith.addf %1, %140 : vector<32x32xf32>
    %cst_45 = arith.constant dense<0.000000e+00> : vector<32xf32>
    %142 = vector.multi_reduction <add>, %141, %cst_45 [1] : vector<32x32xf32> to vector<32xf32>
    %143 = vector.shape_cast %142 : vector<32xf32> to vector<32x1xf32>
    %cst_46 = arith.constant 3.200000e+01 : f32
    %144 = vector.broadcast %cst_46 : f32 to vector<32x1xf32>
    %145 = arith.divf %143, %144 : vector<32x1xf32>
    %146 = vector.broadcast %145 : vector<32x1xf32> to vector<32x32xf32>
    %147 = arith.subf %141, %146 : vector<32x32xf32>
    %148 = arith.mulf %147, %147 : vector<32x32xf32>
    %cst_47 = arith.constant dense<0.000000e+00> : vector<32xf32>
    %149 = vector.multi_reduction <add>, %148, %cst_47 [1] : vector<32x32xf32> to vector<32xf32>
    %150 = vector.shape_cast %149 : vector<32xf32> to vector<32x1xf32>
    %cst_48 = arith.constant 3.200000e+01 : f32
    %151 = vector.broadcast %cst_48 : f32 to vector<32x1xf32>
    %152 = arith.divf %150, %151 : vector<32x1xf32>
    %153 = vector.broadcast %145 : vector<32x1xf32> to vector<32x32xf32>
    %154 = arith.subf %141, %153 : vector<32x32xf32>
    %cst_49 = arith.constant 9.99999974E-6 : f32
    %155 = vector.broadcast %cst_49 : f32 to vector<32x1xf32>
    %156 = arith.addf %152, %155 : vector<32x1xf32>
    %157 = math.rsqrt %156 : vector<32x1xf32>
    %158 = vector.broadcast %157 : vector<32x1xf32> to vector<32x32xf32>
    %159 = arith.mulf %154, %158 : vector<32x32xf32>
    %160 = vector.broadcast %21 : vector<1x32xf32> to vector<32x32xf32>
    %161 = arith.mulf %159, %160 : vector<32x32xf32>
    %162 = vector.broadcast %22 : vector<1x32xf32> to vector<32x32xf32>
    %163 = arith.addf %161, %162 : vector<32x32xf32>
    %164 = arith.truncf %163 : vector<32x32xf32> to vector<32x32xbf16>
    %cst_50 = arith.constant dense<0.000000e+00> : vector<32x64xf32>
    %165 = tpu.matmul %164, %11, %cst_50 {dimension_numbers = #tpu.dot_dimension_numbers<[1], [0], [0], [1], [0, 0, 1, 1], [], []>} : vector<32x32xbf16>, vector<32x64xbf16>, vector<32x64xf32> -> vector<32x64xf32>
    %166 = vector.broadcast %17 : vector<1x64xf32> to vector<32x64xf32>
    %167 = arith.addf %165, %166 : vector<32x64xf32>
    %cst_51 = arith.constant 0.000000e+00 : f32
    %168 = vector.broadcast %cst_51 : f32 to vector<32x64xf32>
    %169 = arith.maximumf %167, %168 : vector<32x64xf32>
    %170 = arith.truncf %169 : vector<32x64xf32> to vector<32x64xbf16>
    %cst_52 = arith.constant dense<0.000000e+00> : vector<32x32xf32>
    %171 = tpu.matmul %170, %13, %cst_52 {dimension_numbers = #tpu.dot_dimension_numbers<[1], [0], [0], [1], [0, 0, 1, 1], [], []>} : vector<32x64xbf16>, vector<64x32xbf16>, vector<32x32xf32> -> vector<32x32xf32>
    %172 = vector.broadcast %20 : vector<1x32xf32> to vector<32x32xf32>
    %173 = arith.addf %171, %172 : vector<32x32xf32>
    %174 = arith.addf %163, %173 : vector<32x32xf32>
    %cst_53 = arith.constant dense<0.000000e+00> : vector<32xf32>
    %175 = vector.multi_reduction <add>, %174, %cst_53 [1] : vector<32x32xf32> to vector<32xf32>
    %176 = vector.shape_cast %175 : vector<32xf32> to vector<32x1xf32>
    %cst_54 = arith.constant 3.200000e+01 : f32
    %177 = vector.broadcast %cst_54 : f32 to vector<32x1xf32>
    %178 = arith.divf %176, %177 : vector<32x1xf32>
    %179 = vector.broadcast %178 : vector<32x1xf32> to vector<32x32xf32>
    %180 = arith.subf %174, %179 : vector<32x32xf32>
    %181 = arith.mulf %180, %180 : vector<32x32xf32>
    %cst_55 = arith.constant dense<0.000000e+00> : vector<32xf32>
    %182 = vector.multi_reduction <add>, %181, %cst_55 [1] : vector<32x32xf32> to vector<32xf32>
    %183 = vector.shape_cast %182 : vector<32xf32> to vector<32x1xf32>
    %cst_56 = arith.constant 3.200000e+01 : f32
    %184 = vector.broadcast %cst_56 : f32 to vector<32x1xf32>
    %185 = arith.divf %183, %184 : vector<32x1xf32>
    %186 = vector.broadcast %178 : vector<32x1xf32> to vector<32x32xf32>
    %187 = arith.subf %174, %186 : vector<32x32xf32>
    %cst_57 = arith.constant 9.99999974E-6 : f32
    %188 = vector.broadcast %cst_57 : f32 to vector<32x1xf32>
    %189 = arith.addf %185, %188 : vector<32x1xf32>
    %190 = math.rsqrt %189 : vector<32x1xf32>
    %191 = vector.broadcast %190 : vector<32x1xf32> to vector<32x32xf32>
    %192 = arith.mulf %187, %191 : vector<32x32xf32>
    %193 = vector.broadcast %23 : vector<1x32xf32> to vector<32x32xf32>
    %194 = arith.mulf %192, %193 : vector<32x32xf32>
    %195 = vector.broadcast %24 : vector<1x32xf32> to vector<32x32xf32>
    %196 = arith.addf %194, %195 : vector<32x32xf32>
    %c1 = arith.constant 1 : index
    %c0_58 = arith.constant 0 : index
    %c0_59 = arith.constant 0 : index
    %197 = vector.load %arg3[%c1, %c0_58, %c0_59] : memref<2x32x64xbf16, #tpu.memory_space<vmem>>, vector<1x32x64xbf16>
    %198 = vector.shape_cast %197 : vector<1x32x64xbf16> to vector<32x64xbf16>
    %c1_60 = arith.constant 1 : index
    %c0_61 = arith.constant 0 : index
    %c0_62 = arith.constant 0 : index
    %199 = vector.load %arg4[%c1_60, %c0_61, %c0_62] : memref<2x32x32xbf16, #tpu.memory_space<vmem>>, vector<1x32x32xbf16>
    %200 = vector.shape_cast %199 : vector<1x32x32xbf16> to vector<32x32xbf16>
    %c1_63 = arith.constant 1 : index
    %c0_64 = arith.constant 0 : index
    %c0_65 = arith.constant 0 : index
    %201 = vector.load %arg5[%c1_63, %c0_64, %c0_65] : memref<2x32x32xbf16, #tpu.memory_space<vmem>>, vector<1x32x32xbf16>
    %202 = vector.shape_cast %201 : vector<1x32x32xbf16> to vector<32x32xbf16>
    %c1_66 = arith.constant 1 : index
    %c0_67 = arith.constant 0 : index
    %c0_68 = arith.constant 0 : index
    %203 = vector.load %arg6[%c1_66, %c0_67, %c0_68] : memref<2x32x64xbf16, #tpu.memory_space<vmem>>, vector<1x32x64xbf16>
    %204 = vector.shape_cast %203 : vector<1x32x64xbf16> to vector<32x64xbf16>
    %c1_69 = arith.constant 1 : index
    %c0_70 = arith.constant 0 : index
    %c0_71 = arith.constant 0 : index
    %205 = vector.load %arg7[%c1_69, %c0_70, %c0_71] : memref<2x64x32xbf16, #tpu.memory_space<vmem>>, vector<1x64x32xbf16>
    %206 = vector.shape_cast %205 : vector<1x64x32xbf16> to vector<64x32xbf16>
    %c1_72 = arith.constant 1 : index
    %c0_73 = arith.constant 0 : index
    %c0_74 = arith.constant 0 : index
    %207 = vector.load %arg8[%c1_72, %c0_73, %c0_74] : memref<2x9x64xf32, #tpu.memory_space<vmem>>, vector<1x9x64xf32>
    %208 = vector.shape_cast %207 : vector<1x9x64xf32> to vector<9x64xf32>
    %209 = vector.extract_strided_slice %208 {offsets = [0, 0], sizes = [1, 64], strides = [1, 1]} : vector<9x64xf32> to vector<1x64xf32>
    %210 = vector.extract_strided_slice %208 {offsets = [1, 0], sizes = [1, 64], strides = [1, 1]} : vector<9x64xf32> to vector<1x64xf32>
    %211 = vector.extract_strided_slice %208 {offsets = [2, 0], sizes = [1, 32], strides = [1, 1]} : vector<9x64xf32> to vector<1x32xf32>
    %212 = vector.extract_strided_slice %208 {offsets = [3, 0], sizes = [1, 32], strides = [1, 1]} : vector<9x64xf32> to vector<1x32xf32>
    %213 = vector.extract_strided_slice %208 {offsets = [4, 0], sizes = [1, 32], strides = [1, 1]} : vector<9x64xf32> to vector<1x32xf32>
    %214 = vector.extract_strided_slice %208 {offsets = [5, 0], sizes = [1, 32], strides = [1, 1]} : vector<9x64xf32> to vector<1x32xf32>
    %215 = vector.extract_strided_slice %208 {offsets = [6, 0], sizes = [1, 32], strides = [1, 1]} : vector<9x64xf32> to vector<1x32xf32>
    %216 = vector.extract_strided_slice %208 {offsets = [7, 0], sizes = [1, 32], strides = [1, 1]} : vector<9x64xf32> to vector<1x32xf32>
    %217 = vector.extract_strided_slice %208 {offsets = [8, 0], sizes = [1, 32], strides = [1, 1]} : vector<9x64xf32> to vector<1x32xf32>
    %218 = arith.addf %196, %3 : vector<32x32xf32>
    %219 = arith.truncf %218 : vector<32x32xf32> to vector<32x32xbf16>
    %cst_75 = arith.constant dense<0.000000e+00> : vector<32x64xf32>
    %220 = tpu.matmul %219, %198, %cst_75 {dimension_numbers = #tpu.dot_dimension_numbers<[1], [0], [0], [1], [0, 0, 1, 1], [], []>} : vector<32x32xbf16>, vector<32x64xbf16>, vector<32x64xf32> -> vector<32x64xf32>
    %221 = vector.broadcast %209 : vector<1x64xf32> to vector<32x64xf32>
    %222 = arith.addf %220, %221 : vector<32x64xf32>
    %223 = arith.truncf %196 : vector<32x32xf32> to vector<32x32xbf16>
    %cst_76 = arith.constant dense<0.000000e+00> : vector<32x32xf32>
    %224 = tpu.matmul %223, %200, %cst_76 {dimension_numbers = #tpu.dot_dimension_numbers<[1], [0], [0], [1], [0, 0, 1, 1], [], []>} : vector<32x32xbf16>, vector<32x32xbf16>, vector<32x32xf32> -> vector<32x32xf32>
    %225 = vector.broadcast %211 : vector<1x32xf32> to vector<32x32xf32>
    %226 = arith.addf %224, %225 : vector<32x32xf32>
    %227 = vector.extract_strided_slice %222 {offsets = [0, 0], sizes = [32, 32], strides = [1, 1]} : vector<32x64xf32> to vector<32x32xf32>
    %228 = vector.extract_strided_slice %222 {offsets = [0, 32], sizes = [32, 32], strides = [1, 1]} : vector<32x64xf32> to vector<32x32xf32>
    %229 = vector.extract_strided_slice %227 {offsets = [0, 0], sizes = [32, 8], strides = [1, 1]} : vector<32x32xf32> to vector<32x8xf32>
    %230 = vector.shape_cast %229 : vector<32x8xf32> to vector<2x16x8xf32>
    %231 = arith.truncf %230 : vector<2x16x8xf32> to vector<2x16x8xbf16>
    %232 = vector.extract_strided_slice %228 {offsets = [0, 0], sizes = [32, 8], strides = [1, 1]} : vector<32x32xf32> to vector<32x8xf32>
    %233 = vector.shape_cast %232 : vector<32x8xf32> to vector<2x16x8xf32>
    %234 = arith.truncf %233 : vector<2x16x8xf32> to vector<2x16x8xbf16>
    %235 = vector.extract_strided_slice %226 {offsets = [0, 0], sizes = [32, 8], strides = [1, 1]} : vector<32x32xf32> to vector<32x8xf32>
    %236 = vector.shape_cast %235 : vector<32x8xf32> to vector<2x16x8xf32>
    %237 = arith.truncf %236 : vector<2x16x8xf32> to vector<2x16x8xbf16>
    "tpu.trace_start"() <{level = 10 : i32, message = "bqd,bkd->bqk"}> : () -> ()
    %cst_77 = arith.constant dense<0.000000e+00> : vector<2x16x16xf32>
    %238 = tpu.matmul %231, %234, %cst_77 {dimension_numbers = #tpu.dot_dimension_numbers<[2], [2], [1], [1], [0, 0, 0, 1, 1, 1], [0], [0]>} : vector<2x16x8xbf16>, vector<2x16x8xbf16>, vector<2x16x16xf32> -> vector<2x16x16xf32>
    "tpu.trace_stop"() : () -> ()
    %cst_78 = arith.constant 0.353553385 : f32
    %239 = vector.broadcast %cst_78 : f32 to vector<2x16x16xf32>
    %240 = arith.mulf %238, %239 : vector<2x16x16xf32>
    %cst_79 = arith.constant dense<0xFF800000> : vector<2x16xf32>
    %241 = vector.multi_reduction <maximumf>, %240, %cst_79 [2] : vector<2x16x16xf32> to vector<2x16xf32>
    %242 = vector.shape_cast %241 : vector<2x16xf32> to vector<2x16x1xf32>
    %243 = vector.broadcast %242 : vector<2x16x1xf32> to vector<2x16x16xf32>
    %244 = arith.subf %240, %243 : vector<2x16x16xf32>
    %245 = math.exp %244 : vector<2x16x16xf32>
    %cst_80 = arith.constant dense<0.000000e+00> : vector<2x16xf32>
    %246 = vector.multi_reduction <add>, %245, %cst_80 [2] : vector<2x16x16xf32> to vector<2x16xf32>
    %247 = vector.shape_cast %246 : vector<2x16xf32> to vector<2x16x1xf32>
    %248 = tpu.reciprocal %247 {approx = true} : vector<2x16x1xf32> -> vector<2x16x1xf32>
    %249 = vector.broadcast %248 : vector<2x16x1xf32> to vector<2x16x16xf32>
    %250 = arith.mulf %245, %249 : vector<2x16x16xf32>
    %251 = arith.truncf %250 : vector<2x16x16xf32> to vector<2x16x16xbf16>
    "tpu.trace_start"() <{level = 10 : i32, message = "bqk,bkd->bqd"}> : () -> ()
    %cst_81 = arith.constant dense<0.000000e+00> : vector<2x16x8xf32>
    %252 = tpu.matmul %251, %237, %cst_81 {dimension_numbers = #tpu.dot_dimension_numbers<[2], [1], [1], [2], [0, 0, 0, 1, 1, 2], [0], [0]>} : vector<2x16x16xbf16>, vector<2x16x8xbf16>, vector<2x16x8xf32> -> vector<2x16x8xf32>
    "tpu.trace_stop"() : () -> ()
    %253 = vector.shape_cast %252 : vector<2x16x8xf32> to vector<32x8xf32>
    %254 = vector.extract_strided_slice %227 {offsets = [0, 8], sizes = [32, 8], strides = [1, 1]} : vector<32x32xf32> to vector<32x8xf32>
    %255 = vector.shape_cast %254 : vector<32x8xf32> to vector<2x16x8xf32>
    %256 = arith.truncf %255 : vector<2x16x8xf32> to vector<2x16x8xbf16>
    %257 = vector.extract_strided_slice %228 {offsets = [0, 8], sizes = [32, 8], strides = [1, 1]} : vector<32x32xf32> to vector<32x8xf32>
    %258 = vector.shape_cast %257 : vector<32x8xf32> to vector<2x16x8xf32>
    %259 = arith.truncf %258 : vector<2x16x8xf32> to vector<2x16x8xbf16>
    %260 = vector.extract_strided_slice %226 {offsets = [0, 8], sizes = [32, 8], strides = [1, 1]} : vector<32x32xf32> to vector<32x8xf32>
    %261 = vector.shape_cast %260 : vector<32x8xf32> to vector<2x16x8xf32>
    %262 = arith.truncf %261 : vector<2x16x8xf32> to vector<2x16x8xbf16>
    "tpu.trace_start"() <{level = 10 : i32, message = "bqd,bkd->bqk"}> : () -> ()
    %cst_82 = arith.constant dense<0.000000e+00> : vector<2x16x16xf32>
    %263 = tpu.matmul %256, %259, %cst_82 {dimension_numbers = #tpu.dot_dimension_numbers<[2], [2], [1], [1], [0, 0, 0, 1, 1, 1], [0], [0]>} : vector<2x16x8xbf16>, vector<2x16x8xbf16>, vector<2x16x16xf32> -> vector<2x16x16xf32>
    "tpu.trace_stop"() : () -> ()
    %cst_83 = arith.constant 0.353553385 : f32
    %264 = vector.broadcast %cst_83 : f32 to vector<2x16x16xf32>
    %265 = arith.mulf %263, %264 : vector<2x16x16xf32>
    %cst_84 = arith.constant dense<0xFF800000> : vector<2x16xf32>
    %266 = vector.multi_reduction <maximumf>, %265, %cst_84 [2] : vector<2x16x16xf32> to vector<2x16xf32>
    %267 = vector.shape_cast %266 : vector<2x16xf32> to vector<2x16x1xf32>
    %268 = vector.broadcast %267 : vector<2x16x1xf32> to vector<2x16x16xf32>
    %269 = arith.subf %265, %268 : vector<2x16x16xf32>
    %270 = math.exp %269 : vector<2x16x16xf32>
    %cst_85 = arith.constant dense<0.000000e+00> : vector<2x16xf32>
    %271 = vector.multi_reduction <add>, %270, %cst_85 [2] : vector<2x16x16xf32> to vector<2x16xf32>
    %272 = vector.shape_cast %271 : vector<2x16xf32> to vector<2x16x1xf32>
    %273 = tpu.reciprocal %272 {approx = true} : vector<2x16x1xf32> -> vector<2x16x1xf32>
    %274 = vector.broadcast %273 : vector<2x16x1xf32> to vector<2x16x16xf32>
    %275 = arith.mulf %270, %274 : vector<2x16x16xf32>
    %276 = arith.truncf %275 : vector<2x16x16xf32> to vector<2x16x16xbf16>
    "tpu.trace_start"() <{level = 10 : i32, message = "bqk,bkd->bqd"}> : () -> ()
    %cst_86 = arith.constant dense<0.000000e+00> : vector<2x16x8xf32>
    %277 = tpu.matmul %276, %262, %cst_86 {dimension_numbers = #tpu.dot_dimension_numbers<[2], [1], [1], [2], [0, 0, 0, 1, 1, 2], [0], [0]>} : vector<2x16x16xbf16>, vector<2x16x8xbf16>, vector<2x16x8xf32> -> vector<2x16x8xf32>
    "tpu.trace_stop"() : () -> ()
    %278 = vector.shape_cast %277 : vector<2x16x8xf32> to vector<32x8xf32>
    %279 = vector.extract_strided_slice %227 {offsets = [0, 16], sizes = [32, 8], strides = [1, 1]} : vector<32x32xf32> to vector<32x8xf32>
    %280 = vector.shape_cast %279 : vector<32x8xf32> to vector<2x16x8xf32>
    %281 = arith.truncf %280 : vector<2x16x8xf32> to vector<2x16x8xbf16>
    %282 = vector.extract_strided_slice %228 {offsets = [0, 16], sizes = [32, 8], strides = [1, 1]} : vector<32x32xf32> to vector<32x8xf32>
    %283 = vector.shape_cast %282 : vector<32x8xf32> to vector<2x16x8xf32>
    %284 = arith.truncf %283 : vector<2x16x8xf32> to vector<2x16x8xbf16>
    %285 = vector.extract_strided_slice %226 {offsets = [0, 16], sizes = [32, 8], strides = [1, 1]} : vector<32x32xf32> to vector<32x8xf32>
    %286 = vector.shape_cast %285 : vector<32x8xf32> to vector<2x16x8xf32>
    %287 = arith.truncf %286 : vector<2x16x8xf32> to vector<2x16x8xbf16>
    "tpu.trace_start"() <{level = 10 : i32, message = "bqd,bkd->bqk"}> : () -> ()
    %cst_87 = arith.constant dense<0.000000e+00> : vector<2x16x16xf32>
    %288 = tpu.matmul %281, %284, %cst_87 {dimension_numbers = #tpu.dot_dimension_numbers<[2], [2], [1], [1], [0, 0, 0, 1, 1, 1], [0], [0]>} : vector<2x16x8xbf16>, vector<2x16x8xbf16>, vector<2x16x16xf32> -> vector<2x16x16xf32>
    "tpu.trace_stop"() : () -> ()
    %cst_88 = arith.constant 0.353553385 : f32
    %289 = vector.broadcast %cst_88 : f32 to vector<2x16x16xf32>
    %290 = arith.mulf %288, %289 : vector<2x16x16xf32>
    %cst_89 = arith.constant dense<0xFF800000> : vector<2x16xf32>
    %291 = vector.multi_reduction <maximumf>, %290, %cst_89 [2] : vector<2x16x16xf32> to vector<2x16xf32>
    %292 = vector.shape_cast %291 : vector<2x16xf32> to vector<2x16x1xf32>
    %293 = vector.broadcast %292 : vector<2x16x1xf32> to vector<2x16x16xf32>
    %294 = arith.subf %290, %293 : vector<2x16x16xf32>
    %295 = math.exp %294 : vector<2x16x16xf32>
    %cst_90 = arith.constant dense<0.000000e+00> : vector<2x16xf32>
    %296 = vector.multi_reduction <add>, %295, %cst_90 [2] : vector<2x16x16xf32> to vector<2x16xf32>
    %297 = vector.shape_cast %296 : vector<2x16xf32> to vector<2x16x1xf32>
    %298 = tpu.reciprocal %297 {approx = true} : vector<2x16x1xf32> -> vector<2x16x1xf32>
    %299 = vector.broadcast %298 : vector<2x16x1xf32> to vector<2x16x16xf32>
    %300 = arith.mulf %295, %299 : vector<2x16x16xf32>
    %301 = arith.truncf %300 : vector<2x16x16xf32> to vector<2x16x16xbf16>
    "tpu.trace_start"() <{level = 10 : i32, message = "bqk,bkd->bqd"}> : () -> ()
    %cst_91 = arith.constant dense<0.000000e+00> : vector<2x16x8xf32>
    %302 = tpu.matmul %301, %287, %cst_91 {dimension_numbers = #tpu.dot_dimension_numbers<[2], [1], [1], [2], [0, 0, 0, 1, 1, 2], [0], [0]>} : vector<2x16x16xbf16>, vector<2x16x8xbf16>, vector<2x16x8xf32> -> vector<2x16x8xf32>
    "tpu.trace_stop"() : () -> ()
    %303 = vector.shape_cast %302 : vector<2x16x8xf32> to vector<32x8xf32>
    %304 = vector.extract_strided_slice %227 {offsets = [0, 24], sizes = [32, 8], strides = [1, 1]} : vector<32x32xf32> to vector<32x8xf32>
    %305 = vector.shape_cast %304 : vector<32x8xf32> to vector<2x16x8xf32>
    %306 = arith.truncf %305 : vector<2x16x8xf32> to vector<2x16x8xbf16>
    %307 = vector.extract_strided_slice %228 {offsets = [0, 24], sizes = [32, 8], strides = [1, 1]} : vector<32x32xf32> to vector<32x8xf32>
    %308 = vector.shape_cast %307 : vector<32x8xf32> to vector<2x16x8xf32>
    %309 = arith.truncf %308 : vector<2x16x8xf32> to vector<2x16x8xbf16>
    %310 = vector.extract_strided_slice %226 {offsets = [0, 24], sizes = [32, 8], strides = [1, 1]} : vector<32x32xf32> to vector<32x8xf32>
    %311 = vector.shape_cast %310 : vector<32x8xf32> to vector<2x16x8xf32>
    %312 = arith.truncf %311 : vector<2x16x8xf32> to vector<2x16x8xbf16>
    "tpu.trace_start"() <{level = 10 : i32, message = "bqd,bkd->bqk"}> : () -> ()
    %cst_92 = arith.constant dense<0.000000e+00> : vector<2x16x16xf32>
    %313 = tpu.matmul %306, %309, %cst_92 {dimension_numbers = #tpu.dot_dimension_numbers<[2], [2], [1], [1], [0, 0, 0, 1, 1, 1], [0], [0]>} : vector<2x16x8xbf16>, vector<2x16x8xbf16>, vector<2x16x16xf32> -> vector<2x16x16xf32>
    "tpu.trace_stop"() : () -> ()
    %cst_93 = arith.constant 0.353553385 : f32
    %314 = vector.broadcast %cst_93 : f32 to vector<2x16x16xf32>
    %315 = arith.mulf %313, %314 : vector<2x16x16xf32>
    %cst_94 = arith.constant dense<0xFF800000> : vector<2x16xf32>
    %316 = vector.multi_reduction <maximumf>, %315, %cst_94 [2] : vector<2x16x16xf32> to vector<2x16xf32>
    %317 = vector.shape_cast %316 : vector<2x16xf32> to vector<2x16x1xf32>
    %318 = vector.broadcast %317 : vector<2x16x1xf32> to vector<2x16x16xf32>
    %319 = arith.subf %315, %318 : vector<2x16x16xf32>
    %320 = math.exp %319 : vector<2x16x16xf32>
    %cst_95 = arith.constant dense<0.000000e+00> : vector<2x16xf32>
    %321 = vector.multi_reduction <add>, %320, %cst_95 [2] : vector<2x16x16xf32> to vector<2x16xf32>
    %322 = vector.shape_cast %321 : vector<2x16xf32> to vector<2x16x1xf32>
    %323 = tpu.reciprocal %322 {approx = true} : vector<2x16x1xf32> -> vector<2x16x1xf32>
    %324 = vector.broadcast %323 : vector<2x16x1xf32> to vector<2x16x16xf32>
    %325 = arith.mulf %320, %324 : vector<2x16x16xf32>
    %326 = arith.truncf %325 : vector<2x16x16xf32> to vector<2x16x16xbf16>
    "tpu.trace_start"() <{level = 10 : i32, message = "bqk,bkd->bqd"}> : () -> ()
    %cst_96 = arith.constant dense<0.000000e+00> : vector<2x16x8xf32>
    %327 = tpu.matmul %326, %312, %cst_96 {dimension_numbers = #tpu.dot_dimension_numbers<[2], [1], [1], [2], [0, 0, 0, 1, 1, 2], [0], [0]>} : vector<2x16x16xbf16>, vector<2x16x8xbf16>, vector<2x16x8xf32> -> vector<2x16x8xf32>
    "tpu.trace_stop"() : () -> ()
    %328 = vector.shape_cast %327 : vector<2x16x8xf32> to vector<32x8xf32>
    %329 = tpu.concatenate %253, %278, %303, %328 in 1 : vector<32x8xf32>, vector<32x8xf32>, vector<32x8xf32>, vector<32x8xf32> -> vector<32x32xf32>
    %330 = arith.truncf %329 : vector<32x32xf32> to vector<32x32xbf16>
    %cst_97 = arith.constant dense<0.000000e+00> : vector<32x32xf32>
    %331 = tpu.matmul %330, %202, %cst_97 {dimension_numbers = #tpu.dot_dimension_numbers<[1], [0], [0], [1], [0, 0, 1, 1], [], []>} : vector<32x32xbf16>, vector<32x32xbf16>, vector<32x32xf32> -> vector<32x32xf32>
    %332 = vector.broadcast %212 : vector<1x32xf32> to vector<32x32xf32>
    %333 = arith.addf %331, %332 : vector<32x32xf32>
    %334 = arith.addf %196, %333 : vector<32x32xf32>
    %cst_98 = arith.constant dense<0.000000e+00> : vector<32xf32>
    %335 = vector.multi_reduction <add>, %334, %cst_98 [1] : vector<32x32xf32> to vector<32xf32>
    %336 = vector.shape_cast %335 : vector<32xf32> to vector<32x1xf32>
    %cst_99 = arith.constant 3.200000e+01 : f32
    %337 = vector.broadcast %cst_99 : f32 to vector<32x1xf32>
    %338 = arith.divf %336, %337 : vector<32x1xf32>
    %339 = vector.broadcast %338 : vector<32x1xf32> to vector<32x32xf32>
    %340 = arith.subf %334, %339 : vector<32x32xf32>
    %341 = arith.mulf %340, %340 : vector<32x32xf32>
    %cst_100 = arith.constant dense<0.000000e+00> : vector<32xf32>
    %342 = vector.multi_reduction <add>, %341, %cst_100 [1] : vector<32x32xf32> to vector<32xf32>
    %343 = vector.shape_cast %342 : vector<32xf32> to vector<32x1xf32>
    %cst_101 = arith.constant 3.200000e+01 : f32
    %344 = vector.broadcast %cst_101 : f32 to vector<32x1xf32>
    %345 = arith.divf %343, %344 : vector<32x1xf32>
    %346 = vector.broadcast %338 : vector<32x1xf32> to vector<32x32xf32>
    %347 = arith.subf %334, %346 : vector<32x32xf32>
    %cst_102 = arith.constant 9.99999974E-6 : f32
    %348 = vector.broadcast %cst_102 : f32 to vector<32x1xf32>
    %349 = arith.addf %345, %348 : vector<32x1xf32>
    %350 = math.rsqrt %349 : vector<32x1xf32>
    %351 = vector.broadcast %350 : vector<32x1xf32> to vector<32x32xf32>
    %352 = arith.mulf %347, %351 : vector<32x32xf32>
    %353 = vector.broadcast %214 : vector<1x32xf32> to vector<32x32xf32>
    %354 = arith.mulf %352, %353 : vector<32x32xf32>
    %355 = vector.broadcast %215 : vector<1x32xf32> to vector<32x32xf32>
    %356 = arith.addf %354, %355 : vector<32x32xf32>
    %357 = arith.truncf %356 : vector<32x32xf32> to vector<32x32xbf16>
    %cst_103 = arith.constant dense<0.000000e+00> : vector<32x64xf32>
    %358 = tpu.matmul %357, %204, %cst_103 {dimension_numbers = #tpu.dot_dimension_numbers<[1], [0], [0], [1], [0, 0, 1, 1], [], []>} : vector<32x32xbf16>, vector<32x64xbf16>, vector<32x64xf32> -> vector<32x64xf32>
    %359 = vector.broadcast %210 : vector<1x64xf32> to vector<32x64xf32>
    %360 = arith.addf %358, %359 : vector<32x64xf32>
    %cst_104 = arith.constant 0.000000e+00 : f32
    %361 = vector.broadcast %cst_104 : f32 to vector<32x64xf32>
    %362 = arith.maximumf %360, %361 : vector<32x64xf32>
    %363 = arith.truncf %362 : vector<32x64xf32> to vector<32x64xbf16>
    %cst_105 = arith.constant dense<0.000000e+00> : vector<32x32xf32>
    %364 = tpu.matmul %363, %206, %cst_105 {dimension_numbers = #tpu.dot_dimension_numbers<[1], [0], [0], [1], [0, 0, 1, 1], [], []>} : vector<32x64xbf16>, vector<64x32xbf16>, vector<32x32xf32> -> vector<32x32xf32>
    %365 = vector.broadcast %213 : vector<1x32xf32> to vector<32x32xf32>
    %366 = arith.addf %364, %365 : vector<32x32xf32>
    %367 = arith.addf %356, %366 : vector<32x32xf32>
    %cst_106 = arith.constant dense<0.000000e+00> : vector<32xf32>
    %368 = vector.multi_reduction <add>, %367, %cst_106 [1] : vector<32x32xf32> to vector<32xf32>
    %369 = vector.shape_cast %368 : vector<32xf32> to vector<32x1xf32>
    %cst_107 = arith.constant 3.200000e+01 : f32
    %370 = vector.broadcast %cst_107 : f32 to vector<32x1xf32>
    %371 = arith.divf %369, %370 : vector<32x1xf32>
    %372 = vector.broadcast %371 : vector<32x1xf32> to vector<32x32xf32>
    %373 = arith.subf %367, %372 : vector<32x32xf32>
    %374 = arith.mulf %373, %373 : vector<32x32xf32>
    %cst_108 = arith.constant dense<0.000000e+00> : vector<32xf32>
    %375 = vector.multi_reduction <add>, %374, %cst_108 [1] : vector<32x32xf32> to vector<32xf32>
    %376 = vector.shape_cast %375 : vector<32xf32> to vector<32x1xf32>
    %cst_109 = arith.constant 3.200000e+01 : f32
    %377 = vector.broadcast %cst_109 : f32 to vector<32x1xf32>
    %378 = arith.divf %376, %377 : vector<32x1xf32>
    %379 = vector.broadcast %371 : vector<32x1xf32> to vector<32x32xf32>
    %380 = arith.subf %367, %379 : vector<32x32xf32>
    %cst_110 = arith.constant 9.99999974E-6 : f32
    %381 = vector.broadcast %cst_110 : f32 to vector<32x1xf32>
    %382 = arith.addf %378, %381 : vector<32x1xf32>
    %383 = math.rsqrt %382 : vector<32x1xf32>
    %384 = vector.broadcast %383 : vector<32x1xf32> to vector<32x32xf32>
    %385 = arith.mulf %380, %384 : vector<32x32xf32>
    %386 = vector.broadcast %216 : vector<1x32xf32> to vector<32x32xf32>
    %387 = arith.mulf %385, %386 : vector<32x32xf32>
    %388 = vector.broadcast %217 : vector<1x32xf32> to vector<32x32xf32>
    %389 = arith.addf %387, %388 : vector<32x32xf32>
    %390 = vector.shape_cast %389 : vector<32x32xf32> to vector<2x16x32xf32>
    %c0_111 = arith.constant 0 : index
    %c0_112 = arith.constant 0 : index
    %c0_113 = arith.constant 0 : index
    %391 = vector.load %arg9[%c0_111, %c0_112, %c0_113] : memref<2x16x32xf32, #tpu.memory_space<vmem>>, vector<2x16x32xf32>
    tpu.vector_store %arg9[%c0_111, %c0_112, %c0_113], %390 {strides = array<i32>} : memref<2x16x32xf32, #tpu.memory_space<vmem>>, vector<2x16x32xf32>,
    return
  }
  func.func @transform_0(%arg0: i32) -> (i32, i32, i32) {
    %c0_i32 = arith.constant 0 : i32
    %c0_i32_0 = arith.constant 0 : i32
    %c0_i32_1 = arith.constant 0 : i32
    %c0_i32_2 = arith.constant 0 : i32
    return %c0_i32, %c0_i32_0, %c0_i32_1 : i32, i32, i32
  }
  func.func @transform_1(%arg0: i32) -> (i32, i32, i32) {
    %c0_i32 = arith.constant 0 : i32
    %c0_i32_0 = arith.constant 0 : i32
    %c0_i32_1 = arith.constant 0 : i32
    %c0_i32_2 = arith.constant 0 : i32
    return %c0_i32, %c0_i32_0, %c0_i32_1 : i32, i32, i32
  }
  func.func @transform_2(%arg0: i32) -> (i32, i32, i32) {
    %c0_i32 = arith.constant 0 : i32
    %c0_i32_0 = arith.constant 0 : i32
    %c0_i32_1 = arith.constant 0 : i32
    %c0_i32_2 = arith.constant 0 : i32
    return %c0_i32, %c0_i32_0, %c0_i32_1 : i32, i32, i32
  }
  func.func @transform_3(%arg0: i32) -> (i32, i32, i32) {
    %c0_i32 = arith.constant 0 : i32
    %c0_i32_0 = arith.constant 0 : i32
    %c0_i32_1 = arith.constant 0 : i32
    %c0_i32_2 = arith.constant 0 : i32
    return %c0_i32, %c0_i32_0, %c0_i32_1 : i32, i32, i32
  }
  func.func @transform_4(%arg0: i32) -> (i32, i32, i32) {
    %c0_i32 = arith.constant 0 : i32
    %c0_i32_0 = arith.constant 0 : i32
    %c0_i32_1 = arith.constant 0 : i32
    %c0_i32_2 = arith.constant 0 : i32
    return %c0_i32, %c0_i32_0, %c0_i32_1 : i32, i32, i32
  }
  func.func @transform_5(%arg0: i32) -> (i32, i32, i32) {
    %c0_i32 = arith.constant 0 : i32
    %c0_i32_0 = arith.constant 0 : i32
    %c0_i32_1 = arith.constant 0 : i32
    %c0_i32_2 = arith.constant 0 : i32
    return %c0_i32, %c0_i32_0, %c0_i32_1 : i32, i32, i32
  }
  func.func @transform_6(%arg0: i32) -> (i32, i32, i32) {
    %c0_i32 = arith.constant 0 : i32
    %c0_i32_0 = arith.constant 0 : i32
    %c0_i32_1 = arith.constant 0 : i32
    %c0_i32_2 = arith.constant 0 : i32
    return %c0_i32, %c0_i32_0, %c0_i32_1 : i32, i32, i32
  }
  func.func @transform_7(%arg0: i32) -> (i32, i32, i32) {
    %c0_i32 = arith.constant 0 : i32
    %c0_i32_0 = arith.constant 0 : i32
    %c0_i32_1 = arith.constant 0 : i32
    %c0_i32_2 = arith.constant 0 : i32
    return %c0_i32, %c0_i32_0, %c0_i32_1 : i32, i32, i32
  }
  func.func @transform_8(%arg0: i32) -> (i32, i32, i32) {
    %c0_i32 = arith.constant 0 : i32
    %c0_i32_0 = arith.constant 0 : i32
    %c0_i32_1 = arith.constant 0 : i32
    %c0_i32_2 = arith.constant 0 : i32
    return %c0_i32, %c0_i32_0, %c0_i32_1 : i32, i32, i32
  }
}

</mosaic_0001>

<llo_original>
// kernel: transformer_encoder.1
$region0: #{transformer_encoder.1}
  #allocation0 [shape = 'u32[]', space=smem, size = 0x4, offset = 0x4, fixed_abs, tag = 'smem constant byte address 0x4 - core index']
  #allocation1 [shape = 'u32[144,128]{1,0:T(1,128)}', space=vmem, size = 0x12000, scoped, tag = 'internal scratch']
  %s0 = inlined_call_operand.vmem [shape: f32[2,16,32], index: 0, kind: input, shape index: {}]
  %s1 = inlined_call_operand.vmem [shape: f32[2,16,32], index: 1, kind: input, shape index: {}]
  %s2 = inlined_call_operand.vmem [shape: bf16[2,32,64], index: 2, kind: input, shape index: {}]
  %s3 = inlined_call_operand.vmem [shape: bf16[2,32,32], index: 3, kind: input, shape index: {}]
  %s4 = inlined_call_operand.vmem [shape: bf16[2,32,32], index: 4, kind: input, shape index: {}]
  %s5 = inlined_call_operand.vmem [shape: bf16[2,32,64], index: 5, kind: input, shape index: {}]
  %s6 = inlined_call_operand.vmem [shape: bf16[2,64,32], index: 6, kind: input, shape index: {}]
  %s7 = inlined_call_operand.vmem [shape: f32[2,9,64], index: 7, kind: input, shape index: {}]
  %s8 = inlined_call_operand.vmem [shape: f32[2,16,32], index: 8, kind: output, shape index: {}]
  %s9 = sld [smem:[#allocation0]]
  $region42: #{transformer_encoder.1} parent=0
    _
  %s11 = ssub.s32 1, %s9
  %s12 = scalar_select 0, %s11, %s9
  // Predicated region
  $region2: #{transformer_encoder.1} parent=0 // pred_check
    _
  $region3: #{transformer_encoder.1} parent=0 // pred_check_branch
    %14 = sbr.rel (0) target = $region5
  $region4: #{transformer_encoder.1} parent=0 // pred_region
    _
  $region5: #{transformer_encoder.1} parent=0 // pred_fallthru
    _
  // Predicated region
  $region6: #{transformer_encoder.1} parent=0 // pred_check
    _
  $region7: #{transformer_encoder.1} parent=0 // pred_check_branch
    %16 = sbr.rel (0) target = $region9
  $region8: #{transformer_encoder.1} parent=0 // pred_region
    _
  $region9: #{transformer_encoder.1} parent=0 // pred_fallthru
    _
  // Predicated region
  $region10: #{transformer_encoder.1} parent=0 // pred_check
    _
  $region11: #{transformer_encoder.1} parent=0 // pred_check_branch
    %18 = sbr.rel (0) target = $region13
  $region12: #{transformer_encoder.1} parent=0 // pred_region
    _
  $region13: #{transformer_encoder.1} parent=0 // pred_fallthru
    _
  // Predicated region
  $region14: #{transformer_encoder.1} parent=0 // pred_check
    _
  $region15: #{transformer_encoder.1} parent=0 // pred_check_branch
    %20 = sbr.rel (0) target = $region17
  $region16: #{transformer_encoder.1} parent=0 // pred_region
    _
  $region17: #{transformer_encoder.1} parent=0 // pred_fallthru
    _
  // Predicated region
  $region18: #{transformer_encoder.1} parent=0 // pred_check
    _
  $region19: #{transformer_encoder.1} parent=0 // pred_check_branch
    %22 = sbr.rel (0) target = $region21
  $region20: #{transformer_encoder.1} parent=0 // pred_region
    _
  $region21: #{transformer_encoder.1} parent=0 // pred_fallthru
    _
  // Predicated region
  $region22: #{transformer_encoder.1} parent=0 // pred_check
    _
  $region23: #{transformer_encoder.1} parent=0 // pred_check_branch
    %24 = sbr.rel (0) target = $region25
  $region24: #{transformer_encoder.1} parent=0 // pred_region
    _
  $region25: #{transformer_encoder.1} parent=0 // pred_fallthru
    _
  // Predicated region
  $region26: #{transformer_encoder.1} parent=0 // pred_check
    _
  $region27: #{transformer_encoder.1} parent=0 // pred_check_branch
    %26 = sbr.rel (0) target = $region29
  $region28: #{transformer_encoder.1} parent=0 // pred_region
    _
  $region29: #{transformer_encoder.1} parent=0 // pred_fallthru
    _
  // Predicated region
  $region30: #{transformer_encoder.1} parent=0 // pred_check
    _
  $region31: #{transformer_encoder.1} parent=0 // pred_check_branch
    %28 = sbr.rel (0) target = $region33
  $region32: #{transformer_encoder.1} parent=0 // pred_region
    _
  $region33: #{transformer_encoder.1} parent=0 // pred_fallthru
    _
  %v30 = vld [vmem:[%s0] sm:$0xff]
  %v31 = vld [vmem:[%s0 + $0x8] sm:$0xff]
  %v32 = vld [vmem:[%s0 + $0x10] sm:$0xff]
  %v33 = vld [vmem:[%s0 + $0x18] sm:$0xff]
  %v34 = vld [vmem:[%s1] sm:$0xff]
  %v35 = vld [vmem:[%s1 + $0x8] sm:$0xff]
  %v36 = vld [vmem:[%s1 + $0x10] sm:$0xff]
  %v37 = vld [vmem:[%s1 + $0x18] sm:$0xff]
  %v38 = vld [vmem:[%s2] sm:$0xf]
  %v39 = vld [vmem:[%s2 + $0x4] sm:$0xf]
  %v40 = vld [vmem:[%s2 + $0x8] sm:$0xf]
  %v41 = vld [vmem:[%s2 + $0xc] sm:$0xf]
  %v42 = vld [vmem:[%s3] sm:$0xf]
  %v43 = vld [vmem:[%s3 + $0x4] sm:$0xf]
  %v44 = vld [vmem:[%s3 + $0x8] sm:$0xf]
  %v45 = vld [vmem:[%s3 + $0xc] sm:$0xf]
  %v46 = vld [vmem:[%s4] sm:$0xf]
  %v47 = vld [vmem:[%s4 + $0x4] sm:$0xf]
  %v48 = vld [vmem:[%s4 + $0x8] sm:$0xf]
  %v49 = vld [vmem:[%s4 + $0xc] sm:$0xf]
  %v50 = vld [vmem:[%s5] sm:$0xf]
  %v51 = vld [vmem:[%s5 + $0x4] sm:$0xf]
  %v52 = vld [vmem:[%s5 + $0x8] sm:$0xf]
  %v53 = vld [vmem:[%s5 + $0xc] sm:$0xf]
  %v54 = vld [vmem:[%s6] sm:$0xf]
  %v55 = vld [vmem:[%s6 + $0x4] sm:$0xf]
  %v56 = vld [vmem:[%s6 + $0x8] sm:$0xf]
  %v57 = vld [vmem:[%s6 + $0xc] sm:$0xf]
  %v58 = vld [vmem:[%s6 + $0x10] sm:$0xf]
  %v59 = vld [vmem:[%s6 + $0x14] sm:$0xf]
  %v60 = vld [vmem:[%s6 + $0x18] sm:$0xf]
  %v61 = vld [vmem:[%s6 + $0x1c] sm:$0xf]
  %v62 = vld [vmem:[%s7] sm:$0xff]
  %v63 = vld [vmem:[%s7 + $0x8] sm:$0x1]
  %v64 = vadd.f32 %v30, %v34
  %v65 = vadd.f32 %v31, %v35
  %v66 = vadd.f32 %v32, %v36
  %v67 = vadd.f32 %v33, %v37
  %v68 = vpack.c.bf16 %v65, %v64
  %v69 = vpack.c.bf16 %v67, %v66
  %v70 = vlaneseq
  %v71 = vshrl.u32 %v70, 7
  %v72 = vsub.s32 0, %v71
  %v73 = vrot.slane %v62, %v72
  %v78 = vunpack.c.l.b16 %v38
  %v79 = vunpack.c.l.b16 %v39
  %v80 = vunpack.c.l.b16 %v40
  %v81 = vunpack.c.l.b16 %v41
  %v82 = vpack.c.b16 %v79, %v78
  %v83 = vpack.c.b16 %v81, %v80
  %vm86 = vcmask 261120
  %v88 = vsel %vm86, %v68, 0
  %v91 = vsel %vm86, %v69, 0
  %93 = vmatprep.subr.bf16.mxu0 0
  %94 = vmatpush1.bf16.msra.mxu0 0
  %95 = vmatprep.subr.bf16.mxu0 0
  %96 = vmatpush1.bf16.msra.mxu0 0
  %97 = vmatprep.subr.bf16.mxu0 0
  %98 = vmatpush1.bf16.msra.mxu0 0
  %99 = vmatprep.subr.bf16.mxu0 0
  %100 = vmatpush1.bf16.msra.mxu0 0
  %101 = vmatprep.subr.bf16.mxu0 0
  %102 = vmatpush1.bf16.msra.mxu0 0
  %103 = vmatprep.subr.bf16.mxu0 0
  %104 = vmatpush1.bf16.msra.mxu0 0
  %105 = vmatprep.subr.bf16.mxu0 0
  %106 = vmatpush1.bf16.msra.mxu0 %v83
  %107 = vmatprep.subr.bf16.mxu0 0
  %108 = vmatpush1.bf16.msra.mxu0 %v82
  %109 = vmatprep.subr.bf16.mxu0 0
  %110 = vmatpush2.bf16.msra.mxu0 0
  %111 = vmatprep.subr.bf16.mxu0 0
  %112 = vmatpush2.bf16.msra.mxu0 0
  %113 = vmatprep.subr.bf16.mxu0 0
  %114 = vmatpush2.bf16.msra.mxu0 0
  %115 = vmatprep.subr.bf16.mxu0 0
  %116 = vmatpush2.bf16.msra.mxu0 0
  %117 = vmatprep.subr.bf16.mxu0 0
  %118 = vmatpush2.bf16.msra.mxu0 0
  %119 = vmatprep.subr.bf16.mxu0 0
  %120 = vmatpush2.bf16.msra.mxu0 0
  %121 = vmatprep.subr.bf16.mxu0 0
  %122 = vmatpush2.bf16.msra.mxu0 0
  %123 = vmatprep.subr.bf16.mxu0 0
  %124 = vmatpush2.bf16.msra.mxu0 0
  %125 = vmatprep.mubr.bf16.mxu0 0
  %126 = vmatmul.mubr.bf16.gmra.mxu0 %v88
  %v127 = vpop.f32.mrf.mxu0
  %v128 = vadd.f32 %v73, %v127
  %v129 = vpop.f32.mrf.mxu0
  %v130 = vpop.f32.mrf.mxu0
  %v131 = vadd.f32 %v73, %v130
  %v132 = vpop.f32.mrf.mxu0
  %133 = vmatprep.mubr.bf16.mxu0 0
  %134 = vmatmul.mubr.bf16.gmra.mxu0 %v91
  %v135 = vpop.f32.mrf.mxu0
  %v136 = vadd.f32 %v73, %v135
  %v137 = vpop.f32.mrf.mxu0
  %v138 = vpop.f32.mrf.mxu0
  %v139 = vadd.f32 %v73, %v138
  %v140 = vpop.f32.mrf.mxu0
  %141 = vdwg.mxu0
  %v142 = vpack.c.bf16 %v31, %v30
  %v143 = vpack.c.bf16 %v33, %v32
  %v144 = vlaneseq
  %v145 = vshrl.u32 %v144, 7
  %v146 = vsub.s32 2, %v145
  %v147 = vrot.slane %v62, %v146
  %v152 = vunpack.c.l.b16 %v42
  %v153 = vunpack.c.l.b16 %v43
  %v154 = vunpack.c.l.b16 %v44
  %v155 = vunpack.c.l.b16 %v45
  %v156 = vpack.c.b16 %v153, %v152
  %v157 = vpack.c.b16 %v155, %v154
  %v161 = vsel %vm86, %v142, 0
  %v164 = vsel %vm86, %v143, 0
  %166 = vmatprep.subr.bf16.mxu0 0
  %167 = vmatpush1.bf16.msra.mxu0 0
  %168 = vmatprep.subr.bf16.mxu0 0
  %169 = vmatpush1.bf16.msra.mxu0 0
  %170 = vmatprep.subr.bf16.mxu0 0
  %171 = vmatpush1.bf16.msra.mxu0 0
  %172 = vmatprep.subr.bf16.mxu0 0
  %173 = vmatpush1.bf16.msra.mxu0 0
  %174 = vmatprep.subr.bf16.mxu0 0
  %175 = vmatpush1.bf16.msra.mxu0 0
  %176 = vmatprep.subr.bf16.mxu0 0
  %177 = vmatpush1.bf16.msra.mxu0 0
  %178 = vmatprep.subr.bf16.mxu0 0
  %179 = vmatpush1.bf16.msra.mxu0 %v157
  %180 = vmatprep.subr.bf16.mxu0 0
  %181 = vmatpush1.bf16.msra.mxu0 %v156
  %182 = vmatprep.subr.bf16.mxu0 0
  %183 = vmatpush2.bf16.msra.mxu0 0
  %184 = vmatprep.subr.bf16.mxu0 0
  %185 = vmatpush2.bf16.msra.mxu0 0
  %186 = vmatprep.subr.bf16.mxu0 0
  %187 = vmatpush2.bf16.msra.mxu0 0
  %188 = vmatprep.subr.bf16.mxu0 0
  %189 = vmatpush2.bf16.msra.mxu0 0
  %190 = vmatprep.subr.bf16.mxu0 0
  %191 = vmatpush2.bf16.msra.mxu0 0
  %192 = vmatprep.subr.bf16.mxu0 0
  %193 = vmatpush2.bf16.msra.mxu0 0
  %194 = vmatprep.subr.bf16.mxu0 0
  %195 = vmatpush2.bf16.msra.mxu0 0
  %196 = vmatprep.subr.bf16.mxu0 0
  %197 = vmatpush2.bf16.msra.mxu0 0
  %198 = vmatprep.mubr.bf16.mxu0 0
  %199 = vmatmul.mubr.bf16.gmra.mxu0 %v161
  %v200 = vpop.f32.mrf.mxu0
  %v201 = vadd.f32 %v147, %v200
  %v202 = vpop.f32.mrf.mxu0
  %v203 = vpop.f32.mrf.mxu0
  %v204 = vadd.f32 %v147, %v203
  %v205 = vpop.f32.mrf.mxu0
  %206 = vmatprep.mubr.bf16.mxu0 0
  %207 = vmatmul.mubr.bf16.gmra.mxu0 %v164
  %v208 = vpop.f32.mrf.mxu0
  %v209 = vadd.f32 %v147, %v208
  %v210 = vpop.f32.mrf.mxu0
  %v211 = vpop.f32.mrf.mxu0
  %v212 = vadd.f32 %v147, %v211
  %v213 = vpop.f32.mrf.mxu0
  %214 = vdwg.mxu0
  %v215 = vpack.c.bf16 %v131, %v128
  %v216 = vpack.c.bf16 %v139, %v136
  %v217 = vpack.c.bf16 %v204, %v201
  %v218 = vpack.c.bf16 %v212, %v209
  %220 = vrot.lane.b32.xlu0 %v215, 96
  %v221 = vpop.permute.xlu0 %220
  %vm222 = vcmask 64512
  %v224 = vsel %vm222, %v215, 0
  %v227 = vsel %vm222, %v221, 0
  %229 = vmatprep.subr.bf16.mxu0 0
  %230 = vmatpush1.bf16.xpose.msra.mxu0 0
  %231 = vmatprep.subr.bf16.mxu0 0
  %232 = vmatpush1.bf16.xpose.msra.mxu0 0
  %233 = vmatprep.subr.bf16.mxu0 0
  %234 = vmatpush1.bf16.xpose.msra.mxu0 0
  %235 = vmatprep.subr.bf16.mxu0 0
  %236 = vmatpush1.bf16.xpose.msra.mxu0 0
  %237 = vmatprep.subr.bf16.mxu0 0
  %238 = vmatpush1.bf16.xpose.msra.mxu0 0
  %239 = vmatprep.subr.bf16.mxu0 0
  %240 = vmatpush1.bf16.xpose.msra.mxu0 0
  %241 = vmatprep.subr.bf16.mxu0 0
  %242 = vmatpush1.bf16.xpose.msra.mxu0 0
  %243 = vmatprep.subr.bf16.mxu0 0
  %244 = vmatpush1.bf16.xpose.msra.mxu0 %v227
  %245 = vmatprep.subr.bf16.mxu0 0
  %246 = vmatpush2.bf16.xpose.msra.mxu0 0
  %247 = vmatprep.subr.bf16.mxu0 0
  %248 = vmatpush2.bf16.xpose.msra.mxu0 0
  %249 = vmatprep.subr.bf16.mxu0 0
  %250 = vmatpush2.bf16.xpose.msra.mxu0 0
  %251 = vmatprep.subr.bf16.mxu0 0
  %252 = vmatpush2.bf16.xpose.msra.mxu0 0
  %253 = vmatprep.subr.bf16.mxu0 0
  %254 = vmatpush2.bf16.xpose.msra.mxu0 0
  %255 = vmatprep.subr.bf16.mxu0 0
  %256 = vmatpush2.bf16.xpose.msra.mxu0 0
  %257 = vmatprep.subr.bf16.mxu0 0
  %258 = vmatpush2.bf16.xpose.msra.mxu0 0
  %259 = vmatprep.subr.bf16.mxu0 0
  %260 = vmatpush2.bf16.xpose.msra.mxu0 0
  %261 = vmatprep.mubr.bf16.mxu0 0
  %262 = vmatmul.mubr.bf16.gmra.mxu0 %v224
  %v263 = vpop.f32.mrf.mxu0
  %v264 = vadd.f32 0.0, %v263
  %v265 = vpop.f32.mrf.mxu0
  %v266 = vpop.f32.mrf.mxu0
  %v267 = vadd.f32 0.0, %v266
  %v268 = vpop.f32.mrf.mxu0
  %269 = vdwg.mxu0
  %271 = vrot.lane.b32.xlu0 %v216, 96
  %v272 = vpop.permute.xlu0 %271
  %v274 = vsel %vm222, %v216, 0
  %v277 = vsel %vm222, %v272, 0
  %279 = vmatprep.subr.bf16.mxu0 0
  %280 = vmatpush1.bf16.xpose.msra.mxu0 0
  %281 = vmatprep.subr.bf16.mxu0 0
  %282 = vmatpush1.bf16.xpose.msra.mxu0 0
  %283 = vmatprep.subr.bf16.mxu0 0
  %284 = vmatpush1.bf16.xpose.msra.mxu0 0
  %285 = vmatprep.subr.bf16.mxu0 0
  %286 = vmatpush1.bf16.xpose.msra.mxu0 0
  %287 = vmatprep.subr.bf16.mxu0 0
  %288 = vmatpush1.bf16.xpose.msra.mxu0 0
  %289 = vmatprep.subr.bf16.mxu0 0
  %290 = vmatpush1.bf16.xpose.msra.mxu0 0
  %291 = vmatprep.subr.bf16.mxu0 0
  %292 = vmatpush1.bf16.xpose.msra.mxu0 0
  %293 = vmatprep.subr.bf16.mxu0 0
  %294 = vmatpush1.bf16.xpose.msra.mxu0 %v277
  %295 = vmatprep.subr.bf16.mxu0 0
  %296 = vmatpush2.bf16.xpose.msra.mxu0 0
  %297 = vmatprep.subr.bf16.mxu0 0
  %298 = vmatpush2.bf16.xpose.msra.mxu0 0
  %299 = vmatprep.subr.bf16.mxu0 0
  %300 = vmatpush2.bf16.xpose.msra.mxu0 0
  %301 = vmatprep.subr.bf16.mxu0 0
  %302 = vmatpush2.bf16.xpose.msra.mxu0 0
  %303 = vmatprep.subr.bf16.mxu0 0
  %304 = vmatpush2.bf16.xpose.msra.mxu0 0
  %305 = vmatprep.subr.bf16.mxu0 0
  %306 = vmatpush2.bf16.xpose.msra.mxu0 0
  %307 = vmatprep.subr.bf16.mxu0 0
  %308 = vmatpush2.bf16.xpose.msra.mxu0 0
  %309 = vmatprep.subr.bf16.mxu0 0
  %310 = vmatpush2.bf16.xpose.msra.mxu0 0
  %311 = vmatprep.mubr.bf16.mxu0 0
  %312 = vmatmul.mubr.bf16.gmra.mxu0 %v274
  %v313 = vpop.f32.mrf.mxu0
  %v314 = vadd.f32 0.0, %v313
  %v315 = vpop.f32.mrf.mxu0
  %v316 = vpop.f32.mrf.mxu0
  %v317 = vadd.f32 0.0, %v316
  %v318 = vpop.f32.mrf.mxu0
  %319 = vdwg.mxu0
  %v320 = vmul.f32 %v264, 0.35355338
  %v321 = vmul.f32 %v267, 0.35355338
  %v322 = vmul.f32 %v314, 0.35355338
  %v323 = vmul.f32 %v317, 0.35355338
  %vm324 = vcmask 130048
  %v325 = vsel %vm324, %v320, -inf
  %326 = vmax.xlane.f32.xlu0 %v325
  %v327 = vpop.xlane.xlu0 %326
  %v328 = vsel %vm324, %v321, -inf
  %329 = vmax.xlane.f32.xlu0 %v328
  %v330 = vpop.xlane.xlu0 %329
  %v331 = vsel %vm324, %v322, -inf
  %332 = vmax.xlane.f32.xlu0 %v331
  %v333 = vpop.xlane.xlu0 %332
  %v334 = vsel %vm324, %v323, -inf
  %335 = vmax.xlane.f32.xlu0 %v334
  %v336 = vpop.xlane.xlu0 %335
  %v337 = vsub.f32 %v320, %v327
  %v338 = vsub.f32 %v321, %v330
  %v339 = vsub.f32 %v322, %v333
  %v340 = vsub.f32 %v323, %v336
  %v341 = vmul.f32 %v337, 1.442695
  %v342 = vpow.pop %v341
  %v343 = vmul.f32 %v338, 1.442695
  %v344 = vpow.pop %v343
  %v345 = vmul.f32 %v339, 1.442695
  %v346 = vpow.pop %v345
  %v347 = vmul.f32 %v340, 1.442695
  %v348 = vpow.pop %v347
  %v349 = vsel %vm324, %v342, 0.0
  %350 = vadd.xlane.f32.xlu0 %v349
  %v351 = vpop.xlane.xlu0 %350
  %v352 = vsel %vm324, %v344, 0.0
  %353 = vadd.xlane.f32.xlu0 %v352
  %v354 = vpop.xlane.xlu0 %353
  %v355 = vsel %vm324, %v346, 0.0
  %356 = vadd.xlane.f32.xlu0 %v355
  %v357 = vpop.xlane.xlu0 %356
  %v358 = vsel %vm324, %v348, 0.0
  %359 = vadd.xlane.f32.xlu0 %v358
  %v360 = vpop.xlane.xlu0 %359
  %v361 = vrcp.pop %v351
  %v362 = vrcp.pop %v354
  %v363 = vrcp.pop %v357
  %v364 = vrcp.pop %v360
  %v365 = vmul.f32 %v342, %v361
  %v366 = vmul.f32 %v344, %v362
  %v367 = vmul.f32 %v346, %v363
  %v368 = vmul.f32 %v348, %v364
  %v369 = vpack.c.bf16 %v366, %v365
  %v370 = vpack.c.bf16 %v368, %v367
  %v372 = vsel %vm324, %v369, 0
  %374 = vmatprep.subr.bf16.mxu0 0
  %375 = vmatpush1.bf16.msra.mxu0 0
  %376 = vmatprep.subr.bf16.mxu0 0
  %377 = vmatpush1.bf16.msra.mxu0 0
  %378 = vmatprep.subr.bf16.mxu0 0
  %379 = vmatpush1.bf16.msra.mxu0 0
  %380 = vmatprep.subr.bf16.mxu0 0
  %381 = vmatpush1.bf16.msra.mxu0 0
  %382 = vmatprep.subr.bf16.mxu0 0
  %383 = vmatpush1.bf16.msra.mxu0 0
  %384 = vmatprep.subr.bf16.mxu0 0
  %385 = vmatpush1.bf16.msra.mxu0 0
  %386 = vmatprep.subr.bf16.mxu0 0
  %387 = vmatpush1.bf16.msra.mxu0 0
  %388 = vmatprep.subr.bf16.mxu0 0
  %389 = vmatpush1.bf16.msra.mxu0 %v217
  %390 = vmatprep.subr.bf16.mxu0 0
  %391 = vmatpush2.bf16.msra.mxu0 0
  %392 = vmatprep.subr.bf16.mxu0 0
  %393 = vmatpush2.bf16.msra.mxu0 0
  %394 = vmatprep.subr.bf16.mxu0 0
  %395 = vmatpush2.bf16.msra.mxu0 0
  %396 = vmatprep.subr.bf16.mxu0 0
  %397 = vmatpush2.bf16.msra.mxu0 0
  %398 = vmatprep.subr.bf16.mxu0 0
  %399 = vmatpush2.bf16.msra.mxu0 0
  %400 = vmatprep.subr.bf16.mxu0 0
  %401 = vmatpush2.bf16.msra.mxu0 0
  %402 = vmatprep.subr.bf16.mxu0 0
  %403 = vmatpush2.bf16.msra.mxu0 0
  %404 = vmatprep.subr.bf16.mxu0 0
  %405 = vmatpush2.bf16.msra.mxu0 0
  %406 = vmatprep.mubr.bf16.mxu0 0
  %407 = vmatmul.mubr.bf16.gmra.mxu0 %v372
  %v408 = vpop.f32.mrf.mxu0
  %v409 = vadd.f32 0.0, %v408
  %v410 = vpop.f32.mrf.mxu0
  %v411 = vpop.f32.mrf.mxu0
  %v412 = vadd.f32 0.0, %v411
  %v413 = vpop.f32.mrf.mxu0
  %414 = vdwg.mxu0
  %v416 = vsel %vm324, %v370, 0
  %418 = vmatprep.subr.bf16.mxu0 0
  %419 = vmatpush1.bf16.msra.mxu0 0
  %420 = vmatprep.subr.bf16.mxu0 0
  %421 = vmatpush1.bf16.msra.mxu0 0
  %422 = vmatprep.subr.bf16.mxu0 0
  %423 = vmatpush1.bf16.msra.mxu0 0
  %424 = vmatprep.subr.bf16.mxu0 0
  %425 = vmatpush1.bf16.msra.mxu0 0
  %426 = vmatprep.subr.bf16.mxu0 0
  %427 = vmatpush1.bf16.msra.mxu0 0
  %428 = vmatprep.subr.bf16.mxu0 0
  %429 = vmatpush1.bf16.msra.mxu0 0
  %430 = vmatprep.subr.bf16.mxu0 0
  %431 = vmatpush1.bf16.msra.mxu0 0
  %432 = vmatprep.subr.bf16.mxu0 0
  %433 = vmatpush1.bf16.msra.mxu0 %v218
  %434 = vmatprep.subr.bf16.mxu0 0
  %435 = vmatpush2.bf16.msra.mxu0 0
  %436 = vmatprep.subr.bf16.mxu0 0
  %437 = vmatpush2.bf16.msra.mxu0 0
  %438 = vmatprep.subr.bf16.mxu0 0
  %439 = vmatpush2.bf16.msra.mxu0 0
  %440 = vmatprep.subr.bf16.mxu0 0
  %441 = vmatpush2.bf16.msra.mxu0 0
  %442 = vmatprep.subr.bf16.mxu0 0
  %443 = vmatpush2.bf16.msra.mxu0 0
  %444 = vmatprep.subr.bf16.mxu0 0
  %445 = vmatpush2.bf16.msra.mxu0 0
  %446 = vmatprep.subr.bf16.mxu0 0
  %447 = vmatpush2.bf16.msra.mxu0 0
  %448 = vmatprep.subr.bf16.mxu0 0
  %449 = vmatpush2.bf16.msra.mxu0 0
  %450 = vmatprep.mubr.bf16.mxu0 0
  %451 = vmatmul.mubr.bf16.gmra.mxu0 %v416
  %v452 = vpop.f32.mrf.mxu0
  %v453 = vadd.f32 0.0, %v452
  %v454 = vpop.f32.mrf.mxu0
  %v455 = vpop.f32.mrf.mxu0
  %v456 = vadd.f32 0.0, %v455
  %v457 = vpop.f32.mrf.mxu0
  %458 = vdwg.mxu0
  %459 = vrot.lane.b32.xlu0 %v215, 120
  %v460 = vpop.permute.xlu0 %459
  %461 = vrot.lane.b32.xlu0 %v215, 88
  %v462 = vpop.permute.xlu0 %461
  %v464 = vsel %vm222, %v460, 0
  %v467 = vsel %vm222, %v462, 0
  %469 = vmatprep.subr.bf16.mxu0 0
  %470 = vmatpush1.bf16.xpose.msra.mxu0 0
  %471 = vmatprep.subr.bf16.mxu0 0
  %472 = vmatpush1.bf16.xpose.msra.mxu0 0
  %473 = vmatprep.subr.bf16.mxu0 0
  %474 = vmatpush1.bf16.xpose.msra.mxu0 0
  %475 = vmatprep.subr.bf16.mxu0 0
  %476 = vmatpush1.bf16.xpose.msra.mxu0 0
  %477 = vmatprep.subr.bf16.mxu0 0
  %478 = vmatpush1.bf16.xpose.msra.mxu0 0
  %479 = vmatprep.subr.bf16.mxu0 0
  %480 = vmatpush1.bf16.xpose.msra.mxu0 0
  %481 = vmatprep.subr.bf16.mxu0 0
  %482 = vmatpush1.bf16.xpose.msra.mxu0 0
  %483 = vmatprep.subr.bf16.mxu0 0
  %484 = vmatpush1.bf16.xpose.msra.mxu0 %v467
  %485 = vmatprep.subr.bf16.mxu0 0
  %486 = vmatpush2.bf16.xpose.msra.mxu0 0
  %487 = vmatprep.subr.bf16.mxu0 0
  %488 = vmatpush2.bf16.xpose.msra.mxu0 0
  %489 = vmatprep.subr.bf16.mxu0 0
  %490 = vmatpush2.bf16.xpose.msra.mxu0 0
  %491 = vmatprep.subr.bf16.mxu0 0
  %492 = vmatpush2.bf16.xpose.msra.mxu0 0
  %493 = vmatprep.subr.bf16.mxu0 0
  %494 = vmatpush2.bf16.xpose.msra.mxu0 0
  %495 = vmatprep.subr.bf16.mxu0 0
  %496 = vmatpush2.bf16.xpose.msra.mxu0 0
  %497 = vmatprep.subr.bf16.mxu0 0
  %498 = vmatpush2.bf16.xpose.msra.mxu0 0
  %499 = vmatprep.subr.bf16.mxu0 0
  %500 = vmatpush2.bf16.xpose.msra.mxu0 0
  %501 = vmatprep.mubr.bf16.mxu0 0
  %502 = vmatmul.mubr.bf16.gmra.mxu0 %v464
  %v503 = vpop.f32.mrf.mxu0
  %v504 = vadd.f32 0.0, %v503
  %v505 = vpop.f32.mrf.mxu0
  %v506 = vpop.f32.mrf.mxu0
  %v507 = vadd.f32 0.0, %v506
  %v508 = vpop.f32.mrf.mxu0
  %509 = vdwg.mxu0
  %510 = vrot.lane.b32.xlu0 %v216, 120
  %v511 = vpop.permute.xlu0 %510
  %512 = vrot.lane.b32.xlu0 %v216, 88
  %v513 = vpop.permute.xlu0 %512
  %v515 = vsel %vm222, %v511, 0
  %v518 = vsel %vm222, %v513, 0
  %520 = vmatprep.subr.bf16.mxu0 0
  %521 = vmatpush1.bf16.xpose.msra.mxu0 0
  %522 = vmatprep.subr.bf16.mxu0 0
  %523 = vmatpush1.bf16.xpose.msra.mxu0 0
  %524 = vmatprep.subr.bf16.mxu0 0
  %525 = vmatpush1.bf16.xpose.msra.mxu0 0
  %526 = vmatprep.subr.bf16.mxu0 0
  %527 = vmatpush1.bf16.xpose.msra.mxu0 0
  %528 = vmatprep.subr.bf16.mxu0 0
  %529 = vmatpush1.bf16.xpose.msra.mxu0 0
  %530 = vmatprep.subr.bf16.mxu0 0
  %531 = vmatpush1.bf16.xpose.msra.mxu0 0
  %532 = vmatprep.subr.bf16.mxu0 0
  %533 = vmatpush1.bf16.xpose.msra.mxu0 0
  %534 = vmatprep.subr.bf16.mxu0 0
  %535 = vmatpush1.bf16.xpose.msra.mxu0 %v518
  %536 = vmatprep.subr.bf16.mxu0 0
  %537 = vmatpush2.bf16.xpose.msra.mxu0 0
  %538 = vmatprep.subr.bf16.mxu0 0
  %539 = vmatpush2.bf16.xpose.msra.mxu0 0
  %540 = vmatprep.subr.bf16.mxu0 0
  %541 = vmatpush2.bf16.xpose.msra.mxu0 0
  %542 = vmatprep.subr.bf16.mxu0 0
  %543 = vmatpush2.bf16.xpose.msra.mxu0 0
  %544 = vmatprep.subr.bf16.mxu0 0
  %545 = vmatpush2.bf16.xpose.msra.mxu0 0
  %546 = vmatprep.subr.bf16.mxu0 0
  %547 = vmatpush2.bf16.xpose.msra.mxu0 0
  %548 = vmatprep.subr.bf16.mxu0 0
  %549 = vmatpush2.bf16.xpose.msra.mxu0 0
  %550 = vmatprep.subr.bf16.mxu0 0
  %551 = vmatpush2.bf16.xpose.msra.mxu0 0
  %552 = vmatprep.mubr.bf16.mxu0 0
  %553 = vmatmul.mubr.bf16.gmra.mxu0 %v515
  %v554 = vpop.f32.mrf.mxu0
  %v555 = vadd.f32 0.0, %v554
  %v556 = vpop.f32.mrf.mxu0
  %v557 = vpop.f32.mrf.mxu0
  %v558 = vadd.f32 0.0, %v557
  %v559 = vpop.f32.mrf.mxu0
  %560 = vdwg.mxu0
  %v561 = vmul.f32 %v504, 0.35355338
  %v562 = vmul.f32 %v507, 0.35355338
  %v563 = vmul.f32 %v555, 0.35355338
  %v564 = vmul.f32 %v558, 0.35355338
  %v565 = vsel %vm324, %v561, -inf
  %566 = vmax.xlane.f32.xlu0 %v565
  %v567 = vpop.xlane.xlu0 %566
  %v568 = vsel %vm324, %v562, -inf
  %569 = vmax.xlane.f32.xlu0 %v568
  %v570 = vpop.xlane.xlu0 %569
  %v571 = vsel %vm324, %v563, -inf
  %572 = vmax.xlane.f32.xlu0 %v571
  %v573 = vpop.xlane.xlu0 %572
  %v574 = vsel %vm324, %v564, -inf
  %575 = vmax.xlane.f32.xlu0 %v574
  %v576 = vpop.xlane.xlu0 %575
  %v577 = vsub.f32 %v561, %v567
  %v578 = vsub.f32 %v562, %v570
  %v579 = vsub.f32 %v563, %v573
  %v580 = vsub.f32 %v564, %v576
  %v581 = vmul.f32 %v577, 1.442695
  %v582 = vpow.pop %v581
  %v583 = vmul.f32 %v578, 1.442695
  %v584 = vpow.pop %v583
  %v585 = vmul.f32 %v579, 1.442695
  %v586 = vpow.pop %v585
  %v587 = vmul.f32 %v580, 1.442695
  %v588 = vpow.pop %v587
  %v589 = vsel %vm324, %v582, 0.0
  %590 = vadd.xlane.f32.xlu0 %v589
  %v591 = vpop.xlane.xlu0 %590
  %v592 = vsel %vm324, %v584, 0.0
  %593 = vadd.xlane.f32.xlu0 %v592
  %v594 = vpop.xlane.xlu0 %593
  %v595 = vsel %vm324, %v586, 0.0
  %596 = vadd.xlane.f32.xlu0 %v595
  %v597 = vpop.xlane.xlu0 %596
  %v598 = vsel %vm324, %v588, 0.0
  %599 = vadd.xlane.f32.xlu0 %v598
  %v600 = vpop.xlane.xlu0 %599
  %v601 = vrcp.pop %v591
  %v602 = vrcp.pop %v594
  %v603 = vrcp.pop %v597
  %v604 = vrcp.pop %v600
  %v605 = vmul.f32 %v582, %v601
  %v606 = vmul.f32 %v584, %v602
  %v607 = vmul.f32 %v586, %v603
  %v608 = vmul.f32 %v588, %v604
  %v609 = vpack.c.bf16 %v606, %v605
  %v610 = vpack.c.bf16 %v608, %v607
  %612 = vrot.lane.b32.xlu0 %v217, 120
  %v613 = vpop.permute.xlu0 %612
  %v616 = vsel %vm324, %v609, 0
  %618 = vmatprep.subr.bf16.mxu0 0
  %619 = vmatpush1.bf16.msra.mxu0 0
  %620 = vmatprep.subr.bf16.mxu0 0
  %621 = vmatpush1.bf16.msra.mxu0 0
  %622 = vmatprep.subr.bf16.mxu0 0
  %623 = vmatpush1.bf16.msra.mxu0 0
  %624 = vmatprep.subr.bf16.mxu0 0
  %625 = vmatpush1.bf16.msra.mxu0 0
  %626 = vmatprep.subr.bf16.mxu0 0
  %627 = vmatpush1.bf16.msra.mxu0 0
  %628 = vmatprep.subr.bf16.mxu0 0
  %629 = vmatpush1.bf16.msra.mxu0 0
  %630 = vmatprep.subr.bf16.mxu0 0
  %631 = vmatpush1.bf16.msra.mxu0 0
  %632 = vmatprep.subr.bf16.mxu0 0
  %633 = vmatpush1.bf16.msra.mxu0 %v613
  %634 = vmatprep.subr.bf16.mxu0 0
  %635 = vmatpush2.bf16.msra.mxu0 0
  %636 = vmatprep.subr.bf16.mxu0 0
  %637 = vmatpush2.bf16.msra.mxu0 0
  %638 = vmatprep.subr.bf16.mxu0 0
  %639 = vmatpush2.bf16.msra.mxu0 0
  %640 = vmatprep.subr.bf16.mxu0 0
  %641 = vmatpush2.bf16.msra.mxu0 0
  %642 = vmatprep.subr.bf16.mxu0 0
  %643 = vmatpush2.bf16.msra.mxu0 0
  %644 = vmatprep.subr.bf16.mxu0 0
  %645 = vmatpush2.bf16.msra.mxu0 0
  %646 = vmatprep.subr.bf16.mxu0 0
  %647 = vmatpush2.bf16.msra.mxu0 0
  %648 = vmatprep.subr.bf16.mxu0 0
  %649 = vmatpush2.bf16.msra.mxu0 0
  %650 = vmatprep.mubr.bf16.mxu0 0
  %651 = vmatmul.mubr.bf16.gmra.mxu0 %v616
  %v652 = vpop.f32.mrf.mxu0
  %v653 = vadd.f32 0.0, %v652
  %v654 = vpop.f32.mrf.mxu0
  %v655 = vpop.f32.mrf.mxu0
  %v656 = vadd.f32 0.0, %v655
  %v657 = vpop.f32.mrf.mxu0
  %658 = vdwg.mxu0
  %660 = vrot.lane.b32.xlu0 %v218, 120
  %v661 = vpop.permute.xlu0 %660
  %v664 = vsel %vm324, %v610, 0
  %666 = vmatprep.subr.bf16.mxu0 0
  %667 = vmatpush1.bf16.msra.mxu0 0
  %668 = vmatprep.subr.bf16.mxu0 0
  %669 = vmatpush1.bf16.msra.mxu0 0
  %670 = vmatprep.subr.bf16.mxu0 0
  %671 = vmatpush1.bf16.msra.mxu0 0
  %672 = vmatprep.subr.bf16.mxu0 0
  %673 = vmatpush1.bf16.msra.mxu0 0
  %674 = vmatprep.subr.bf16.mxu0 0
  %675 = vmatpush1.bf16.msra.mxu0 0
  %676 = vmatprep.subr.bf16.mxu0 0
  %677 = vmatpush1.bf16.msra.mxu0 0
  %678 = vmatprep.subr.bf16.mxu0 0
  %679 = vmatpush1.bf16.msra.mxu0 0
  %680 = vmatprep.subr.bf16.mxu0 0
  %681 = vmatpush1.bf16.msra.mxu0 %v661
  %682 = vmatprep.subr.bf16.mxu0 0
  %683 = vmatpush2.bf16.msra.mxu0 0
  %684 = vmatprep.subr.bf16.mxu0 0
  %685 = vmatpush2.bf16.msra.mxu0 0
  %686 = vmatprep.subr.bf16.mxu0 0
  %687 = vmatpush2.bf16.msra.mxu0 0
  %688 = vmatprep.subr.bf16.mxu0 0
  %689 = vmatpush2.bf16.msra.mxu0 0
  %690 = vmatprep.subr.bf16.mxu0 0
  %691 = vmatpush2.bf16.msra.mxu0 0
  %692 = vmatprep.subr.bf16.mxu0 0
  %693 = vmatpush2.bf16.msra.mxu0 0
  %694 = vmatprep.subr.bf16.mxu0 0
  %695 = vmatpush2.bf16.msra.mxu0 0
  %696 = vmatprep.subr.bf16.mxu0 0
  %697 = vmatpush2.bf16.msra.mxu0 0
  %698 = vmatprep.mubr.bf16.mxu0 0
  %699 = vmatmul.mubr.bf16.gmra.mxu0 %v664
  %v700 = vpop.f32.mrf.mxu0
  %v701 = vadd.f32 0.0, %v700
  %v702 = vpop.f32.mrf.mxu0
  %v703 = vpop.f32.mrf.mxu0
  %v704 = vadd.f32 0.0, %v703
  %v705 = vpop.f32.mrf.mxu0
  %706 = vdwg.mxu0
  %707 = vrot.lane.b32.xlu0 %v215, 112
  %v708 = vpop.permute.xlu0 %707
  %709 = vrot.lane.b32.xlu0 %v215, 80
  %v710 = vpop.permute.xlu0 %709
  %v712 = vsel %vm222, %v708, 0
  %v715 = vsel %vm222, %v710, 0
  %717 = vmatprep.subr.bf16.mxu0 0
  %718 = vmatpush1.bf16.xpose.msra.mxu0 0
  %719 = vmatprep.subr.bf16.mxu0 0
  %720 = vmatpush1.bf16.xpose.msra.mxu0 0
  %721 = vmatprep.subr.bf16.mxu0 0
  %722 = vmatpush1.bf16.xpose.msra.mxu0 0
  %723 = vmatprep.subr.bf16.mxu0 0
  %724 = vmatpush1.bf16.xpose.msra.mxu0 0
  %725 = vmatprep.subr.bf16.mxu0 0
  %726 = vmatpush1.bf16.xpose.msra.mxu0 0
  %727 = vmatprep.subr.bf16.mxu0 0
  %728 = vmatpush1.bf16.xpose.msra.mxu0 0
  %729 = vmatprep.subr.bf16.mxu0 0
  %730 = vmatpush1.bf16.xpose.msra.mxu0 0
  %731 = vmatprep.subr.bf16.mxu0 0
  %732 = vmatpush1.bf16.xpose.msra.mxu0 %v715
  %733 = vmatprep.subr.bf16.mxu0 0
  %734 = vmatpush2.bf16.xpose.msra.mxu0 0
  %735 = vmatprep.subr.bf16.mxu0 0
  %736 = vmatpush2.bf16.xpose.msra.mxu0 0
  %737 = vmatprep.subr.bf16.mxu0 0
  %738 = vmatpush2.bf16.xpose.msra.mxu0 0
  %739 = vmatprep.subr.bf16.mxu0 0
  %740 = vmatpush2.bf16.xpose.msra.mxu0 0
  %741 = vmatprep.subr.bf16.mxu0 0
  %742 = vmatpush2.bf16.xpose.msra.mxu0 0
  %743 = vmatprep.subr.bf16.mxu0 0
  %744 = vmatpush2.bf16.xpose.msra.mxu0 0
  %745 = vmatprep.subr.bf16.mxu0 0
  %746 = vmatpush2.bf16.xpose.msra.mxu0 0
  %747 = vmatprep.subr.bf16.mxu0 0
  %748 = vmatpush2.bf16.xpose.msra.mxu0 0
  %749 = vmatprep.mubr.bf16.mxu0 0
  %750 = vmatmul.mubr.bf16.gmra.mxu0 %v712
  %v751 = vpop.f32.mrf.mxu0
  %v752 = vadd.f32 0.0, %v751
  %v753 = vpop.f32.mrf.mxu0
  %v754 = vpop.f32.mrf.mxu0
  %v755 = vadd.f32 0.0, %v754
  %v756 = vpop.f32.mrf.mxu0
  %757 = vdwg.mxu0
  %758 = vrot.lane.b32.xlu0 %v216, 112
  %v759 = vpop.permute.xlu0 %758
  %760 = vrot.lane.b32.xlu0 %v216, 80
  %v761 = vpop.permute.xlu0 %760
  %v763 = vsel %vm222, %v759, 0
  %v766 = vsel %vm222, %v761, 0
  %768 = vmatprep.subr.bf16.mxu0 0
  %769 = vmatpush1.bf16.xpose.msra.mxu0 0
  %770 = vmatprep.subr.bf16.mxu0 0
  %771 = vmatpush1.bf16.xpose.msra.mxu0 0
  %772 = vmatprep.subr.bf16.mxu0 0
  %773 = vmatpush1.bf16.xpose.msra.mxu0 0
  %774 = vmatprep.subr.bf16.mxu0 0
  %775 = vmatpush1.bf16.xpose.msra.mxu0 0
  %776 = vmatprep.subr.bf16.mxu0 0
  %777 = vmatpush1.bf16.xpose.msra.mxu0 0
  %778 = vmatprep.subr.bf16.mxu0 0
  %779 = vmatpush1.bf16.xpose.msra.mxu0 0
  %780 = vmatprep.subr.bf16.mxu0 0
  %781 = vmatpush1.bf16.xpose.msra.mxu0 0
  %782 = vmatprep.subr.bf16.mxu0 0
  %783 = vmatpush1.bf16.xpose.msra.mxu0 %v766
  %784 = vmatprep.subr.bf16.mxu0 0
  %785 = vmatpush2.bf16.xpose.msra.mxu0 0
  %786 = vmatprep.subr.bf16.mxu0 0
  %787 = vmatpush2.bf16.xpose.msra.mxu0 0
  %788 = vmatprep.subr.bf16.mxu0 0
  %789 = vmatpush2.bf16.xpose.msra.mxu0 0
  %790 = vmatprep.subr.bf16.mxu0 0
  %791 = vmatpush2.bf16.xpose.msra.mxu0 0
  %792 = vmatprep.subr.bf16.mxu0 0
  %793 = vmatpush2.bf16.xpose.msra.mxu0 0
  %794 = vmatprep.subr.bf16.mxu0 0
  %795 = vmatpush2.bf16.xpose.msra.mxu0 0
  %796 = vmatprep.subr.bf16.mxu0 0
  %797 = vmatpush2.bf16.xpose.msra.mxu0 0
  %798 = vmatprep.subr.bf16.mxu0 0
  %799 = vmatpush2.bf16.xpose.msra.mxu0 0
  %800 = vmatprep.mubr.bf16.mxu0 0
  %801 = vmatmul.mubr.bf16.gmra.mxu0 %v763
  %v802 = vpop.f32.mrf.mxu0
  %v803 = vadd.f32 0.0, %v802
  %v804 = vpop.f32.mrf.mxu0
  %v805 = vpop.f32.mrf.mxu0
  %v806 = vadd.f32 0.0, %v805
  %v807 = vpop.f32.mrf.mxu0
  %808 = vdwg.mxu0
  %v809 = vmul.f32 %v752, 0.35355338
  %v810 = vmul.f32 %v755, 0.35355338
  %v811 = vmul.f32 %v803, 0.35355338
  %v812 = vmul.f32 %v806, 0.35355338
  %v813 = vsel %vm324, %v809, -inf
  %814 = vmax.xlane.f32.xlu0 %v813
  %v815 = vpop.xlane.xlu0 %814
  %v816 = vsel %vm324, %v810, -inf
  %817 = vmax.xlane.f32.xlu0 %v816
  %v818 = vpop.xlane.xlu0 %817
  %v819 = vsel %vm324, %v811, -inf
  %820 = vmax.xlane.f32.xlu0 %v819
  %v821 = vpop.xlane.xlu0 %820
  %v822 = vsel %vm324, %v812, -inf
  %823 = vmax.xlane.f32.xlu0 %v822
  %v824 = vpop.xlane.xlu0 %823
  %v825 = vsub.f32 %v809, %v815
  %v826 = vsub.f32 %v810, %v818
  %v827 = vsub.f32 %v811, %v821
  %v828 = vsub.f32 %v812, %v824
  %v829 = vmul.f32 %v825, 1.442695
  %v830 = vpow.pop %v829
  %v831 = vmul.f32 %v826, 1.442695
  %v832 = vpow.pop %v831
  %v833 = vmul.f32 %v827, 1.442695
  %v834 = vpow.pop %v833
  %v835 = vmul.f32 %v828, 1.442695
  %v836 = vpow.pop %v835
  %v837 = vsel %vm324, %v830, 0.0
  %838 = vadd.xlane.f32.xlu0 %v837
  %v839 = vpop.xlane.xlu0 %838
  %v840 = vsel %vm324, %v832, 0.0
  %841 = vadd.xlane.f32.xlu0 %v840
  %v842 = vpop.xlane.xlu0 %841
  %v843 = vsel %vm324, %v834, 0.0
  %844 = vadd.xlane.f32.xlu0 %v843
  %v845 = vpop.xlane.xlu0 %844
  %v846 = vsel %vm324, %v836, 0.0
  %847 = vadd.xlane.f32.xlu0 %v846
  %v848 = vpop.xlane.xlu0 %847
  %v849 = vrcp.pop %v839
  %v850 = vrcp.pop %v842
  %v851 = vrcp.pop %v845
  %v852 = vrcp.pop %v848
  %v853 = vmul.f32 %v830, %v849
  %v854 = vmul.f32 %v832, %v850
  %v855 = vmul.f32 %v834, %v851
  %v856 = vmul.f32 %v836, %v852
  %v857 = vpack.c.bf16 %v854, %v853
  %v858 = vpack.c.bf16 %v856, %v855
  %859 = vrot.lane.b32.xlu0 %v217, 112
  %v860 = vpop.permute.xlu0 %859
  %v863 = vsel %vm324, %v857, 0
  %865 = vmatprep.subr.bf16.mxu0 0
  %866 = vmatpush1.bf16.msra.mxu0 0
  %867 = vmatprep.subr.bf16.mxu0 0
  %868 = vmatpush1.bf16.msra.mxu0 0
  %869 = vmatprep.subr.bf16.mxu0 0
  %870 = vmatpush1.bf16.msra.mxu0 0
  %871 = vmatprep.subr.bf16.mxu0 0
  %872 = vmatpush1.bf16.msra.mxu0 0
  %873 = vmatprep.subr.bf16.mxu0 0
  %874 = vmatpush1.bf16.msra.mxu0 0
  %875 = vmatprep.subr.bf16.mxu0 0
  %876 = vmatpush1.bf16.msra.mxu0 0
  %877 = vmatprep.subr.bf16.mxu0 0
  %878 = vmatpush1.bf16.msra.mxu0 0
  %879 = vmatprep.subr.bf16.mxu0 0
  %880 = vmatpush1.bf16.msra.mxu0 %v860
  %881 = vmatprep.subr.bf16.mxu0 0
  %882 = vmatpush2.bf16.msra.mxu0 0
  %883 = vmatprep.subr.bf16.mxu0 0
  %884 = vmatpush2.bf16.msra.mxu0 0
  %885 = vmatprep.subr.bf16.mxu0 0
  %886 = vmatpush2.bf16.msra.mxu0 0
  %887 = vmatprep.subr.bf16.mxu0 0
  %888 = vmatpush2.bf16.msra.mxu0 0
  %889 = vmatprep.subr.bf16.mxu0 0
  %890 = vmatpush2.bf16.msra.mxu0 0
  %891 = vmatprep.subr.bf16.mxu0 0
  %892 = vmatpush2.bf16.msra.mxu0 0
  %893 = vmatprep.subr.bf16.mxu0 0
  %894 = vmatpush2.bf16.msra.mxu0 0
  %895 = vmatprep.subr.bf16.mxu0 0
  %896 = vmatpush2.bf16.msra.mxu0 0
  %897 = vmatprep.mubr.bf16.mxu0 0
  %898 = vmatmul.mubr.bf16.gmra.mxu0 %v863
  %v899 = vpop.f32.mrf.mxu0
  %v900 = vadd.f32 0.0, %v899
  %v901 = vpop.f32.mrf.mxu0
  %v902 = vpop.f32.mrf.mxu0
  %v903 = vadd.f32 0.0, %v902
  %v904 = vpop.f32.mrf.mxu0
  %905 = vdwg.mxu0
  %906 = vrot.lane.b32.xlu0 %v218, 112
  %v907 = vpop.permute.xlu0 %906
  %v910 = vsel %vm324, %v858, 0
  %912 = vmatprep.subr.bf16.mxu0 0
  %913 = vmatpush1.bf16.msra.mxu0 0
  %914 = vmatprep.subr.bf16.mxu0 0
  %915 = vmatpush1.bf16.msra.mxu0 0
  %916 = vmatprep.subr.bf16.mxu0 0
  %917 = vmatpush1.bf16.msra.mxu0 0
  %918 = vmatprep.subr.bf16.mxu0 0
  %919 = vmatpush1.bf16.msra.mxu0 0
  %920 = vmatprep.subr.bf16.mxu0 0
  %921 = vmatpush1.bf16.msra.mxu0 0
  %922 = vmatprep.subr.bf16.mxu0 0
  %923 = vmatpush1.bf16.msra.mxu0 0
  %924 = vmatprep.subr.bf16.mxu0 0
  %925 = vmatpush1.bf16.msra.mxu0 0
  %926 = vmatprep.subr.bf16.mxu0 0
  %927 = vmatpush1.bf16.msra.mxu0 %v907
  %928 = vmatprep.subr.bf16.mxu0 0
  %929 = vmatpush2.bf16.msra.mxu0 0
  %930 = vmatprep.subr.bf16.mxu0 0
  %931 = vmatpush2.bf16.msra.mxu0 0
  %932 = vmatprep.subr.bf16.mxu0 0
  %933 = vmatpush2.bf16.msra.mxu0 0
  %934 = vmatprep.subr.bf16.mxu0 0
  %935 = vmatpush2.bf16.msra.mxu0 0
  %936 = vmatprep.subr.bf16.mxu0 0
  %937 = vmatpush2.bf16.msra.mxu0 0
  %938 = vmatprep.subr.bf16.mxu0 0
  %939 = vmatpush2.bf16.msra.mxu0 0
  %940 = vmatprep.subr.bf16.mxu0 0
  %941 = vmatpush2.bf16.msra.mxu0 0
  %942 = vmatprep.subr.bf16.mxu0 0
  %943 = vmatpush2.bf16.msra.mxu0 0
  %944 = vmatprep.mubr.bf16.mxu0 0
  %945 = vmatmul.mubr.bf16.gmra.mxu0 %v910
  %v946 = vpop.f32.mrf.mxu0
  %v947 = vadd.f32 0.0, %v946
  %v948 = vpop.f32.mrf.mxu0
  %v949 = vpop.f32.mrf.mxu0
  %v950 = vadd.f32 0.0, %v949
  %v951 = vpop.f32.mrf.mxu0
  %952 = vdwg.mxu0
  %953 = vrot.lane.b32.xlu0 %v215, 104
  %v954 = vpop.permute.xlu0 %953
  %955 = vrot.lane.b32.xlu0 %v215, 72
  %v956 = vpop.permute.xlu0 %955
  %v958 = vsel %vm222, %v954, 0
  %v961 = vsel %vm222, %v956, 0
  %963 = vmatprep.subr.bf16.mxu0 0
  %964 = vmatpush1.bf16.xpose.msra.mxu0 0
  %965 = vmatprep.subr.bf16.mxu0 0
  %966 = vmatpush1.bf16.xpose.msra.mxu0 0
  %967 = vmatprep.subr.bf16.mxu0 0
  %968 = vmatpush1.bf16.xpose.msra.mxu0 0
  %969 = vmatprep.subr.bf16.mxu0 0
  %970 = vmatpush1.bf16.xpose.msra.mxu0 0
  %971 = vmatprep.subr.bf16.mxu0 0
  %972 = vmatpush1.bf16.xpose.msra.mxu0 0
  %973 = vmatprep.subr.bf16.mxu0 0
  %974 = vmatpush1.bf16.xpose.msra.mxu0 0
  %975 = vmatprep.subr.bf16.mxu0 0
  %976 = vmatpush1.bf16.xpose.msra.mxu0 0
  %977 = vmatprep.subr.bf16.mxu0 0
  %978 = vmatpush1.bf16.xpose.msra.mxu0 %v961
  %979 = vmatprep.subr.bf16.mxu0 0
  %980 = vmatpush2.bf16.xpose.msra.mxu0 0
  %981 = vmatprep.subr.bf16.mxu0 0
  %982 = vmatpush2.bf16.xpose.msra.mxu0 0
  %983 = vmatprep.subr.bf16.mxu0 0
  %984 = vmatpush2.bf16.xpose.msra.mxu0 0
  %985 = vmatprep.subr.bf16.mxu0 0
  %986 = vmatpush2.bf16.xpose.msra.mxu0 0
  %987 = vmatprep.subr.bf16.mxu0 0
  %988 = vmatpush2.bf16.xpose.msra.mxu0 0
  %989 = vmatprep.subr.bf16.mxu0 0
  %990 = vmatpush2.bf16.xpose.msra.mxu0 0
  %991 = vmatprep.subr.bf16.mxu0 0
  %992 = vmatpush2.bf16.xpose.msra.mxu0 0
  %993 = vmatprep.subr.bf16.mxu0 0
  %994 = vmatpush2.bf16.xpose.msra.mxu0 0
  %995 = vmatprep.mubr.bf16.mxu0 0
  %996 = vmatmul.mubr.bf16.gmra.mxu0 %v958
  %v997 = vpop.f32.mrf.mxu0
  %v998 = vadd.f32 0.0, %v997
  %v999 = vpop.f32.mrf.mxu0
  %v1000 = vpop.f32.mrf.mxu0
  %v1001 = vadd.f32 0.0, %v1000
  %v1002 = vpop.f32.mrf.mxu0
  %1003 = vdwg.mxu0
  %1004 = vrot.lane.b32.xlu0 %v216, 104
  %v1005 = vpop.permute.xlu0 %1004
  %1006 = vrot.lane.b32.xlu0 %v216, 72
  %v1007 = vpop.permute.xlu0 %1006
  %v1009 = vsel %vm222, %v1005, 0
  %v1012 = vsel %vm222, %v1007, 0
  %1014 = vmatprep.subr.bf16.mxu0 0
  %1015 = vmatpush1.bf16.xpose.msra.mxu0 0
  %1016 = vmatprep.subr.bf16.mxu0 0
  %1017 = vmatpush1.bf16.xpose.msra.mxu0 0
  %1018 = vmatprep.subr.bf16.mxu0 0
  %1019 = vmatpush1.bf16.xpose.msra.mxu0 0
  %1020 = vmatprep.subr.bf16.mxu0 0
  %1021 = vmatpush1.bf16.xpose.msra.mxu0 0
  %1022 = vmatprep.subr.bf16.mxu0 0
  %1023 = vmatpush1.bf16.xpose.msra.mxu0 0
  %1024 = vmatprep.subr.bf16.mxu0 0
  %1025 = vmatpush1.bf16.xpose.msra.mxu0 0
  %1026 = vmatprep.subr.bf16.mxu0 0
  %1027 = vmatpush1.bf16.xpose.msra.mxu0 0
  %1028 = vmatprep.subr.bf16.mxu0 0
  %1029 = vmatpush1.bf16.xpose.msra.mxu0 %v1012
  %1030 = vmatprep.subr.bf16.mxu0 0
  %1031 = vmatpush2.bf16.xpose.msra.mxu0 0
  %1032 = vmatprep.subr.bf16.mxu0 0
  %1033 = vmatpush2.bf16.xpose.msra.mxu0 0
  %1034 = vmatprep.subr.bf16.mxu0 0
  %1035 = vmatpush2.bf16.xpose.msra.mxu0 0
  %1036 = vmatprep.subr.bf16.mxu0 0
  %1037 = vmatpush2.bf16.xpose.msra.mxu0 0
  %1038 = vmatprep.subr.bf16.mxu0 0
  %1039 = vmatpush2.bf16.xpose.msra.mxu0 0
  %1040 = vmatprep.subr.bf16.mxu0 0
  %1041 = vmatpush2.bf16.xpose.msra.mxu0 0
  %1042 = vmatprep.subr.bf16.mxu0 0
  %1043 = vmatpush2.bf16.xpose.msra.mxu0 0
  %1044 = vmatprep.subr.bf16.mxu0 0
  %1045 = vmatpush2.bf16.xpose.msra.mxu0 0
  %1046 = vmatprep.mubr.bf16.mxu0 0
  %1047 = vmatmul.mubr.bf16.gmra.mxu0 %v1009
  %v1048 = vpop.f32.mrf.mxu0
  %v1049 = vadd.f32 0.0, %v1048
  %v1050 = vpop.f32.mrf.mxu0
  %v1051 = vpop.f32.mrf.mxu0
  %v1052 = vadd.f32 0.0, %v1051
  %v1053 = vpop.f32.mrf.mxu0
  %1054 = vdwg.mxu0
  %v1055 = vmul.f32 %v998, 0.35355338
  %v1056 = vmul.f32 %v1001, 0.35355338
  %v1057 = vmul.f32 %v1049, 0.35355338
  %v1058 = vmul.f32 %v1052, 0.35355338
  %v1059 = vsel %vm324, %v1055, -inf
  %1060 = vmax.xlane.f32.xlu0 %v1059
  %v1061 = vpop.xlane.xlu0 %1060
  %v1062 = vsel %vm324, %v1056, -inf
  %1063 = vmax.xlane.f32.xlu0 %v1062
  %v1064 = vpop.xlane.xlu0 %1063
  %v1065 = vsel %vm324, %v1057, -inf
  %1066 = vmax.xlane.f32.xlu0 %v1065
  %v1067 = vpop.xlane.xlu0 %1066
  %v1068 = vsel %vm324, %v1058, -inf
  %1069 = vmax.xlane.f32.xlu0 %v1068
  %v1070 = vpop.xlane.xlu0 %1069
  %v1071 = vsub.f32 %v1055, %v1061
  %v1072 = vsub.f32 %v1056, %v1064
  %v1073 = vsub.f32 %v1057, %v1067
  %v1074 = vsub.f32 %v1058, %v1070
  %v1075 = vmul.f32 %v1071, 1.442695
  %v1076 = vpow.pop %v1075
  %v1077 = vmul.f32 %v1072, 1.442695
  %v1078 = vpow.pop %v1077
  %v1079 = vmul.f32 %v1073, 1.442695
  %v1080 = vpow.pop %v1079
  %v1081 = vmul.f32 %v1074, 1.442695
  %v1082 = vpow.pop %v1081
  %v1083 = vsel %vm324, %v1076, 0.0
  %1084 = vadd.xlane.f32.xlu0 %v1083
  %v1085 = vpop.xlane.xlu0 %1084
  %v1086 = vsel %vm324, %v1078, 0.0
  %1087 = vadd.xlane.f32.xlu0 %v1086
  %v1088 = vpop.xlane.xlu0 %1087
  %v1089 = vsel %vm324, %v1080, 0.0
  %1090 = vadd.xlane.f32.xlu0 %v1089
  %v1091 = vpop.xlane.xlu0 %1090
  %v1092 = vsel %vm324, %v1082, 0.0
  %1093 = vadd.xlane.f32.xlu0 %v1092
  %v1094 = vpop.xlane.xlu0 %1093
  %v1095 = vrcp.pop %v1085
  %v1096 = vrcp.pop %v1088
  %v1097 = vrcp.pop %v1091
  %v1098 = vrcp.pop %v1094
  %v1099 = vmul.f32 %v1076, %v1095
  %v1100 = vmul.f32 %v1078, %v1096
  %v1101 = vmul.f32 %v1080, %v1097
  %v1102 = vmul.f32 %v1082, %v1098
  %v1103 = vpack.c.bf16 %v1100, %v1099
  %v1104 = vpack.c.bf16 %v1102, %v1101
  %1105 = vrot.lane.b32.xlu0 %v217, 104
  %v1106 = vpop.permute.xlu0 %1105
  %v1109 = vsel %vm324, %v1103, 0
  %1111 = vmatprep.subr.bf16.mxu0 0
  %1112 = vmatpush1.bf16.msra.mxu0 0
  %1113 = vmatprep.subr.bf16.mxu0 0
  %1114 = vmatpush1.bf16.msra.mxu0 0
  %1115 = vmatprep.subr.bf16.mxu0 0
  %1116 = vmatpush1.bf16.msra.mxu0 0
  %1117 = vmatprep.subr.bf16.mxu0 0
  %1118 = vmatpush1.bf16.msra.mxu0 0
  %1119 = vmatprep.subr.bf16.mxu0 0
  %1120 = vmatpush1.bf16.msra.mxu0 0
  %1121 = vmatprep.subr.bf16.mxu0 0
  %1122 = vmatpush1.bf16.msra.mxu0 0
  %1123 = vmatprep.subr.bf16.mxu0 0
  %1124 = vmatpush1.bf16.msra.mxu0 0
  %1125 = vmatprep.subr.bf16.mxu0 0
  %1126 = vmatpush1.bf16.msra.mxu0 %v1106
  %1127 = vmatprep.subr.bf16.mxu0 0
  %1128 = vmatpush2.bf16.msra.mxu0 0
  %1129 = vmatprep.subr.bf16.mxu0 0
  %1130 = vmatpush2.bf16.msra.mxu0 0
  %1131 = vmatprep.subr.bf16.mxu0 0
  %1132 = vmatpush2.bf16.msra.mxu0 0
  %1133 = vmatprep.subr.bf16.mxu0 0
  %1134 = vmatpush2.bf16.msra.mxu0 0
  %1135 = vmatprep.subr.bf16.mxu0 0
  %1136 = vmatpush2.bf16.msra.mxu0 0
  %1137 = vmatprep.subr.bf16.mxu0 0
  %1138 = vmatpush2.bf16.msra.mxu0 0
  %1139 = vmatprep.subr.bf16.mxu0 0
  %1140 = vmatpush2.bf16.msra.mxu0 0
  %1141 = vmatprep.subr.bf16.mxu0 0
  %1142 = vmatpush2.bf16.msra.mxu0 0
  %1143 = vmatprep.mubr.bf16.mxu0 0
  %1144 = vmatmul.mubr.bf16.gmra.mxu0 %v1109
  %v1145 = vpop.f32.mrf.mxu0
  %v1146 = vadd.f32 0.0, %v1145
  %v1147 = vpop.f32.mrf.mxu0
  %v1148 = vpop.f32.mrf.mxu0
  %v1149 = vadd.f32 0.0, %v1148
  %v1150 = vpop.f32.mrf.mxu0
  %1151 = vdwg.mxu0
  %1152 = vrot.lane.b32.xlu0 %v218, 104
  %v1153 = vpop.permute.xlu0 %1152
  %v1156 = vsel %vm324, %v1104, 0
  %1158 = vmatprep.subr.bf16.mxu0 0
  %1159 = vmatpush1.bf16.msra.mxu0 0
  %1160 = vmatprep.subr.bf16.mxu0 0
  %1161 = vmatpush1.bf16.msra.mxu0 0
  %1162 = vmatprep.subr.bf16.mxu0 0
  %1163 = vmatpush1.bf16.msra.mxu0 0
  %1164 = vmatprep.subr.bf16.mxu0 0
  %1165 = vmatpush1.bf16.msra.mxu0 0
  %1166 = vmatprep.subr.bf16.mxu0 0
  %1167 = vmatpush1.bf16.msra.mxu0 0
  %1168 = vmatprep.subr.bf16.mxu0 0
  %1169 = vmatpush1.bf16.msra.mxu0 0
  %1170 = vmatprep.subr.bf16.mxu0 0
  %1171 = vmatpush1.bf16.msra.mxu0 0
  %1172 = vmatprep.subr.bf16.mxu0 0
  %1173 = vmatpush1.bf16.msra.mxu0 %v1153
  %1174 = vmatprep.subr.bf16.mxu0 0
  %1175 = vmatpush2.bf16.msra.mxu0 0
  %1176 = vmatprep.subr.bf16.mxu0 0
  %1177 = vmatpush2.bf16.msra.mxu0 0
  %1178 = vmatprep.subr.bf16.mxu0 0
  %1179 = vmatpush2.bf16.msra.mxu0 0
  %1180 = vmatprep.subr.bf16.mxu0 0
  %1181 = vmatpush2.bf16.msra.mxu0 0
  %1182 = vmatprep.subr.bf16.mxu0 0
  %1183 = vmatpush2.bf16.msra.mxu0 0
  %1184 = vmatprep.subr.bf16.mxu0 0
  %1185 = vmatpush2.bf16.msra.mxu0 0
  %1186 = vmatprep.subr.bf16.mxu0 0
  %1187 = vmatpush2.bf16.msra.mxu0 0
  %1188 = vmatprep.subr.bf16.mxu0 0
  %1189 = vmatpush2.bf16.msra.mxu0 0
  %1190 = vmatprep.mubr.bf16.mxu0 0
  %1191 = vmatmul.mubr.bf16.gmra.mxu0 %v1156
  %v1192 = vpop.f32.mrf.mxu0
  %v1193 = vadd.f32 0.0, %v1192
  %v1194 = vpop.f32.mrf.mxu0
  %v1195 = vpop.f32.mrf.mxu0
  %v1196 = vadd.f32 0.0, %v1195
  %v1197 = vpop.f32.mrf.mxu0
  %1198 = vdwg.mxu0
  %1203 = vrot.lane.b32.xlu0 %v653, 8
  %v1204 = vpop.permute.xlu0 %1203
  %1205 = vrot.lane.b32.xlu0 %v656, 8
  %v1206 = vpop.permute.xlu0 %1205
  %1207 = vrot.lane.b32.xlu0 %v701, 8
  %v1208 = vpop.permute.xlu0 %1207
  %1209 = vrot.lane.b32.xlu0 %v704, 8
  %v1210 = vpop.permute.xlu0 %1209
  %1219 = vrot.lane.b32.xlu0 %v900, 16
  %v1220 = vpop.permute.xlu0 %1219
  %1221 = vrot.lane.b32.xlu0 %v903, 16
  %v1222 = vpop.permute.xlu0 %1221
  %1223 = vrot.lane.b32.xlu0 %v947, 16
  %v1224 = vpop.permute.xlu0 %1223
  %1225 = vrot.lane.b32.xlu0 %v950, 16
  %v1226 = vpop.permute.xlu0 %1225
  %1235 = vrot.lane.b32.xlu0 %v1146, 24
  %v1236 = vpop.permute.xlu0 %1235
  %1237 = vrot.lane.b32.xlu0 %v1149, 24
  %v1238 = vpop.permute.xlu0 %1237
  %1239 = vrot.lane.b32.xlu0 %v1193, 24
  %v1240 = vpop.permute.xlu0 %1239
  %1241 = vrot.lane.b32.xlu0 %v1196, 24
  %v1242 = vpop.permute.xlu0 %1241
  %v1247 = vsel %vm222, %v409, %v1204
  %v1248 = vsel %vm222, %v412, %v1206
  %v1249 = vsel %vm222, %v453, %v1208
  %v1250 = vsel %vm222, %v456, %v1210
  %v1251 = vsel %vm324, %v1247, %v1220
  %v1252 = vsel %vm324, %v1248, %v1222
  %v1253 = vsel %vm324, %v1249, %v1224
  %v1254 = vsel %vm324, %v1250, %v1226
  %vm1255 = vcmask 195584
  %v1256 = vsel %vm1255, %v1251, %v1236
  %v1257 = vsel %vm1255, %v1252, %v1238
  %v1258 = vsel %vm1255, %v1253, %v1240
  %v1259 = vsel %vm1255, %v1254, %v1242
  %v1260 = vpack.c.bf16 %v1257, %v1256
  %v1261 = vpack.c.bf16 %v1259, %v1258
  %v1262 = vlaneseq
  %v1263 = vshrl.u32 %v1262, 7
  %v1264 = vsub.s32 3, %v1263
  %v1265 = vrot.slane %v62, %v1264
  %v1270 = vunpack.c.l.b16 %v46
  %v1271 = vunpack.c.l.b16 %v47
  %v1272 = vunpack.c.l.b16 %v48
  %v1273 = vunpack.c.l.b16 %v49
  %v1274 = vpack.c.b16 %v1271, %v1270
  %v1275 = vpack.c.b16 %v1273, %v1272
  %v1279 = vsel %vm86, %v1260, 0
  %v1282 = vsel %vm86, %v1261, 0
  %1284 = vmatprep.subr.bf16.mxu0 0
  %1285 = vmatpush1.bf16.msra.mxu0 0
  %1286 = vmatprep.subr.bf16.mxu0 0
  %1287 = vmatpush1.bf16.msra.mxu0 0
  %1288 = vmatprep.subr.bf16.mxu0 0
  %1289 = vmatpush1.bf16.msra.mxu0 0
  %1290 = vmatprep.subr.bf16.mxu0 0
  %1291 = vmatpush1.bf16.msra.mxu0 0
  %1292 = vmatprep.subr.bf16.mxu0 0
  %1293 = vmatpush1.bf16.msra.mxu0 0
  %1294 = vmatprep.subr.bf16.mxu0 0
  %1295 = vmatpush1.bf16.msra.mxu0 0
  %1296 = vmatprep.subr.bf16.mxu0 0
  %1297 = vmatpush1.bf16.msra.mxu0 %v1275
  %1298 = vmatprep.subr.bf16.mxu0 0
  %1299 = vmatpush1.bf16.msra.mxu0 %v1274
  %1300 = vmatprep.subr.bf16.mxu0 0
  %1301 = vmatpush2.bf16.msra.mxu0 0
  %1302 = vmatprep.subr.bf16.mxu0 0
  %1303 = vmatpush2.bf16.msra.mxu0 0
  %1304 = vmatprep.subr.bf16.mxu0 0
  %1305 = vmatpush2.bf16.msra.mxu0 0
  %1306 = vmatprep.subr.bf16.mxu0 0
  %1307 = vmatpush2.bf16.msra.mxu0 0
  %1308 = vmatprep.subr.bf16.mxu0 0
  %1309 = vmatpush2.bf16.msra.mxu0 0
  %1310 = vmatprep.subr.bf16.mxu0 0
  %1311 = vmatpush2.bf16.msra.mxu0 0
  %1312 = vmatprep.subr.bf16.mxu0 0
  %1313 = vmatpush2.bf16.msra.mxu0 0
  %1314 = vmatprep.subr.bf16.mxu0 0
  %1315 = vmatpush2.bf16.msra.mxu0 0
  %1316 = vmatprep.mubr.bf16.mxu0 0
  %1317 = vmatmul.mubr.bf16.gmra.mxu0 %v1279
  %v1318 = vpop.f32.mrf.mxu0
  %v1319 = vadd.f32 %v1265, %v1318
  %v1320 = vpop.f32.mrf.mxu0
  %v1321 = vpop.f32.mrf.mxu0
  %v1322 = vadd.f32 %v1265, %v1321
  %v1323 = vpop.f32.mrf.mxu0
  %1324 = vmatprep.mubr.bf16.mxu0 0
  %1325 = vmatmul.mubr.bf16.gmra.mxu0 %v1282
  %v1326 = vpop.f32.mrf.mxu0
  %v1327 = vadd.f32 %v1265, %v1326
  %v1328 = vpop.f32.mrf.mxu0
  %v1329 = vpop.f32.mrf.mxu0
  %v1330 = vadd.f32 %v1265, %v1329
  %v1331 = vpop.f32.mrf.mxu0
  %1332 = vdwg.mxu0
  %v1333 = vadd.f32 %v30, %v1319
  %v1334 = vadd.f32 %v31, %v1322
  %v1335 = vadd.f32 %v32, %v1327
  %v1336 = vadd.f32 %v33, %v1330
  %v1337 = vsel %vm86, %v1333, 0.0
  %1338 = vadd.xlane.f32.xlu0 %v1337
  %v1339 = vpop.xlane.xlu0 %1338
  %v1340 = vsel %vm86, %v1334, 0.0
  %1341 = vadd.xlane.f32.xlu0 %v1340
  %v1342 = vpop.xlane.xlu0 %1341
  %v1343 = vsel %vm86, %v1335, 0.0
  %1344 = vadd.xlane.f32.xlu0 %v1343
  %v1345 = vpop.xlane.xlu0 %1344
  %v1346 = vsel %vm86, %v1336, 0.0
  %1347 = vadd.xlane.f32.xlu0 %v1346
  %v1348 = vpop.xlane.xlu0 %1347
  %v1349 = vrcp.pop 32.0
  %v1350 = vmul.f32 %v1339, %v1349
  %v1351 = vmul.f32 %v1342, %v1349
  %v1352 = vmul.f32 %v1345, %v1349
  %v1353 = vmul.f32 %v1348, %v1349
  %v1354 = vsub.f32 %v1333, %v1350
  %v1355 = vsub.f32 %v1334, %v1351
  %v1356 = vsub.f32 %v1335, %v1352
  %v1357 = vsub.f32 %v1336, %v1353
  %v1358 = vmul.f32 %v1354, %v1354
  %v1359 = vmul.f32 %v1355, %v1355
  %v1360 = vmul.f32 %v1356, %v1356
  %v1361 = vmul.f32 %v1357, %v1357
  %v1362 = vsel %vm86, %v1358, 0.0
  %1363 = vadd.xlane.f32.xlu0 %v1362
  %v1364 = vpop.xlane.xlu0 %1363
  %v1365 = vsel %vm86, %v1359, 0.0
  %1366 = vadd.xlane.f32.xlu0 %v1365
  %v1367 = vpop.xlane.xlu0 %1366
  %v1368 = vsel %vm86, %v1360, 0.0
  %1369 = vadd.xlane.f32.xlu0 %v1368
  %v1370 = vpop.xlane.xlu0 %1369
  %v1371 = vsel %vm86, %v1361, 0.0
  %1372 = vadd.xlane.f32.xlu0 %v1371
  %v1373 = vpop.xlane.xlu0 %1372
  %v1374 = vmul.f32 %v1364, %v1349
  %v1375 = vmul.f32 %v1367, %v1349
  %v1376 = vmul.f32 %v1370, %v1349
  %v1377 = vmul.f32 %v1373, %v1349
  %v1378 = vadd.f32 %v1374, 1e-05
  %v1379 = vadd.f32 %v1375, 1e-05
  %v1380 = vadd.f32 %v1376, 1e-05
  %v1381 = vadd.f32 %v1377, 1e-05
  %v1382 = vrsqrt.pop %v1378
  %v1383 = vrsqrt.pop %v1379
  %v1384 = vrsqrt.pop %v1380
  %v1385 = vrsqrt.pop %v1381
  %v1386 = vmul.f32 %v1354, %v1382
  %v1387 = vmul.f32 %v1355, %v1383
  %v1388 = vmul.f32 %v1356, %v1384
  %v1389 = vmul.f32 %v1357, %v1385
  %v1390 = vlaneseq
  %v1391 = vshrl.u32 %v1390, 7
  %v1392 = vsub.s32 5, %v1391
  %v1393 = vrot.slane %v62, %v1392
  %v1394 = vmul.f32 %v1386, %v1393
  %v1395 = vmul.f32 %v1387, %v1393
  %v1396 = vmul.f32 %v1388, %v1393
  %v1397 = vmul.f32 %v1389, %v1393
  %v1398 = vlaneseq
  %v1399 = vshrl.u32 %v1398, 7
  %v1400 = vsub.s32 6, %v1399
  %v1401 = vrot.slane %v62, %v1400
  %v1402 = vadd.f32 %v1394, %v1401
  %v1403 = vadd.f32 %v1395, %v1401
  %v1404 = vadd.f32 %v1396, %v1401
  %v1405 = vadd.f32 %v1397, %v1401
  %v1406 = vpack.c.bf16 %v1403, %v1402
  %v1407 = vpack.c.bf16 %v1405, %v1404
  %v1408 = vlaneseq
  %v1409 = vshrl.u32 %v1408, 7
  %v1410 = vsub.s32 1, %v1409
  %v1411 = vrot.slane %v62, %v1410
  %v1416 = vunpack.c.l.b16 %v50
  %v1417 = vunpack.c.l.b16 %v51
  %v1418 = vunpack.c.l.b16 %v52
  %v1419 = vunpack.c.l.b16 %v53
  %v1420 = vpack.c.b16 %v1417, %v1416
  %v1421 = vpack.c.b16 %v1419, %v1418
  %v1425 = vsel %vm86, %v1406, 0
  %v1428 = vsel %vm86, %v1407, 0
  %1430 = vmatprep.subr.bf16.mxu0 0
  %1431 = vmatpush1.bf16.msra.mxu0 0
  %1432 = vmatprep.subr.bf16.mxu0 0
  %1433 = vmatpush1.bf16.msra.mxu0 0
  %1434 = vmatprep.subr.bf16.mxu0 0
  %1435 = vmatpush1.bf16.msra.mxu0 0
  %1436 = vmatprep.subr.bf16.mxu0 0
  %1437 = vmatpush1.bf16.msra.mxu0 0
  %1438 = vmatprep.subr.bf16.mxu0 0
  %1439 = vmatpush1.bf16.msra.mxu0 0
  %1440 = vmatprep.subr.bf16.mxu0 0
  %1441 = vmatpush1.bf16.msra.mxu0 0
  %1442 = vmatprep.subr.bf16.mxu0 0
  %1443 = vmatpush1.bf16.msra.mxu0 %v1421
  %1444 = vmatprep.subr.bf16.mxu0 0
  %1445 = vmatpush1.bf16.msra.mxu0 %v1420
  %1446 = vmatprep.subr.bf16.mxu0 0
  %1447 = vmatpush2.bf16.msra.mxu0 0
  %1448 = vmatprep.subr.bf16.mxu0 0
  %1449 = vmatpush2.bf16.msra.mxu0 0
  %1450 = vmatprep.subr.bf16.mxu0 0
  %1451 = vmatpush2.bf16.msra.mxu0 0
  %1452 = vmatprep.subr.bf16.mxu0 0
  %1453 = vmatpush2.bf16.msra.mxu0 0
  %1454 = vmatprep.subr.bf16.mxu0 0
  %1455 = vmatpush2.bf16.msra.mxu0 0
  %1456 = vmatprep.subr.bf16.mxu0 0
  %1457 = vmatpush2.bf16.msra.mxu0 0
  %1458 = vmatprep.subr.bf16.mxu0 0
  %1459 = vmatpush2.bf16.msra.mxu0 0
  %1460 = vmatprep.subr.bf16.mxu0 0
  %1461 = vmatpush2.bf16.msra.mxu0 0
  %1462 = vmatprep.mubr.bf16.mxu0 0
  %1463 = vmatmul.mubr.bf16.gmra.mxu0 %v1425
  %v1464 = vpop.f32.mrf.mxu0
  %v1465 = vadd.f32 %v1411, %v1464
  %v1466 = vpop.f32.mrf.mxu0
  %v1467 = vpop.f32.mrf.mxu0
  %v1468 = vadd.f32 %v1411, %v1467
  %v1469 = vpop.f32.mrf.mxu0
  %1470 = vmatprep.mubr.bf16.mxu0 0
  %1471 = vmatmul.mubr.bf16.gmra.mxu0 %v1428
  %v1472 = vpop.f32.mrf.mxu0
  %v1473 = vadd.f32 %v1411, %v1472
  %v1474 = vpop.f32.mrf.mxu0
  %v1475 = vpop.f32.mrf.mxu0
  %v1476 = vadd.f32 %v1411, %v1475
  %v1477 = vpop.f32.mrf.mxu0
  %1478 = vdwg.mxu0
  %v1479 = vmax.f32 %v1465, 0.0
  %v1480 = vmax.f32 %v1468, 0.0
  %v1481 = vmax.f32 %v1473, 0.0
  %v1482 = vmax.f32 %v1476, 0.0
  %v1483 = vpack.c.bf16 %v1480, %v1479
  %v1484 = vpack.c.bf16 %v1482, %v1481
  %v1485 = vlaneseq
  %v1486 = vshrl.u32 %v1485, 7
  %v1487 = vsub.s32 4, %v1486
  %v1488 = vrot.slane %v62, %v1487
  %v1497 = vunpack.c.l.b16 %v54
  %v1498 = vunpack.c.l.b16 %v55
  %v1499 = vunpack.c.l.b16 %v56
  %v1500 = vunpack.c.l.b16 %v57
  %v1501 = vunpack.c.l.b16 %v58
  %v1502 = vunpack.c.l.b16 %v59
  %v1503 = vunpack.c.l.b16 %v60
  %v1504 = vunpack.c.l.b16 %v61
  %v1505 = vpack.c.b16 %v1498, %v1497
  %v1506 = vpack.c.b16 %v1500, %v1499
  %v1507 = vpack.c.b16 %v1502, %v1501
  %v1508 = vpack.c.b16 %v1504, %v1503
  %vm1513 = vcmask 523264
  %v1515 = vsel %vm1513, %v1483, 0
  %v1518 = vsel %vm1513, %v1484, 0
  %1520 = vmatprep.subr.bf16.mxu0 0
  %1521 = vmatpush1.bf16.msra.mxu0 0
  %1522 = vmatprep.subr.bf16.mxu0 0
  %1523 = vmatpush1.bf16.msra.mxu0 0
  %1524 = vmatprep.subr.bf16.mxu0 0
  %1525 = vmatpush1.bf16.msra.mxu0 0
  %1526 = vmatprep.subr.bf16.mxu0 0
  %1527 = vmatpush1.bf16.msra.mxu0 0
  %1528 = vmatprep.subr.bf16.mxu0 0
  %1529 = vmatpush1.bf16.msra.mxu0 %v1508
  %1530 = vmatprep.subr.bf16.mxu0 0
  %1531 = vmatpush1.bf16.msra.mxu0 %v1507
  %1532 = vmatprep.subr.bf16.mxu0 0
  %1533 = vmatpush1.bf16.msra.mxu0 %v1506
  %1534 = vmatprep.subr.bf16.mxu0 0
  %1535 = vmatpush1.bf16.msra.mxu0 %v1505
  %1536 = vmatprep.subr.bf16.mxu0 0
  %1537 = vmatpush2.bf16.msra.mxu0 0
  %1538 = vmatprep.subr.bf16.mxu0 0
  %1539 = vmatpush2.bf16.msra.mxu0 0
  %1540 = vmatprep.subr.bf16.mxu0 0
  %1541 = vmatpush2.bf16.msra.mxu0 0
  %1542 = vmatprep.subr.bf16.mxu0 0
  %1543 = vmatpush2.bf16.msra.mxu0 0
  %1544 = vmatprep.subr.bf16.mxu0 0
  %1545 = vmatpush2.bf16.msra.mxu0 0
  %1546 = vmatprep.subr.bf16.mxu0 0
  %1547 = vmatpush2.bf16.msra.mxu0 0
  %1548 = vmatprep.subr.bf16.mxu0 0
  %1549 = vmatpush2.bf16.msra.mxu0 0
  %1550 = vmatprep.subr.bf16.mxu0 0
  %1551 = vmatpush2.bf16.msra.mxu0 0
  %1552 = vmatprep.mubr.bf16.mxu0 0
  %1553 = vmatmul.mubr.bf16.gmra.mxu0 %v1515
  %v1554 = vpop.f32.mrf.mxu0
  %v1555 = vadd.f32 %v1488, %v1554
  %v1556 = vpop.f32.mrf.mxu0
  %v1557 = vpop.f32.mrf.mxu0
  %v1558 = vadd.f32 %v1488, %v1557
  %v1559 = vpop.f32.mrf.mxu0
  %1560 = vmatprep.mubr.bf16.mxu0 0
  %1561 = vmatmul.mubr.bf16.gmra.mxu0 %v1518
  %v1562 = vpop.f32.mrf.mxu0
  %v1563 = vadd.f32 %v1488, %v1562
  %v1564 = vpop.f32.mrf.mxu0
  %v1565 = vpop.f32.mrf.mxu0
  %v1566 = vadd.f32 %v1488, %v1565
  %v1567 = vpop.f32.mrf.mxu0
  %1568 = vdwg.mxu0
  %v1569 = vadd.f32 %v1402, %v1555
  %v1570 = vadd.f32 %v1403, %v1558
  %v1571 = vadd.f32 %v1404, %v1563
  %v1572 = vadd.f32 %v1405, %v1566
  %v1573 = vsel %vm86, %v1569, 0.0
  %1574 = vadd.xlane.f32.xlu0 %v1573
  %v1575 = vpop.xlane.xlu0 %1574
  %v1576 = vsel %vm86, %v1570, 0.0
  %1577 = vadd.xlane.f32.xlu0 %v1576
  %v1578 = vpop.xlane.xlu0 %1577
  %v1579 = vsel %vm86, %v1571, 0.0
  %1580 = vadd.xlane.f32.xlu0 %v1579
  %v1581 = vpop.xlane.xlu0 %1580
  %v1582 = vsel %vm86, %v1572, 0.0
  %1583 = vadd.xlane.f32.xlu0 %v1582
  %v1584 = vpop.xlane.xlu0 %1583
  %v1585 = vmul.f32 %v1575, %v1349
  %v1586 = vmul.f32 %v1578, %v1349
  %v1587 = vmul.f32 %v1581, %v1349
  %v1588 = vmul.f32 %v1584, %v1349
  %v1589 = vsub.f32 %v1569, %v1585
  %v1590 = vsub.f32 %v1570, %v1586
  %v1591 = vsub.f32 %v1571, %v1587
  %v1592 = vsub.f32 %v1572, %v1588
  %v1593 = vmul.f32 %v1589, %v1589
  %v1594 = vmul.f32 %v1590, %v1590
  %v1595 = vmul.f32 %v1591, %v1591
  %v1596 = vmul.f32 %v1592, %v1592
  %v1597 = vsel %vm86, %v1593, 0.0
  %1598 = vadd.xlane.f32.xlu0 %v1597
  %v1599 = vpop.xlane.xlu0 %1598
  %v1600 = vsel %vm86, %v1594, 0.0
  %1601 = vadd.xlane.f32.xlu0 %v1600
  %v1602 = vpop.xlane.xlu0 %1601
  %v1603 = vsel %vm86, %v1595, 0.0
  %1604 = vadd.xlane.f32.xlu0 %v1603
  %v1605 = vpop.xlane.xlu0 %1604
  %v1606 = vsel %vm86, %v1596, 0.0
  %1607 = vadd.xlane.f32.xlu0 %v1606
  %v1608 = vpop.xlane.xlu0 %1607
  %v1609 = vmul.f32 %v1599, %v1349
  %v1610 = vmul.f32 %v1602, %v1349
  %v1611 = vmul.f32 %v1605, %v1349
  %v1612 = vmul.f32 %v1608, %v1349
  %v1613 = vadd.f32 %v1609, 1e-05
  %v1614 = vadd.f32 %v1610, 1e-05
  %v1615 = vadd.f32 %v1611, 1e-05
  %v1616 = vadd.f32 %v1612, 1e-05
  %v1617 = vrsqrt.pop %v1613
  %v1618 = vrsqrt.pop %v1614
  %v1619 = vrsqrt.pop %v1615
  %v1620 = vrsqrt.pop %v1616
  %v1621 = vmul.f32 %v1589, %v1617
  %v1622 = vmul.f32 %v1590, %v1618
  %v1623 = vmul.f32 %v1591, %v1619
  %v1624 = vmul.f32 %v1592, %v1620
  %v1625 = vlaneseq
  %v1626 = vshrl.u32 %v1625, 7
  %v1627 = vsub.s32 7, %v1626
  %v1628 = vrot.slane %v62, %v1627
  %v1629 = vmul.f32 %v1621, %v1628
  %v1630 = vmul.f32 %v1622, %v1628
  %v1631 = vmul.f32 %v1623, %v1628
  %v1632 = vmul.f32 %v1624, %v1628
  %v1633 = vlaneseq
  %v1634 = vshrl.u32 %v1633, 7
  %v1635 = vsub.s32 0, %v1634
  %v1636 = vrot.slane %v63, %v1635
  %v1637 = vadd.f32 %v1629, %v1636
  %v1638 = vadd.f32 %v1630, %v1636
  %v1639 = vadd.f32 %v1631, %v1636
  %v1640 = vadd.f32 %v1632, %v1636
  %s1641 = scalar_lea.vmem %s2, 16
  %v1642 = vld [vmem:[%s1641] sm:$0xf]
  %v1643 = vld [vmem:[%s1641 + $0x4] sm:$0xf]
  %v1644 = vld [vmem:[%s1641 + $0x8] sm:$0xf]
  %v1645 = vld [vmem:[%s1641 + $0xc] sm:$0xf]
  %s1646 = scalar_lea.vmem %s3, 16
  %v1647 = vld [vmem:[%s1646] sm:$0xf]
  %v1648 = vld [vmem:[%s1646 + $0x4] sm:$0xf]
  %v1649 = vld [vmem:[%s1646 + $0x8] sm:$0xf]
  %v1650 = vld [vmem:[%s1646 + $0xc] sm:$0xf]
  %s1651 = scalar_lea.vmem %s4, 16
  %v1652 = vld [vmem:[%s1651] sm:$0xf]
  %v1653 = vld [vmem:[%s1651 + $0x4] sm:$0xf]
  %v1654 = vld [vmem:[%s1651 + $0x8] sm:$0xf]
  %v1655 = vld [vmem:[%s1651 + $0xc] sm:$0xf]
  %s1656 = scalar_lea.vmem %s5, 16
  %v1657 = vld [vmem:[%s1656] sm:$0xf]
  %v1658 = vld [vmem:[%s1656 + $0x4] sm:$0xf]
  %v1659 = vld [vmem:[%s1656 + $0x8] sm:$0xf]
  %v1660 = vld [vmem:[%s1656 + $0xc] sm:$0xf]
  %s1661 = scalar_lea.vmem %s6, 32
  %v1662 = vld [vmem:[%s1661] sm:$0xf]
  %v1663 = vld [vmem:[%s1661 + $0x4] sm:$0xf]
  %v1664 = vld [vmem:[%s1661 + $0x8] sm:$0xf]
  %v1665 = vld [vmem:[%s1661 + $0xc] sm:$0xf]
  %v1666 = vld [vmem:[%s1661 + $0x10] sm:$0xf]
  %v1667 = vld [vmem:[%s1661 + $0x14] sm:$0xf]
  %v1668 = vld [vmem:[%s1661 + $0x18] sm:$0xf]
  %v1669 = vld [vmem:[%s1661 + $0x1c] sm:$0xf]
  %s1670 = scalar_lea.vmem %s7, 16
  %v1671 = vld [vmem:[%s1670] sm:$0xff]
  %v1672 = vld [vmem:[%s1670 + $0x8] sm:$0x1]
  %v1673 = vadd.f32 %v1637, %v34
  %v1674 = vadd.f32 %v1638, %v35
  %v1675 = vadd.f32 %v1639, %v36
  %v1676 = vadd.f32 %v1640, %v37
  %v1677 = vpack.c.bf16 %v1674, %v1673
  %v1678 = vpack.c.bf16 %v1676, %v1675
  %v1679 = vlaneseq
  %v1680 = vshrl.u32 %v1679, 7
  %v1681 = vsub.s32 0, %v1680
  %v1682 = vrot.slane %v1671, %v1681
  %v1687 = vunpack.c.l.b16 %v1642
  %v1688 = vunpack.c.l.b16 %v1643
  %v1689 = vunpack.c.l.b16 %v1644
  %v1690 = vunpack.c.l.b16 %v1645
  %v1691 = vpack.c.b16 %v1688, %v1687
  %v1692 = vpack.c.b16 %v1690, %v1689
  %v1696 = vsel %vm86, %v1677, 0
  %v1699 = vsel %vm86, %v1678, 0
  %1701 = vmatprep.subr.bf16.mxu0 0
  %1702 = vmatpush1.bf16.msra.mxu0 0
  %1703 = vmatprep.subr.bf16.mxu0 0
  %1704 = vmatpush1.bf16.msra.mxu0 0
  %1705 = vmatprep.subr.bf16.mxu0 0
  %1706 = vmatpush1.bf16.msra.mxu0 0
  %1707 = vmatprep.subr.bf16.mxu0 0
  %1708 = vmatpush1.bf16.msra.mxu0 0
  %1709 = vmatprep.subr.bf16.mxu0 0
  %1710 = vmatpush1.bf16.msra.mxu0 0
  %1711 = vmatprep.subr.bf16.mxu0 0
  %1712 = vmatpush1.bf16.msra.mxu0 0
  %1713 = vmatprep.subr.bf16.mxu0 0
  %1714 = vmatpush1.bf16.msra.mxu0 %v1692
  %1715 = vmatprep.subr.bf16.mxu0 0
  %1716 = vmatpush1.bf16.msra.mxu0 %v1691
  %1717 = vmatprep.subr.bf16.mxu0 0
  %1718 = vmatpush2.bf16.msra.mxu0 0
  %1719 = vmatprep.subr.bf16.mxu0 0
  %1720 = vmatpush2.bf16.msra.mxu0 0
  %1721 = vmatprep.subr.bf16.mxu0 0
  %1722 = vmatpush2.bf16.msra.mxu0 0
  %1723 = vmatprep.subr.bf16.mxu0 0
  %1724 = vmatpush2.bf16.msra.mxu0 0
  %1725 = vmatprep.subr.bf16.mxu0 0
  %1726 = vmatpush2.bf16.msra.mxu0 0
  %1727 = vmatprep.subr.bf16.mxu0 0
  %1728 = vmatpush2.bf16.msra.mxu0 0
  %1729 = vmatprep.subr.bf16.mxu0 0
  %1730 = vmatpush2.bf16.msra.mxu0 0
  %1731 = vmatprep.subr.bf16.mxu0 0
  %1732 = vmatpush2.bf16.msra.mxu0 0
  %1733 = vmatprep.mubr.bf16.mxu0 0
  %1734 = vmatmul.mubr.bf16.gmra.mxu0 %v1696
  %v1735 = vpop.f32.mrf.mxu0
  %v1736 = vadd.f32 %v1682, %v1735
  %v1737 = vpop.f32.mrf.mxu0
  %v1738 = vpop.f32.mrf.mxu0
  %v1739 = vadd.f32 %v1682, %v1738
  %v1740 = vpop.f32.mrf.mxu0
  %1741 = vmatprep.mubr.bf16.mxu0 0
  %1742 = vmatmul.mubr.bf16.gmra.mxu0 %v1699
  %v1743 = vpop.f32.mrf.mxu0
  %v1744 = vadd.f32 %v1682, %v1743
  %v1745 = vpop.f32.mrf.mxu0
  %v1746 = vpop.f32.mrf.mxu0
  %v1747 = vadd.f32 %v1682, %v1746
  %v1748 = vpop.f32.mrf.mxu0
  %1749 = vdwg.mxu0
  %v1750 = vpack.c.bf16 %v1638, %v1637
  %v1751 = vpack.c.bf16 %v1640, %v1639
  %v1752 = vlaneseq
  %v1753 = vshrl.u32 %v1752, 7
  %v1754 = vsub.s32 2, %v1753
  %v1755 = vrot.slane %v1671, %v1754
  %v1760 = vunpack.c.l.b16 %v1647
  %v1761 = vunpack.c.l.b16 %v1648
  %v1762 = vunpack.c.l.b16 %v1649
  %v1763 = vunpack.c.l.b16 %v1650
  %v1764 = vpack.c.b16 %v1761, %v1760
  %v1765 = vpack.c.b16 %v1763, %v1762
  %v1769 = vsel %vm86, %v1750, 0
  %v1772 = vsel %vm86, %v1751, 0
  %1774 = vmatprep.subr.bf16.mxu0 0
  %1775 = vmatpush1.bf16.msra.mxu0 0
  %1776 = vmatprep.subr.bf16.mxu0 0
  %1777 = vmatpush1.bf16.msra.mxu0 0
  %1778 = vmatprep.subr.bf16.mxu0 0
  %1779 = vmatpush1.bf16.msra.mxu0 0
  %1780 = vmatprep.subr.bf16.mxu0 0
  %1781 = vmatpush1.bf16.msra.mxu0 0
  %1782 = vmatprep.subr.bf16.mxu0 0
  %1783 = vmatpush1.bf16.msra.mxu0 0
  %1784 = vmatprep.subr.bf16.mxu0 0
  %1785 = vmatpush1.bf16.msra.mxu0 0
  %1786 = vmatprep.subr.bf16.mxu0 0
  %1787 = vmatpush1.bf16.msra.mxu0 %v1765
  %1788 = vmatprep.subr.bf16.mxu0 0
  %1789 = vmatpush1.bf16.msra.mxu0 %v1764
  %1790 = vmatprep.subr.bf16.mxu0 0
  %1791 = vmatpush2.bf16.msra.mxu0 0
  %1792 = vmatprep.subr.bf16.mxu0 0
  %1793 = vmatpush2.bf16.msra.mxu0 0
  %1794 = vmatprep.subr.bf16.mxu0 0
  %1795 = vmatpush2.bf16.msra.mxu0 0
  %1796 = vmatprep.subr.bf16.mxu0 0
  %1797 = vmatpush2.bf16.msra.mxu0 0
  %1798 = vmatprep.subr.bf16.mxu0 0
  %1799 = vmatpush2.bf16.msra.mxu0 0
  %1800 = vmatprep.subr.bf16.mxu0 0
  %1801 = vmatpush2.bf16.msra.mxu0 0
  %1802 = vmatprep.subr.bf16.mxu0 0
  %1803 = vmatpush2.bf16.msra.mxu0 0
  %1804 = vmatprep.subr.bf16.mxu0 0
  %1805 = vmatpush2.bf16.msra.mxu0 0
  %1806 = vmatprep.mubr.bf16.mxu0 0
  %1807 = vmatmul.mubr.bf16.gmra.mxu0 %v1769
  %v1808 = vpop.f32.mrf.mxu0
  %v1809 = vadd.f32 %v1755, %v1808
  %v1810 = vpop.f32.mrf.mxu0
  %v1811 = vpop.f32.mrf.mxu0
  %v1812 = vadd.f32 %v1755, %v1811
  %v1813 = vpop.f32.mrf.mxu0
  %1814 = vmatprep.mubr.bf16.mxu0 0
  %1815 = vmatmul.mubr.bf16.gmra.mxu0 %v1772
  %v1816 = vpop.f32.mrf.mxu0
  %v1817 = vadd.f32 %v1755, %v1816
  %v1818 = vpop.f32.mrf.mxu0
  %v1819 = vpop.f32.mrf.mxu0
  %v1820 = vadd.f32 %v1755, %v1819
  %v1821 = vpop.f32.mrf.mxu0
  %1822 = vdwg.mxu0
  %v1823 = vpack.c.bf16 %v1739, %v1736
  %v1824 = vpack.c.bf16 %v1747, %v1744
  %v1825 = vpack.c.bf16 %v1812, %v1809
  %v1826 = vpack.c.bf16 %v1820, %v1817
  %1828 = vrot.lane.b32.xlu0 %v1823, 96
  %v1829 = vpop.permute.xlu0 %1828
  %v1831 = vsel %vm222, %v1823, 0
  %v1834 = vsel %vm222, %v1829, 0
  %1836 = vmatprep.subr.bf16.mxu0 0
  %1837 = vmatpush1.bf16.xpose.msra.mxu0 0
  %1838 = vmatprep.subr.bf16.mxu0 0
  %1839 = vmatpush1.bf16.xpose.msra.mxu0 0
  %1840 = vmatprep.subr.bf16.mxu0 0
  %1841 = vmatpush1.bf16.xpose.msra.mxu0 0
  %1842 = vmatprep.subr.bf16.mxu0 0
  %1843 = vmatpush1.bf16.xpose.msra.mxu0 0
  %1844 = vmatprep.subr.bf16.mxu0 0
  %1845 = vmatpush1.bf16.xpose.msra.mxu0 0
  %1846 = vmatprep.subr.bf16.mxu0 0
  %1847 = vmatpush1.bf16.xpose.msra.mxu0 0
  %1848 = vmatprep.subr.bf16.mxu0 0
  %1849 = vmatpush1.bf16.xpose.msra.mxu0 0
  %1850 = vmatprep.subr.bf16.mxu0 0
  %1851 = vmatpush1.bf16.xpose.msra.mxu0 %v1834
  %1852 = vmatprep.subr.bf16.mxu0 0
  %1853 = vmatpush2.bf16.xpose.msra.mxu0 0
  %1854 = vmatprep.subr.bf16.mxu0 0
  %1855 = vmatpush2.bf16.xpose.msra.mxu0 0
  %1856 = vmatprep.subr.bf16.mxu0 0
  %1857 = vmatpush2.bf16.xpose.msra.mxu0 0
  %1858 = vmatprep.subr.bf16.mxu0 0
  %1859 = vmatpush2.bf16.xpose.msra.mxu0 0
  %1860 = vmatprep.subr.bf16.mxu0 0
  %1861 = vmatpush2.bf16.xpose.msra.mxu0 0
  %1862 = vmatprep.subr.bf16.mxu0 0
  %1863 = vmatpush2.bf16.xpose.msra.mxu0 0
  %1864 = vmatprep.subr.bf16.mxu0 0
  %1865 = vmatpush2.bf16.xpose.msra.mxu0 0
  %1866 = vmatprep.subr.bf16.mxu0 0
  %1867 = vmatpush2.bf16.xpose.msra.mxu0 0
  %1868 = vmatprep.mubr.bf16.mxu0 0
  %1869 = vmatmul.mubr.bf16.gmra.mxu0 %v1831
  %v1870 = vpop.f32.mrf.mxu0
  %v1871 = vadd.f32 0.0, %v1870
  %v1872 = vpop.f32.mrf.mxu0
  %v1873 = vpop.f32.mrf.mxu0
  %v1874 = vadd.f32 0.0, %v1873
  %v1875 = vpop.f32.mrf.mxu0
  %1876 = vdwg.mxu0
  %1878 = vrot.lane.b32.xlu0 %v1824, 96
  %v1879 = vpop.permute.xlu0 %1878
  %v1881 = vsel %vm222, %v1824, 0
  %v1884 = vsel %vm222, %v1879, 0
  %1886 = vmatprep.subr.bf16.mxu0 0
  %1887 = vmatpush1.bf16.xpose.msra.mxu0 0
  %1888 = vmatprep.subr.bf16.mxu0 0
  %1889 = vmatpush1.bf16.xpose.msra.mxu0 0
  %1890 = vmatprep.subr.bf16.mxu0 0
  %1891 = vmatpush1.bf16.xpose.msra.mxu0 0
  %1892 = vmatprep.subr.bf16.mxu0 0
  %1893 = vmatpush1.bf16.xpose.msra.mxu0 0
  %1894 = vmatprep.subr.bf16.mxu0 0
  %1895 = vmatpush1.bf16.xpose.msra.mxu0 0
  %1896 = vmatprep.subr.bf16.mxu0 0
  %1897 = vmatpush1.bf16.xpose.msra.mxu0 0
  %1898 = vmatprep.subr.bf16.mxu0 0
  %1899 = vmatpush1.bf16.xpose.msra.mxu0 0
  %1900 = vmatprep.subr.bf16.mxu0 0
  %1901 = vmatpush1.bf16.xpose.msra.mxu0 %v1884
  %1902 = vmatprep.subr.bf16.mxu0 0
  %1903 = vmatpush2.bf16.xpose.msra.mxu0 0
  %1904 = vmatprep.subr.bf16.mxu0 0
  %1905 = vmatpush2.bf16.xpose.msra.mxu0 0
  %1906 = vmatprep.subr.bf16.mxu0 0
  %1907 = vmatpush2.bf16.xpose.msra.mxu0 0
  %1908 = vmatprep.subr.bf16.mxu0 0
  %1909 = vmatpush2.bf16.xpose.msra.mxu0 0
  %1910 = vmatprep.subr.bf16.mxu0 0
  %1911 = vmatpush2.bf16.xpose.msra.mxu0 0
  %1912 = vmatprep.subr.bf16.mxu0 0
  %1913 = vmatpush2.bf16.xpose.msra.mxu0 0
  %1914 = vmatprep.subr.bf16.mxu0 0
  %1915 = vmatpush2.bf16.xpose.msra.mxu0 0
  %1916 = vmatprep.subr.bf16.mxu0 0
  %1917 = vmatpush2.bf16.xpose.msra.mxu0 0
  %1918 = vmatprep.mubr.bf16.mxu0 0
  %1919 = vmatmul.mubr.bf16.gmra.mxu0 %v1881
  %v1920 = vpop.f32.mrf.mxu0
  %v1921 = vadd.f32 0.0, %v1920
  %v1922 = vpop.f32.mrf.mxu0
  %v1923 = vpop.f32.mrf.mxu0
  %v1924 = vadd.f32 0.0, %v1923
  %v1925 = vpop.f32.mrf.mxu0
  %1926 = vdwg.mxu0
  %v1927 = vmul.f32 %v1871, 0.35355338
  %v1928 = vmul.f32 %v1874, 0.35355338
  %v1929 = vmul.f32 %v1921, 0.35355338
  %v1930 = vmul.f32 %v1924, 0.35355338
  %v1931 = vsel %vm324, %v1927, -inf
  %1932 = vmax.xlane.f32.xlu0 %v1931
  %v1933 = vpop.xlane.xlu0 %1932
  %v1934 = vsel %vm324, %v1928, -inf
  %1935 = vmax.xlane.f32.xlu0 %v1934
  %v1936 = vpop.xlane.xlu0 %1935
  %v1937 = vsel %vm324, %v1929, -inf
  %1938 = vmax.xlane.f32.xlu0 %v1937
  %v1939 = vpop.xlane.xlu0 %1938
  %v1940 = vsel %vm324, %v1930, -inf
  %1941 = vmax.xlane.f32.xlu0 %v1940
  %v1942 = vpop.xlane.xlu0 %1941
  %v1943 = vsub.f32 %v1927, %v1933
  %v1944 = vsub.f32 %v1928, %v1936
  %v1945 = vsub.f32 %v1929, %v1939
  %v1946 = vsub.f32 %v1930, %v1942
  %v1947 = vmul.f32 %v1943, 1.442695
  %v1948 = vpow.pop %v1947
  %v1949 = vmul.f32 %v1944, 1.442695
  %v1950 = vpow.pop %v1949
  %v1951 = vmul.f32 %v1945, 1.442695
  %v1952 = vpow.pop %v1951
  %v1953 = vmul.f32 %v1946, 1.442695
  %v1954 = vpow.pop %v1953
  %v1955 = vsel %vm324, %v1948, 0.0
  %1956 = vadd.xlane.f32.xlu0 %v1955
  %v1957 = vpop.xlane.xlu0 %1956
  %v1958 = vsel %vm324, %v1950, 0.0
  %1959 = vadd.xlane.f32.xlu0 %v1958
  %v1960 = vpop.xlane.xlu0 %1959
  %v1961 = vsel %vm324, %v1952, 0.0
  %1962 = vadd.xlane.f32.xlu0 %v1961
  %v1963 = vpop.xlane.xlu0 %1962
  %v1964 = vsel %vm324, %v1954, 0.0
  %1965 = vadd.xlane.f32.xlu0 %v1964
  %v1966 = vpop.xlane.xlu0 %1965
  %v1967 = vrcp.pop %v1957
  %v1968 = vrcp.pop %v1960
  %v1969 = vrcp.pop %v1963
  %v1970 = vrcp.pop %v1966
  %v1971 = vmul.f32 %v1948, %v1967
  %v1972 = vmul.f32 %v1950, %v1968
  %v1973 = vmul.f32 %v1952, %v1969
  %v1974 = vmul.f32 %v1954, %v1970
  %v1975 = vpack.c.bf16 %v1972, %v1971
  %v1976 = vpack.c.bf16 %v1974, %v1973
  %v1978 = vsel %vm324, %v1975, 0
  %1980 = vmatprep.subr.bf16.mxu0 0
  %1981 = vmatpush1.bf16.msra.mxu0 0
  %1982 = vmatprep.subr.bf16.mxu0 0
  %1983 = vmatpush1.bf16.msra.mxu0 0
  %1984 = vmatprep.subr.bf16.mxu0 0
  %1985 = vmatpush1.bf16.msra.mxu0 0
  %1986 = vmatprep.subr.bf16.mxu0 0
  %1987 = vmatpush1.bf16.msra.mxu0 0
  %1988 = vmatprep.subr.bf16.mxu0 0
  %1989 = vmatpush1.bf16.msra.mxu0 0
  %1990 = vmatprep.subr.bf16.mxu0 0
  %1991 = vmatpush1.bf16.msra.mxu0 0
  %1992 = vmatprep.subr.bf16.mxu0 0
  %1993 = vmatpush1.bf16.msra.mxu0 0
  %1994 = vmatprep.subr.bf16.mxu0 0
  %1995 = vmatpush1.bf16.msra.mxu0 %v1825
  %1996 = vmatprep.subr.bf16.mxu0 0
  %1997 = vmatpush2.bf16.msra.mxu0 0
  %1998 = vmatprep.subr.bf16.mxu0 0
  %1999 = vmatpush2.bf16.msra.mxu0 0
  %2000 = vmatprep.subr.bf16.mxu0 0
  %2001 = vmatpush2.bf16.msra.mxu0 0
  %2002 = vmatprep.subr.bf16.mxu0 0
  %2003 = vmatpush2.bf16.msra.mxu0 0
  %2004 = vmatprep.subr.bf16.mxu0 0
  %2005 = vmatpush2.bf16.msra.mxu0 0
  %2006 = vmatprep.subr.bf16.mxu0 0
  %2007 = vmatpush2.bf16.msra.mxu0 0
  %2008 = vmatprep.subr.bf16.mxu0 0
  %2009 = vmatpush2.bf16.msra.mxu0 0
  %2010 = vmatprep.subr.bf16.mxu0 0
  %2011 = vmatpush2.bf16.msra.mxu0 0
  %2012 = vmatprep.mubr.bf16.mxu0 0
  %2013 = vmatmul.mubr.bf16.gmra.mxu0 %v1978
  %v2014 = vpop.f32.mrf.mxu0
  %v2015 = vadd.f32 0.0, %v2014
  %v2016 = vpop.f32.mrf.mxu0
  %v2017 = vpop.f32.mrf.mxu0
  %v2018 = vadd.f32 0.0, %v2017
  %v2019 = vpop.f32.mrf.mxu0
  %2020 = vdwg.mxu0
  %v2022 = vsel %vm324, %v1976, 0
  %2024 = vmatprep.subr.bf16.mxu0 0
  %2025 = vmatpush1.bf16.msra.mxu0 0
  %2026 = vmatprep.subr.bf16.mxu0 0
  %2027 = vmatpush1.bf16.msra.mxu0 0
  %2028 = vmatprep.subr.bf16.mxu0 0
  %2029 = vmatpush1.bf16.msra.mxu0 0
  %2030 = vmatprep.subr.bf16.mxu0 0
  %2031 = vmatpush1.bf16.msra.mxu0 0
  %2032 = vmatprep.subr.bf16.mxu0 0
  %2033 = vmatpush1.bf16.msra.mxu0 0
  %2034 = vmatprep.subr.bf16.mxu0 0
  %2035 = vmatpush1.bf16.msra.mxu0 0
  %2036 = vmatprep.subr.bf16.mxu0 0
  %2037 = vmatpush1.bf16.msra.mxu0 0
  %2038 = vmatprep.subr.bf16.mxu0 0
  %2039 = vmatpush1.bf16.msra.mxu0 %v1826
  %2040 = vmatprep.subr.bf16.mxu0 0
  %2041 = vmatpush2.bf16.msra.mxu0 0
  %2042 = vmatprep.subr.bf16.mxu0 0
  %2043 = vmatpush2.bf16.msra.mxu0 0
  %2044 = vmatprep.subr.bf16.mxu0 0
  %2045 = vmatpush2.bf16.msra.mxu0 0
  %2046 = vmatprep.subr.bf16.mxu0 0
  %2047 = vmatpush2.bf16.msra.mxu0 0
  %2048 = vmatprep.subr.bf16.mxu0 0
  %2049 = vmatpush2.bf16.msra.mxu0 0
  %2050 = vmatprep.subr.bf16.mxu0 0
  %2051 = vmatpush2.bf16.msra.mxu0 0
  %2052 = vmatprep.subr.bf16.mxu0 0
  %2053 = vmatpush2.bf16.msra.mxu0 0
  %2054 = vmatprep.subr.bf16.mxu0 0
  %2055 = vmatpush2.bf16.msra.mxu0 0
  %2056 = vmatprep.mubr.bf16.mxu0 0
  %2057 = vmatmul.mubr.bf16.gmra.mxu0 %v2022
  %v2058 = vpop.f32.mrf.mxu0
  %v2059 = vadd.f32 0.0, %v2058
  %v2060 = vpop.f32.mrf.mxu0
  %v2061 = vpop.f32.mrf.mxu0
  %v2062 = vadd.f32 0.0, %v2061
  %v2063 = vpop.f32.mrf.mxu0
  %2064 = vdwg.mxu0
  %2065 = vrot.lane.b32.xlu0 %v1823, 120
  %v2066 = vpop.permute.xlu0 %2065
  %2067 = vrot.lane.b32.xlu0 %v1823, 88
  %v2068 = vpop.permute.xlu0 %2067
  %v2070 = vsel %vm222, %v2066, 0
  %v2073 = vsel %vm222, %v2068, 0
  %2075 = vmatprep.subr.bf16.mxu0 0
  %2076 = vmatpush1.bf16.xpose.msra.mxu0 0
  %2077 = vmatprep.subr.bf16.mxu0 0
  %2078 = vmatpush1.bf16.xpose.msra.mxu0 0
  %2079 = vmatprep.subr.bf16.mxu0 0
  %2080 = vmatpush1.bf16.xpose.msra.mxu0 0
  %2081 = vmatprep.subr.bf16.mxu0 0
  %2082 = vmatpush1.bf16.xpose.msra.mxu0 0
  %2083 = vmatprep.subr.bf16.mxu0 0
  %2084 = vmatpush1.bf16.xpose.msra.mxu0 0
  %2085 = vmatprep.subr.bf16.mxu0 0
  %2086 = vmatpush1.bf16.xpose.msra.mxu0 0
  %2087 = vmatprep.subr.bf16.mxu0 0
  %2088 = vmatpush1.bf16.xpose.msra.mxu0 0
  %2089 = vmatprep.subr.bf16.mxu0 0
  %2090 = vmatpush1.bf16.xpose.msra.mxu0 %v2073
  %2091 = vmatprep.subr.bf16.mxu0 0
  %2092 = vmatpush2.bf16.xpose.msra.mxu0 0
  %2093 = vmatprep.subr.bf16.mxu0 0
  %2094 = vmatpush2.bf16.xpose.msra.mxu0 0
  %2095 = vmatprep.subr.bf16.mxu0 0
  %2096 = vmatpush2.bf16.xpose.msra.mxu0 0
  %2097 = vmatprep.subr.bf16.mxu0 0
  %2098 = vmatpush2.bf16.xpose.msra.mxu0 0
  %2099 = vmatprep.subr.bf16.mxu0 0
  %2100 = vmatpush2.bf16.xpose.msra.mxu0 0
  %2101 = vmatprep.subr.bf16.mxu0 0
  %2102 = vmatpush2.bf16.xpose.msra.mxu0 0
  %2103 = vmatprep.subr.bf16.mxu0 0
  %2104 = vmatpush2.bf16.xpose.msra.mxu0 0
  %2105 = vmatprep.subr.bf16.mxu0 0
  %2106 = vmatpush2.bf16.xpose.msra.mxu0 0
  %2107 = vmatprep.mubr.bf16.mxu0 0
  %2108 = vmatmul.mubr.bf16.gmra.mxu0 %v2070
  %v2109 = vpop.f32.mrf.mxu0
  %v2110 = vadd.f32 0.0, %v2109
  %v2111 = vpop.f32.mrf.mxu0
  %v2112 = vpop.f32.mrf.mxu0
  %v2113 = vadd.f32 0.0, %v2112
  %v2114 = vpop.f32.mrf.mxu0
  %2115 = vdwg.mxu0
  %2116 = vrot.lane.b32.xlu0 %v1824, 120
  %v2117 = vpop.permute.xlu0 %2116
  %2118 = vrot.lane.b32.xlu0 %v1824, 88
  %v2119 = vpop.permute.xlu0 %2118
  %v2121 = vsel %vm222, %v2117, 0
  %v2124 = vsel %vm222, %v2119, 0
  %2126 = vmatprep.subr.bf16.mxu0 0
  %2127 = vmatpush1.bf16.xpose.msra.mxu0 0
  %2128 = vmatprep.subr.bf16.mxu0 0
  %2129 = vmatpush1.bf16.xpose.msra.mxu0 0
  %2130 = vmatprep.subr.bf16.mxu0 0
  %2131 = vmatpush1.bf16.xpose.msra.mxu0 0
  %2132 = vmatprep.subr.bf16.mxu0 0
  %2133 = vmatpush1.bf16.xpose.msra.mxu0 0
  %2134 = vmatprep.subr.bf16.mxu0 0
  %2135 = vmatpush1.bf16.xpose.msra.mxu0 0
  %2136 = vmatprep.subr.bf16.mxu0 0
  %2137 = vmatpush1.bf16.xpose.msra.mxu0 0
  %2138 = vmatprep.subr.bf16.mxu0 0
  %2139 = vmatpush1.bf16.xpose.msra.mxu0 0
  %2140 = vmatprep.subr.bf16.mxu0 0
  %2141 = vmatpush1.bf16.xpose.msra.mxu0 %v2124
  %2142 = vmatprep.subr.bf16.mxu0 0
  %2143 = vmatpush2.bf16.xpose.msra.mxu0 0
  %2144 = vmatprep.subr.bf16.mxu0 0
  %2145 = vmatpush2.bf16.xpose.msra.mxu0 0
  %2146 = vmatprep.subr.bf16.mxu0 0
  %2147 = vmatpush2.bf16.xpose.msra.mxu0 0
  %2148 = vmatprep.subr.bf16.mxu0 0
  %2149 = vmatpush2.bf16.xpose.msra.mxu0 0
  %2150 = vmatprep.subr.bf16.mxu0 0
  %2151 = vmatpush2.bf16.xpose.msra.mxu0 0
  %2152 = vmatprep.subr.bf16.mxu0 0
  %2153 = vmatpush2.bf16.xpose.msra.mxu0 0
  %2154 = vmatprep.subr.bf16.mxu0 0
  %2155 = vmatpush2.bf16.xpose.msra.mxu0 0
  %2156 = vmatprep.subr.bf16.mxu0 0
  %2157 = vmatpush2.bf16.xpose.msra.mxu0 0
  %2158 = vmatprep.mubr.bf16.mxu0 0
  %2159 = vmatmul.mubr.bf16.gmra.mxu0 %v2121
  %v2160 = vpop.f32.mrf.mxu0
  %v2161 = vadd.f32 0.0, %v2160
  %v2162 = vpop.f32.mrf.mxu0
  %v2163 = vpop.f32.mrf.mxu0
  %v2164 = vadd.f32 0.0, %v2163
  %v2165 = vpop.f32.mrf.mxu0
  %2166 = vdwg.mxu0
  %v2167 = vmul.f32 %v2110, 0.35355338
  %v2168 = vmul.f32 %v2113, 0.35355338
  %v2169 = vmul.f32 %v2161, 0.35355338
  %v2170 = vmul.f32 %v2164, 0.35355338
  %v2171 = vsel %vm324, %v2167, -inf
  %2172 = vmax.xlane.f32.xlu0 %v2171
  %v2173 = vpop.xlane.xlu0 %2172
  %v2174 = vsel %vm324, %v2168, -inf
  %2175 = vmax.xlane.f32.xlu0 %v2174
  %v2176 = vpop.xlane.xlu0 %2175
  %v2177 = vsel %vm324, %v2169, -inf
  %2178 = vmax.xlane.f32.xlu0 %v2177
  %v2179 = vpop.xlane.xlu0 %2178
  %v2180 = vsel %vm324, %v2170, -inf
  %2181 = vmax.xlane.f32.xlu0 %v2180
  %v2182 = vpop.xlane.xlu0 %2181
  %v2183 = vsub.f32 %v2167, %v2173
  %v2184 = vsub.f32 %v2168, %v2176
  %v2185 = vsub.f32 %v2169, %v2179
  %v2186 = vsub.f32 %v2170, %v2182
  %v2187 = vmul.f32 %v2183, 1.442695
  %v2188 = vpow.pop %v2187
  %v2189 = vmul.f32 %v2184, 1.442695
  %v2190 = vpow.pop %v2189
  %v2191 = vmul.f32 %v2185, 1.442695
  %v2192 = vpow.pop %v2191
  %v2193 = vmul.f32 %v2186, 1.442695
  %v2194 = vpow.pop %v2193
  %v2195 = vsel %vm324, %v2188, 0.0
  %2196 = vadd.xlane.f32.xlu0 %v2195
  %v2197 = vpop.xlane.xlu0 %2196
  %v2198 = vsel %vm324, %v2190, 0.0
  %2199 = vadd.xlane.f32.xlu0 %v2198
  %v2200 = vpop.xlane.xlu0 %2199
  %v2201 = vsel %vm324, %v2192, 0.0
  %2202 = vadd.xlane.f32.xlu0 %v2201
  %v2203 = vpop.xlane.xlu0 %2202
  %v2204 = vsel %vm324, %v2194, 0.0
  %2205 = vadd.xlane.f32.xlu0 %v2204
  %v2206 = vpop.xlane.xlu0 %2205
  %v2207 = vrcp.pop %v2197
  %v2208 = vrcp.pop %v2200
  %v2209 = vrcp.pop %v2203
  %v2210 = vrcp.pop %v2206
  %v2211 = vmul.f32 %v2188, %v2207
  %v2212 = vmul.f32 %v2190, %v2208
  %v2213 = vmul.f32 %v2192, %v2209
  %v2214 = vmul.f32 %v2194, %v2210
  %v2215 = vpack.c.bf16 %v2212, %v2211
  %v2216 = vpack.c.bf16 %v2214, %v2213
  %2218 = vrot.lane.b32.xlu0 %v1825, 120
  %v2219 = vpop.permute.xlu0 %2218
  %v2222 = vsel %vm324, %v2215, 0
  %2224 = vmatprep.subr.bf16.mxu0 0
  %2225 = vmatpush1.bf16.msra.mxu0 0
  %2226 = vmatprep.subr.bf16.mxu0 0
  %2227 = vmatpush1.bf16.msra.mxu0 0
  %2228 = vmatprep.subr.bf16.mxu0 0
  %2229 = vmatpush1.bf16.msra.mxu0 0
  %2230 = vmatprep.subr.bf16.mxu0 0
  %2231 = vmatpush1.bf16.msra.mxu0 0
  %2232 = vmatprep.subr.bf16.mxu0 0
  %2233 = vmatpush1.bf16.msra.mxu0 0
  %2234 = vmatprep.subr.bf16.mxu0 0
  %2235 = vmatpush1.bf16.msra.mxu0 0
  %2236 = vmatprep.subr.bf16.mxu0 0
  %2237 = vmatpush1.bf16.msra.mxu0 0
  %2238 = vmatprep.subr.bf16.mxu0 0
  %2239 = vmatpush1.bf16.msra.mxu0 %v2219
  %2240 = vmatprep.subr.bf16.mxu0 0
  %2241 = vmatpush2.bf16.msra.mxu0 0
  %2242 = vmatprep.subr.bf16.mxu0 0
  %2243 = vmatpush2.bf16.msra.mxu0 0
  %2244 = vmatprep.subr.bf16.mxu0 0
  %2245 = vmatpush2.bf16.msra.mxu0 0
  %2246 = vmatprep.subr.bf16.mxu0 0
  %2247 = vmatpush2.bf16.msra.mxu0 0
  %2248 = vmatprep.subr.bf16.mxu0 0
  %2249 = vmatpush2.bf16.msra.mxu0 0
  %2250 = vmatprep.subr.bf16.mxu0 0
  %2251 = vmatpush2.bf16.msra.mxu0 0
  %2252 = vmatprep.subr.bf16.mxu0 0
  %2253 = vmatpush2.bf16.msra.mxu0 0
  %2254 = vmatprep.subr.bf16.mxu0 0
  %2255 = vmatpush2.bf16.msra.mxu0 0
  %2256 = vmatprep.mubr.bf16.mxu0 0
  %2257 = vmatmul.mubr.bf16.gmra.mxu0 %v2222
  %v2258 = vpop.f32.mrf.mxu0
  %v2259 = vadd.f32 0.0, %v2258
  %v2260 = vpop.f32.mrf.mxu0
  %v2261 = vpop.f32.mrf.mxu0
  %v2262 = vadd.f32 0.0, %v2261
  %v2263 = vpop.f32.mrf.mxu0
  %2264 = vdwg.mxu0
  %2266 = vrot.lane.b32.xlu0 %v1826, 120
  %v2267 = vpop.permute.xlu0 %2266
  %v2270 = vsel %vm324, %v2216, 0
  %2272 = vmatprep.subr.bf16.mxu0 0
  %2273 = vmatpush1.bf16.msra.mxu0 0
  %2274 = vmatprep.subr.bf16.mxu0 0
  %2275 = vmatpush1.bf16.msra.mxu0 0
  %2276 = vmatprep.subr.bf16.mxu0 0
  %2277 = vmatpush1.bf16.msra.mxu0 0
  %2278 = vmatprep.subr.bf16.mxu0 0
  %2279 = vmatpush1.bf16.msra.mxu0 0
  %2280 = vmatprep.subr.bf16.mxu0 0
  %2281 = vmatpush1.bf16.msra.mxu0 0
  %2282 = vmatprep.subr.bf16.mxu0 0
  %2283 = vmatpush1.bf16.msra.mxu0 0
  %2284 = vmatprep.subr.bf16.mxu0 0
  %2285 = vmatpush1.bf16.msra.mxu0 0
  %2286 = vmatprep.subr.bf16.mxu0 0
  %2287 = vmatpush1.bf16.msra.mxu0 %v2267
  %2288 = vmatprep.subr.bf16.mxu0 0
  %2289 = vmatpush2.bf16.msra.mxu0 0
  %2290 = vmatprep.subr.bf16.mxu0 0
  %2291 = vmatpush2.bf16.msra.mxu0 0
  %2292 = vmatprep.subr.bf16.mxu0 0
  %2293 = vmatpush2.bf16.msra.mxu0 0
  %2294 = vmatprep.subr.bf16.mxu0 0
  %2295 = vmatpush2.bf16.msra.mxu0 0
  %2296 = vmatprep.subr.bf16.mxu0 0
  %2297 = vmatpush2.bf16.msra.mxu0 0
  %2298 = vmatprep.subr.bf16.mxu0 0
  %2299 = vmatpush2.bf16.msra.mxu0 0
  %2300 = vmatprep.subr.bf16.mxu0 0
  %2301 = vmatpush2.bf16.msra.mxu0 0
  %2302 = vmatprep.subr.bf16.mxu0 0
  %2303 = vmatpush2.bf16.msra.mxu0 0
  %2304 = vmatprep.mubr.bf16.mxu0 0
  %2305 = vmatmul.mubr.bf16.gmra.mxu0 %v2270
  %v2306 = vpop.f32.mrf.mxu0
  %v2307 = vadd.f32 0.0, %v2306
  %v2308 = vpop.f32.mrf.mxu0
  %v2309 = vpop.f32.mrf.mxu0
  %v2310 = vadd.f32 0.0, %v2309
  %v2311 = vpop.f32.mrf.mxu0
  %2312 = vdwg.mxu0
  %2313 = vrot.lane.b32.xlu0 %v1823, 112
  %v2314 = vpop.permute.xlu0 %2313
  %2315 = vrot.lane.b32.xlu0 %v1823, 80
  %v2316 = vpop.permute.xlu0 %2315
  %v2318 = vsel %vm222, %v2314, 0
  %v2321 = vsel %vm222, %v2316, 0
  %2323 = vmatprep.subr.bf16.mxu0 0
  %2324 = vmatpush1.bf16.xpose.msra.mxu0 0
  %2325 = vmatprep.subr.bf16.mxu0 0
  %2326 = vmatpush1.bf16.xpose.msra.mxu0 0
  %2327 = vmatprep.subr.bf16.mxu0 0
  %2328 = vmatpush1.bf16.xpose.msra.mxu0 0
  %2329 = vmatprep.subr.bf16.mxu0 0
  %2330 = vmatpush1.bf16.xpose.msra.mxu0 0
  %2331 = vmatprep.subr.bf16.mxu0 0
  %2332 = vmatpush1.bf16.xpose.msra.mxu0 0
  %2333 = vmatprep.subr.bf16.mxu0 0
  %2334 = vmatpush1.bf16.xpose.msra.mxu0 0
  %2335 = vmatprep.subr.bf16.mxu0 0
  %2336 = vmatpush1.bf16.xpose.msra.mxu0 0
  %2337 = vmatprep.subr.bf16.mxu0 0
  %2338 = vmatpush1.bf16.xpose.msra.mxu0 %v2321
  %2339 = vmatprep.subr.bf16.mxu0 0
  %2340 = vmatpush2.bf16.xpose.msra.mxu0 0
  %2341 = vmatprep.subr.bf16.mxu0 0
  %2342 = vmatpush2.bf16.xpose.msra.mxu0 0
  %2343 = vmatprep.subr.bf16.mxu0 0
  %2344 = vmatpush2.bf16.xpose.msra.mxu0 0
  %2345 = vmatprep.subr.bf16.mxu0 0
  %2346 = vmatpush2.bf16.xpose.msra.mxu0 0
  %2347 = vmatprep.subr.bf16.mxu0 0
  %2348 = vmatpush2.bf16.xpose.msra.mxu0 0
  %2349 = vmatprep.subr.bf16.mxu0 0
  %2350 = vmatpush2.bf16.xpose.msra.mxu0 0
  %2351 = vmatprep.subr.bf16.mxu0 0
  %2352 = vmatpush2.bf16.xpose.msra.mxu0 0
  %2353 = vmatprep.subr.bf16.mxu0 0
  %2354 = vmatpush2.bf16.xpose.msra.mxu0 0
  %2355 = vmatprep.mubr.bf16.mxu0 0
  %2356 = vmatmul.mubr.bf16.gmra.mxu0 %v2318
  %v2357 = vpop.f32.mrf.mxu0
  %v2358 = vadd.f32 0.0, %v2357
  %v2359 = vpop.f32.mrf.mxu0
  %v2360 = vpop.f32.mrf.mxu0
  %v2361 = vadd.f32 0.0, %v2360
  %v2362 = vpop.f32.mrf.mxu0
  %2363 = vdwg.mxu0
  %2364 = vrot.lane.b32.xlu0 %v1824, 112
  %v2365 = vpop.permute.xlu0 %2364
  %2366 = vrot.lane.b32.xlu0 %v1824, 80
  %v2367 = vpop.permute.xlu0 %2366
  %v2369 = vsel %vm222, %v2365, 0
  %v2372 = vsel %vm222, %v2367, 0
  %2374 = vmatprep.subr.bf16.mxu0 0
  %2375 = vmatpush1.bf16.xpose.msra.mxu0 0
  %2376 = vmatprep.subr.bf16.mxu0 0
  %2377 = vmatpush1.bf16.xpose.msra.mxu0 0
  %2378 = vmatprep.subr.bf16.mxu0 0
  %2379 = vmatpush1.bf16.xpose.msra.mxu0 0
  %2380 = vmatprep.subr.bf16.mxu0 0
  %2381 = vmatpush1.bf16.xpose.msra.mxu0 0
  %2382 = vmatprep.subr.bf16.mxu0 0
  %2383 = vmatpush1.bf16.xpose.msra.mxu0 0
  %2384 = vmatprep.subr.bf16.mxu0 0
  %2385 = vmatpush1.bf16.xpose.msra.mxu0 0
  %2386 = vmatprep.subr.bf16.mxu0 0
  %2387 = vmatpush1.bf16.xpose.msra.mxu0 0
  %2388 = vmatprep.subr.bf16.mxu0 0
  %2389 = vmatpush1.bf16.xpose.msra.mxu0 %v2372
  %2390 = vmatprep.subr.bf16.mxu0 0
  %2391 = vmatpush2.bf16.xpose.msra.mxu0 0
  %2392 = vmatprep.subr.bf16.mxu0 0
  %2393 = vmatpush2.bf16.xpose.msra.mxu0 0
  %2394 = vmatprep.subr.bf16.mxu0 0
  %2395 = vmatpush2.bf16.xpose.msra.mxu0 0
  %2396 = vmatprep.subr.bf16.mxu0 0
  %2397 = vmatpush2.bf16.xpose.msra.mxu0 0
  %2398 = vmatprep.subr.bf16.mxu0 0
  %2399 = vmatpush2.bf16.xpose.msra.mxu0 0
  %2400 = vmatprep.subr.bf16.mxu0 0
  %2401 = vmatpush2.bf16.xpose.msra.mxu0 0
  %2402 = vmatprep.subr.bf16.mxu0 0
  %2403 = vmatpush2.bf16.xpose.msra.mxu0 0
  %2404 = vmatprep.subr.bf16.mxu0 0
  %2405 = vmatpush2.bf16.xpose.msra.mxu0 0
  %2406 = vmatprep.mubr.bf16.mxu0 0
  %2407 = vmatmul.mubr.bf16.gmra.mxu0 %v2369
  %v2408 = vpop.f32.mrf.mxu0
  %v2409 = vadd.f32 0.0, %v2408
  %v2410 = vpop.f32.mrf.mxu0
  %v2411 = vpop.f32.mrf.mxu0
  %v2412 = vadd.f32 0.0, %v2411
  %v2413 = vpop.f32.mrf.mxu0
  %2414 = vdwg.mxu0
  %v2415 = vmul.f32 %v2358, 0.35355338
  %v2416 = vmul.f32 %v2361, 0.35355338
  %v2417 = vmul.f32 %v2409, 0.35355338
  %v2418 = vmul.f32 %v2412, 0.35355338
  %v2419 = vsel %vm324, %v2415, -inf
  %2420 = vmax.xlane.f32.xlu0 %v2419
  %v2421 = vpop.xlane.xlu0 %2420
  %v2422 = vsel %vm324, %v2416, -inf
  %2423 = vmax.xlane.f32.xlu0 %v2422
  %v2424 = vpop.xlane.xlu0 %2423
  %v2425 = vsel %vm324, %v2417, -inf
  %2426 = vmax.xlane.f32.xlu0 %v2425
  %v2427 = vpop.xlane.xlu0 %2426
  %v2428 = vsel %vm324, %v2418, -inf
  %2429 = vmax.xlane.f32.xlu0 %v2428
  %v2430 = vpop.xlane.xlu0 %2429
  %v2431 = vsub.f32 %v2415, %v2421
  %v2432 = vsub.f32 %v2416, %v2424
  %v2433 = vsub.f32 %v2417, %v2427
  %v2434 = vsub.f32 %v2418, %v2430
  %v2435 = vmul.f32 %v2431, 1.442695
  %v2436 = vpow.pop %v2435
  %v2437 = vmul.f32 %v2432, 1.442695
  %v2438 = vpow.pop %v2437
  %v2439 = vmul.f32 %v2433, 1.442695
  %v2440 = vpow.pop %v2439
  %v2441 = vmul.f32 %v2434, 1.442695
  %v2442 = vpow.pop %v2441
  %v2443 = vsel %vm324, %v2436, 0.0
  %2444 = vadd.xlane.f32.xlu0 %v2443
  %v2445 = vpop.xlane.xlu0 %2444
  %v2446 = vsel %vm324, %v2438, 0.0
  %2447 = vadd.xlane.f32.xlu0 %v2446
  %v2448 = vpop.xlane.xlu0 %2447
  %v2449 = vsel %vm324, %v2440, 0.0
  %2450 = vadd.xlane.f32.xlu0 %v2449
  %v2451 = vpop.xlane.xlu0 %2450
  %v2452 = vsel %vm324, %v2442, 0.0
  %2453 = vadd.xlane.f32.xlu0 %v2452
  %v2454 = vpop.xlane.xlu0 %2453
  %v2455 = vrcp.pop %v2445
  %v2456 = vrcp.pop %v2448
  %v2457 = vrcp.pop %v2451
  %v2458 = vrcp.pop %v2454
  %v2459 = vmul.f32 %v2436, %v2455
  %v2460 = vmul.f32 %v2438, %v2456
  %v2461 = vmul.f32 %v2440, %v2457
  %v2462 = vmul.f32 %v2442, %v2458
  %v2463 = vpack.c.bf16 %v2460, %v2459
  %v2464 = vpack.c.bf16 %v2462, %v2461
  %2465 = vrot.lane.b32.xlu0 %v1825, 112
  %v2466 = vpop.permute.xlu0 %2465
  %v2469 = vsel %vm324, %v2463, 0
  %2471 = vmatprep.subr.bf16.mxu0 0
  %2472 = vmatpush1.bf16.msra.mxu0 0
  %2473 = vmatprep.subr.bf16.mxu0 0
  %2474 = vmatpush1.bf16.msra.mxu0 0
  %2475 = vmatprep.subr.bf16.mxu0 0
  %2476 = vmatpush1.bf16.msra.mxu0 0
  %2477 = vmatprep.subr.bf16.mxu0 0
  %2478 = vmatpush1.bf16.msra.mxu0 0
  %2479 = vmatprep.subr.bf16.mxu0 0
  %2480 = vmatpush1.bf16.msra.mxu0 0
  %2481 = vmatprep.subr.bf16.mxu0 0
  %2482 = vmatpush1.bf16.msra.mxu0 0
  %2483 = vmatprep.subr.bf16.mxu0 0
  %2484 = vmatpush1.bf16.msra.mxu0 0
  %2485 = vmatprep.subr.bf16.mxu0 0
  %2486 = vmatpush1.bf16.msra.mxu0 %v2466
  %2487 = vmatprep.subr.bf16.mxu0 0
  %2488 = vmatpush2.bf16.msra.mxu0 0
  %2489 = vmatprep.subr.bf16.mxu0 0
  %2490 = vmatpush2.bf16.msra.mxu0 0
  %2491 = vmatprep.subr.bf16.mxu0 0
  %2492 = vmatpush2.bf16.msra.mxu0 0
  %2493 = vmatprep.subr.bf16.mxu0 0
  %2494 = vmatpush2.bf16.msra.mxu0 0
  %2495 = vmatprep.subr.bf16.mxu0 0
  %2496 = vmatpush2.bf16.msra.mxu0 0
  %2497 = vmatprep.subr.bf16.mxu0 0
  %2498 = vmatpush2.bf16.msra.mxu0 0
  %2499 = vmatprep.subr.bf16.mxu0 0
  %2500 = vmatpush2.bf16.msra.mxu0 0
  %2501 = vmatprep.subr.bf16.mxu0 0
  %2502 = vmatpush2.bf16.msra.mxu0 0
  %2503 = vmatprep.mubr.bf16.mxu0 0
  %2504 = vmatmul.mubr.bf16.gmra.mxu0 %v2469
  %v2505 = vpop.f32.mrf.mxu0
  %v2506 = vadd.f32 0.0, %v2505
  %v2507 = vpop.f32.mrf.mxu0
  %v2508 = vpop.f32.mrf.mxu0
  %v2509 = vadd.f32 0.0, %v2508
  %v2510 = vpop.f32.mrf.mxu0
  %2511 = vdwg.mxu0
  %2512 = vrot.lane.b32.xlu0 %v1826, 112
  %v2513 = vpop.permute.xlu0 %2512
  %v2516 = vsel %vm324, %v2464, 0
  %2518 = vmatprep.subr.bf16.mxu0 0
  %2519 = vmatpush1.bf16.msra.mxu0 0
  %2520 = vmatprep.subr.bf16.mxu0 0
  %2521 = vmatpush1.bf16.msra.mxu0 0
  %2522 = vmatprep.subr.bf16.mxu0 0
  %2523 = vmatpush1.bf16.msra.mxu0 0
  %2524 = vmatprep.subr.bf16.mxu0 0
  %2525 = vmatpush1.bf16.msra.mxu0 0
  %2526 = vmatprep.subr.bf16.mxu0 0
  %2527 = vmatpush1.bf16.msra.mxu0 0
  %2528 = vmatprep.subr.bf16.mxu0 0
  %2529 = vmatpush1.bf16.msra.mxu0 0
  %2530 = vmatprep.subr.bf16.mxu0 0
  %2531 = vmatpush1.bf16.msra.mxu0 0
  %2532 = vmatprep.subr.bf16.mxu0 0
  %2533 = vmatpush1.bf16.msra.mxu0 %v2513
  %2534 = vmatprep.subr.bf16.mxu0 0
  %2535 = vmatpush2.bf16.msra.mxu0 0
  %2536 = vmatprep.subr.bf16.mxu0 0
  %2537 = vmatpush2.bf16.msra.mxu0 0
  %2538 = vmatprep.subr.bf16.mxu0 0
  %2539 = vmatpush2.bf16.msra.mxu0 0
  %2540 = vmatprep.subr.bf16.mxu0 0
  %2541 = vmatpush2.bf16.msra.mxu0 0
  %2542 = vmatprep.subr.bf16.mxu0 0
  %2543 = vmatpush2.bf16.msra.mxu0 0
  %2544 = vmatprep.subr.bf16.mxu0 0
  %2545 = vmatpush2.bf16.msra.mxu0 0
  %2546 = vmatprep.subr.bf16.mxu0 0
  %2547 = vmatpush2.bf16.msra.mxu0 0
  %2548 = vmatprep.subr.bf16.mxu0 0
  %2549 = vmatpush2.bf16.msra.mxu0 0
  %2550 = vmatprep.mubr.bf16.mxu0 0
  %2551 = vmatmul.mubr.bf16.gmra.mxu0 %v2516
  %v2552 = vpop.f32.mrf.mxu0
  %v2553 = vadd.f32 0.0, %v2552
  %v2554 = vpop.f32.mrf.mxu0
  %v2555 = vpop.f32.mrf.mxu0
  %v2556 = vadd.f32 0.0, %v2555
  %v2557 = vpop.f32.mrf.mxu0
  %2558 = vdwg.mxu0
  %2559 = vrot.lane.b32.xlu0 %v1823, 104
  %v2560 = vpop.permute.xlu0 %2559
  %2561 = vrot.lane.b32.xlu0 %v1823, 72
  %v2562 = vpop.permute.xlu0 %2561
  %v2564 = vsel %vm222, %v2560, 0
  %v2567 = vsel %vm222, %v2562, 0
  %2569 = vmatprep.subr.bf16.mxu0 0
  %2570 = vmatpush1.bf16.xpose.msra.mxu0 0
  %2571 = vmatprep.subr.bf16.mxu0 0
  %2572 = vmatpush1.bf16.xpose.msra.mxu0 0
  %2573 = vmatprep.subr.bf16.mxu0 0
  %2574 = vmatpush1.bf16.xpose.msra.mxu0 0
  %2575 = vmatprep.subr.bf16.mxu0 0
  %2576 = vmatpush1.bf16.xpose.msra.mxu0 0
  %2577 = vmatprep.subr.bf16.mxu0 0
  %2578 = vmatpush1.bf16.xpose.msra.mxu0 0
  %2579 = vmatprep.subr.bf16.mxu0 0
  %2580 = vmatpush1.bf16.xpose.msra.mxu0 0
  %2581 = vmatprep.subr.bf16.mxu0 0
  %2582 = vmatpush1.bf16.xpose.msra.mxu0 0
  %2583 = vmatprep.subr.bf16.mxu0 0
  %2584 = vmatpush1.bf16.xpose.msra.mxu0 %v2567
  %2585 = vmatprep.subr.bf16.mxu0 0
  %2586 = vmatpush2.bf16.xpose.msra.mxu0 0
  %2587 = vmatprep.subr.bf16.mxu0 0
  %2588 = vmatpush2.bf16.xpose.msra.mxu0 0
  %2589 = vmatprep.subr.bf16.mxu0 0
  %2590 = vmatpush2.bf16.xpose.msra.mxu0 0
  %2591 = vmatprep.subr.bf16.mxu0 0
  %2592 = vmatpush2.bf16.xpose.msra.mxu0 0
  %2593 = vmatprep.subr.bf16.mxu0 0
  %2594 = vmatpush2.bf16.xpose.msra.mxu0 0
  %2595 = vmatprep.subr.bf16.mxu0 0
  %2596 = vmatpush2.bf16.xpose.msra.mxu0 0
  %2597 = vmatprep.subr.bf16.mxu0 0
  %2598 = vmatpush2.bf16.xpose.msra.mxu0 0
  %2599 = vmatprep.subr.bf16.mxu0 0
  %2600 = vmatpush2.bf16.xpose.msra.mxu0 0
  %2601 = vmatprep.mubr.bf16.mxu0 0
  %2602 = vmatmul.mubr.bf16.gmra.mxu0 %v2564
  %v2603 = vpop.f32.mrf.mxu0
  %v2604 = vadd.f32 0.0, %v2603
  %v2605 = vpop.f32.mrf.mxu0
  %v2606 = vpop.f32.mrf.mxu0
  %v2607 = vadd.f32 0.0, %v2606
  %v2608 = vpop.f32.mrf.mxu0
  %2609 = vdwg.mxu0
  %2610 = vrot.lane.b32.xlu0 %v1824, 104
  %v2611 = vpop.permute.xlu0 %2610
  %2612 = vrot.lane.b32.xlu0 %v1824, 72
  %v2613 = vpop.permute.xlu0 %2612
  %v2615 = vsel %vm222, %v2611, 0
  %v2618 = vsel %vm222, %v2613, 0
  %2620 = vmatprep.subr.bf16.mxu0 0
  %2621 = vmatpush1.bf16.xpose.msra.mxu0 0
  %2622 = vmatprep.subr.bf16.mxu0 0
  %2623 = vmatpush1.bf16.xpose.msra.mxu0 0
  %2624 = vmatprep.subr.bf16.mxu0 0
  %2625 = vmatpush1.bf16.xpose.msra.mxu0 0
  %2626 = vmatprep.subr.bf16.mxu0 0
  %2627 = vmatpush1.bf16.xpose.msra.mxu0 0
  %2628 = vmatprep.subr.bf16.mxu0 0
  %2629 = vmatpush1.bf16.xpose.msra.mxu0 0
  %2630 = vmatprep.subr.bf16.mxu0 0
  %2631 = vmatpush1.bf16.xpose.msra.mxu0 0
  %2632 = vmatprep.subr.bf16.mxu0 0
  %2633 = vmatpush1.bf16.xpose.msra.mxu0 0
  %2634 = vmatprep.subr.bf16.mxu0 0
  %2635 = vmatpush1.bf16.xpose.msra.mxu0 %v2618
  %2636 = vmatprep.subr.bf16.mxu0 0
  %2637 = vmatpush2.bf16.xpose.msra.mxu0 0
  %2638 = vmatprep.subr.bf16.mxu0 0
  %2639 = vmatpush2.bf16.xpose.msra.mxu0 0
  %2640 = vmatprep.subr.bf16.mxu0 0
  %2641 = vmatpush2.bf16.xpose.msra.mxu0 0
  %2642 = vmatprep.subr.bf16.mxu0 0
  %2643 = vmatpush2.bf16.xpose.msra.mxu0 0
  %2644 = vmatprep.subr.bf16.mxu0 0
  %2645 = vmatpush2.bf16.xpose.msra.mxu0 0
  %2646 = vmatprep.subr.bf16.mxu0 0
  %2647 = vmatpush2.bf16.xpose.msra.mxu0 0
  %2648 = vmatprep.subr.bf16.mxu0 0
  %2649 = vmatpush2.bf16.xpose.msra.mxu0 0
  %2650 = vmatprep.subr.bf16.mxu0 0
  %2651 = vmatpush2.bf16.xpose.msra.mxu0 0
  %2652 = vmatprep.mubr.bf16.mxu0 0
  %2653 = vmatmul.mubr.bf16.gmra.mxu0 %v2615
  %v2654 = vpop.f32.mrf.mxu0
  %v2655 = vadd.f32 0.0, %v2654
  %v2656 = vpop.f32.mrf.mxu0
  %v2657 = vpop.f32.mrf.mxu0
  %v2658 = vadd.f32 0.0, %v2657
  %v2659 = vpop.f32.mrf.mxu0
  %2660 = vdwg.mxu0
  %v2661 = vmul.f32 %v2604, 0.35355338
  %v2662 = vmul.f32 %v2607, 0.35355338
  %v2663 = vmul.f32 %v2655, 0.35355338
  %v2664 = vmul.f32 %v2658, 0.35355338
  %v2665 = vsel %vm324, %v2661, -inf
  %2666 = vmax.xlane.f32.xlu0 %v2665
  %v2667 = vpop.xlane.xlu0 %2666
  %v2668 = vsel %vm324, %v2662, -inf
  %2669 = vmax.xlane.f32.xlu0 %v2668
  %v2670 = vpop.xlane.xlu0 %2669
  %v2671 = vsel %vm324, %v2663, -inf
  %2672 = vmax.xlane.f32.xlu0 %v2671
  %v2673 = vpop.xlane.xlu0 %2672
  %v2674 = vsel %vm324, %v2664, -inf
  %2675 = vmax.xlane.f32.xlu0 %v2674
  %v2676 = vpop.xlane.xlu0 %2675
  %v2677 = vsub.f32 %v2661, %v2667
  %v2678 = vsub.f32 %v2662, %v2670
  %v2679 = vsub.f32 %v2663, %v2673
  %v2680 = vsub.f32 %v2664, %v2676
  %v2681 = vmul.f32 %v2677, 1.442695
  %v2682 = vpow.pop %v2681
  %v2683 = vmul.f32 %v2678, 1.442695
  %v2684 = vpow.pop %v2683
  %v2685 = vmul.f32 %v2679, 1.442695
  %v2686 = vpow.pop %v2685
  %v2687 = vmul.f32 %v2680, 1.442695
  %v2688 = vpow.pop %v2687
  %v2689 = vsel %vm324, %v2682, 0.0
  %2690 = vadd.xlane.f32.xlu0 %v2689
  %v2691 = vpop.xlane.xlu0 %2690
  %v2692 = vsel %vm324, %v2684, 0.0
  %2693 = vadd.xlane.f32.xlu0 %v2692
  %v2694 = vpop.xlane.xlu0 %2693
  %v2695 = vsel %vm324, %v2686, 0.0
  %2696 = vadd.xlane.f32.xlu0 %v2695
  %v2697 = vpop.xlane.xlu0 %2696
  %v2698 = vsel %vm324, %v2688, 0.0
  %2699 = vadd.xlane.f32.xlu0 %v2698
  %v2700 = vpop.xlane.xlu0 %2699
  %v2701 = vrcp.pop %v2691
  %v2702 = vrcp.pop %v2694
  %v2703 = vrcp.pop %v2697
  %v2704 = vrcp.pop %v2700
  %v2705 = vmul.f32 %v2682, %v2701
  %v2706 = vmul.f32 %v2684, %v2702
  %v2707 = vmul.f32 %v2686, %v2703
  %v2708 = vmul.f32 %v2688, %v2704
  %v2709 = vpack.c.bf16 %v2706, %v2705
  %v2710 = vpack.c.bf16 %v2708, %v2707
  %2711 = vrot.lane.b32.xlu0 %v1825, 104
  %v2712 = vpop.permute.xlu0 %2711
  %v2715 = vsel %vm324, %v2709, 0
  %2717 = vmatprep.subr.bf16.mxu0 0
  %2718 = vmatpush1.bf16.msra.mxu0 0
  %2719 = vmatprep.subr.bf16.mxu0 0
  %2720 = vmatpush1.bf16.msra.mxu0 0
  %2721 = vmatprep.subr.bf16.mxu0 0
  %2722 = vmatpush1.bf16.msra.mxu0 0
  %2723 = vmatprep.subr.bf16.mxu0 0
  %2724 = vmatpush1.bf16.msra.mxu0 0
  %2725 = vmatprep.subr.bf16.mxu0 0
  %2726 = vmatpush1.bf16.msra.mxu0 0
  %2727 = vmatprep.subr.bf16.mxu0 0
  %2728 = vmatpush1.bf16.msra.mxu0 0
  %2729 = vmatprep.subr.bf16.mxu0 0
  %2730 = vmatpush1.bf16.msra.mxu0 0
  %2731 = vmatprep.subr.bf16.mxu0 0
  %2732 = vmatpush1.bf16.msra.mxu0 %v2712
  %2733 = vmatprep.subr.bf16.mxu0 0
  %2734 = vmatpush2.bf16.msra.mxu0 0
  %2735 = vmatprep.subr.bf16.mxu0 0
  %2736 = vmatpush2.bf16.msra.mxu0 0
  %2737 = vmatprep.subr.bf16.mxu0 0
  %2738 = vmatpush2.bf16.msra.mxu0 0
  %2739 = vmatprep.subr.bf16.mxu0 0
  %2740 = vmatpush2.bf16.msra.mxu0 0
  %2741 = vmatprep.subr.bf16.mxu0 0
  %2742 = vmatpush2.bf16.msra.mxu0 0
  %2743 = vmatprep.subr.bf16.mxu0 0
  %2744 = vmatpush2.bf16.msra.mxu0 0
  %2745 = vmatprep.subr.bf16.mxu0 0
  %2746 = vmatpush2.bf16.msra.mxu0 0
  %2747 = vmatprep.subr.bf16.mxu0 0
  %2748 = vmatpush2.bf16.msra.mxu0 0
  %2749 = vmatprep.mubr.bf16.mxu0 0
  %2750 = vmatmul.mubr.bf16.gmra.mxu0 %v2715
  %v2751 = vpop.f32.mrf.mxu0
  %v2752 = vadd.f32 0.0, %v2751
  %v2753 = vpop.f32.mrf.mxu0
  %v2754 = vpop.f32.mrf.mxu0
  %v2755 = vadd.f32 0.0, %v2754
  %v2756 = vpop.f32.mrf.mxu0
  %2757 = vdwg.mxu0
  %2758 = vrot.lane.b32.xlu0 %v1826, 104
  %v2759 = vpop.permute.xlu0 %2758
  %v2762 = vsel %vm324, %v2710, 0
  %2764 = vmatprep.subr.bf16.mxu0 0
  %2765 = vmatpush1.bf16.msra.mxu0 0
  %2766 = vmatprep.subr.bf16.mxu0 0
  %2767 = vmatpush1.bf16.msra.mxu0 0
  %2768 = vmatprep.subr.bf16.mxu0 0
  %2769 = vmatpush1.bf16.msra.mxu0 0
  %2770 = vmatprep.subr.bf16.mxu0 0
  %2771 = vmatpush1.bf16.msra.mxu0 0
  %2772 = vmatprep.subr.bf16.mxu0 0
  %2773 = vmatpush1.bf16.msra.mxu0 0
  %2774 = vmatprep.subr.bf16.mxu0 0
  %2775 = vmatpush1.bf16.msra.mxu0 0
  %2776 = vmatprep.subr.bf16.mxu0 0
  %2777 = vmatpush1.bf16.msra.mxu0 0
  %2778 = vmatprep.subr.bf16.mxu0 0
  %2779 = vmatpush1.bf16.msra.mxu0 %v2759
  %2780 = vmatprep.subr.bf16.mxu0 0
  %2781 = vmatpush2.bf16.msra.mxu0 0
  %2782 = vmatprep.subr.bf16.mxu0 0
  %2783 = vmatpush2.bf16.msra.mxu0 0
  %2784 = vmatprep.subr.bf16.mxu0 0
  %2785 = vmatpush2.bf16.msra.mxu0 0
  %2786 = vmatprep.subr.bf16.mxu0 0
  %2787 = vmatpush2.bf16.msra.mxu0 0
  %2788 = vmatprep.subr.bf16.mxu0 0
  %2789 = vmatpush2.bf16.msra.mxu0 0
  %2790 = vmatprep.subr.bf16.mxu0 0
  %2791 = vmatpush2.bf16.msra.mxu0 0
  %2792 = vmatprep.subr.bf16.mxu0 0
  %2793 = vmatpush2.bf16.msra.mxu0 0
  %2794 = vmatprep.subr.bf16.mxu0 0
  %2795 = vmatpush2.bf16.msra.mxu0 0
  %2796 = vmatprep.mubr.bf16.mxu0 0
  %2797 = vmatmul.mubr.bf16.gmra.mxu0 %v2762
  %v2798 = vpop.f32.mrf.mxu0
  %v2799 = vadd.f32 0.0, %v2798
  %v2800 = vpop.f32.mrf.mxu0
  %v2801 = vpop.f32.mrf.mxu0
  %v2802 = vadd.f32 0.0, %v2801
  %v2803 = vpop.f32.mrf.mxu0
  %2804 = vdwg.mxu0
  %2809 = vrot.lane.b32.xlu0 %v2259, 8
  %v2810 = vpop.permute.xlu0 %2809
  %2811 = vrot.lane.b32.xlu0 %v2262, 8
  %v2812 = vpop.permute.xlu0 %2811
  %2813 = vrot.lane.b32.xlu0 %v2307, 8
  %v2814 = vpop.permute.xlu0 %2813
  %2815 = vrot.lane.b32.xlu0 %v2310, 8
  %v2816 = vpop.permute.xlu0 %2815
  %2825 = vrot.lane.b32.xlu0 %v2506, 16
  %v2826 = vpop.permute.xlu0 %2825
  %2827 = vrot.lane.b32.xlu0 %v2509, 16
  %v2828 = vpop.permute.xlu0 %2827
  %2829 = vrot.lane.b32.xlu0 %v2553, 16
  %v2830 = vpop.permute.xlu0 %2829
  %2831 = vrot.lane.b32.xlu0 %v2556, 16
  %v2832 = vpop.permute.xlu0 %2831
  %2841 = vrot.lane.b32.xlu0 %v2752, 24
  %v2842 = vpop.permute.xlu0 %2841
  %2843 = vrot.lane.b32.xlu0 %v2755, 24
  %v2844 = vpop.permute.xlu0 %2843
  %2845 = vrot.lane.b32.xlu0 %v2799, 24
  %v2846 = vpop.permute.xlu0 %2845
  %2847 = vrot.lane.b32.xlu0 %v2802, 24
  %v2848 = vpop.permute.xlu0 %2847
  %v2853 = vsel %vm222, %v2015, %v2810
  %v2854 = vsel %vm222, %v2018, %v2812
  %v2855 = vsel %vm222, %v2059, %v2814
  %v2856 = vsel %vm222, %v2062, %v2816
  %v2857 = vsel %vm324, %v2853, %v2826
  %v2858 = vsel %vm324, %v2854, %v2828
  %v2859 = vsel %vm324, %v2855, %v2830
  %v2860 = vsel %vm324, %v2856, %v2832
  %v2861 = vsel %vm1255, %v2857, %v2842
  %v2862 = vsel %vm1255, %v2858, %v2844
  %v2863 = vsel %vm1255, %v2859, %v2846
  %v2864 = vsel %vm1255, %v2860, %v2848
  %v2865 = vpack.c.bf16 %v2862, %v2861
  %v2866 = vpack.c.bf16 %v2864, %v2863
  %v2867 = vlaneseq
  %v2868 = vshrl.u32 %v2867, 7
  %v2869 = vsub.s32 3, %v2868
  %v2870 = vrot.slane %v1671, %v2869
  %v2875 = vunpack.c.l.b16 %v1652
  %v2876 = vunpack.c.l.b16 %v1653
  %v2877 = vunpack.c.l.b16 %v1654
  %v2878 = vunpack.c.l.b16 %v1655
  %v2879 = vpack.c.b16 %v2876, %v2875
  %v2880 = vpack.c.b16 %v2878, %v2877
  %v2884 = vsel %vm86, %v2865, 0
  %v2887 = vsel %vm86, %v2866, 0
  %2889 = vmatprep.subr.bf16.mxu0 0
  %2890 = vmatpush1.bf16.msra.mxu0 0
  %2891 = vmatprep.subr.bf16.mxu0 0
  %2892 = vmatpush1.bf16.msra.mxu0 0
  %2893 = vmatprep.subr.bf16.mxu0 0
  %2894 = vmatpush1.bf16.msra.mxu0 0
  %2895 = vmatprep.subr.bf16.mxu0 0
  %2896 = vmatpush1.bf16.msra.mxu0 0
  %2897 = vmatprep.subr.bf16.mxu0 0
  %2898 = vmatpush1.bf16.msra.mxu0 0
  %2899 = vmatprep.subr.bf16.mxu0 0
  %2900 = vmatpush1.bf16.msra.mxu0 0
  %2901 = vmatprep.subr.bf16.mxu0 0
  %2902 = vmatpush1.bf16.msra.mxu0 %v2880
  %2903 = vmatprep.subr.bf16.mxu0 0
  %2904 = vmatpush1.bf16.msra.mxu0 %v2879
  %2905 = vmatprep.subr.bf16.mxu0 0
  %2906 = vmatpush2.bf16.msra.mxu0 0
  %2907 = vmatprep.subr.bf16.mxu0 0
  %2908 = vmatpush2.bf16.msra.mxu0 0
  %2909 = vmatprep.subr.bf16.mxu0 0
  %2910 = vmatpush2.bf16.msra.mxu0 0
  %2911 = vmatprep.subr.bf16.mxu0 0
  %2912 = vmatpush2.bf16.msra.mxu0 0
  %2913 = vmatprep.subr.bf16.mxu0 0
  %2914 = vmatpush2.bf16.msra.mxu0 0
  %2915 = vmatprep.subr.bf16.mxu0 0
  %2916 = vmatpush2.bf16.msra.mxu0 0
  %2917 = vmatprep.subr.bf16.mxu0 0
  %2918 = vmatpush2.bf16.msra.mxu0 0
  %2919 = vmatprep.subr.bf16.mxu0 0
  %2920 = vmatpush2.bf16.msra.mxu0 0
  %2921 = vmatprep.mubr.bf16.mxu0 0
  %2922 = vmatmul.mubr.bf16.gmra.mxu0 %v2884
  %v2923 = vpop.f32.mrf.mxu0
  %v2924 = vadd.f32 %v2870, %v2923
  %v2925 = vpop.f32.mrf.mxu0
  %v2926 = vpop.f32.mrf.mxu0
  %v2927 = vadd.f32 %v2870, %v2926
  %v2928 = vpop.f32.mrf.mxu0
  %2929 = vmatprep.mubr.bf16.mxu0 0
  %2930 = vmatmul.mubr.bf16.gmra.mxu0 %v2887
  %v2931 = vpop.f32.mrf.mxu0
  %v2932 = vadd.f32 %v2870, %v2931
  %v2933 = vpop.f32.mrf.mxu0
  %v2934 = vpop.f32.mrf.mxu0
  %v2935 = vadd.f32 %v2870, %v2934
  %v2936 = vpop.f32.mrf.mxu0
  %2937 = vdwg.mxu0
  %v2938 = vadd.f32 %v1637, %v2924
  %v2939 = vadd.f32 %v1638, %v2927
  %v2940 = vadd.f32 %v1639, %v2932
  %v2941 = vadd.f32 %v1640, %v2935
  %v2942 = vsel %vm86, %v2938, 0.0
  %2943 = vadd.xlane.f32.xlu0 %v2942
  %v2944 = vpop.xlane.xlu0 %2943
  %v2945 = vsel %vm86, %v2939, 0.0
  %2946 = vadd.xlane.f32.xlu0 %v2945
  %v2947 = vpop.xlane.xlu0 %2946
  %v2948 = vsel %vm86, %v2940, 0.0
  %2949 = vadd.xlane.f32.xlu0 %v2948
  %v2950 = vpop.xlane.xlu0 %2949
  %v2951 = vsel %vm86, %v2941, 0.0
  %2952 = vadd.xlane.f32.xlu0 %v2951
  %v2953 = vpop.xlane.xlu0 %2952
  %v2954 = vmul.f32 %v2944, %v1349
  %v2955 = vmul.f32 %v2947, %v1349
  %v2956 = vmul.f32 %v2950, %v1349
  %v2957 = vmul.f32 %v2953, %v1349
  %v2958 = vsub.f32 %v2938, %v2954
  %v2959 = vsub.f32 %v2939, %v2955
  %v2960 = vsub.f32 %v2940, %v2956
  %v2961 = vsub.f32 %v2941, %v2957
  %v2962 = vmul.f32 %v2958, %v2958
  %v2963 = vmul.f32 %v2959, %v2959
  %v2964 = vmul.f32 %v2960, %v2960
  %v2965 = vmul.f32 %v2961, %v2961
  %v2966 = vsel %vm86, %v2962, 0.0
  %2967 = vadd.xlane.f32.xlu0 %v2966
  %v2968 = vpop.xlane.xlu0 %2967
  %v2969 = vsel %vm86, %v2963, 0.0
  %2970 = vadd.xlane.f32.xlu0 %v2969
  %v2971 = vpop.xlane.xlu0 %2970
  %v2972 = vsel %vm86, %v2964, 0.0
  %2973 = vadd.xlane.f32.xlu0 %v2972
  %v2974 = vpop.xlane.xlu0 %2973
  %v2975 = vsel %vm86, %v2965, 0.0
  %2976 = vadd.xlane.f32.xlu0 %v2975
  %v2977 = vpop.xlane.xlu0 %2976
  %v2978 = vmul.f32 %v2968, %v1349
  %v2979 = vmul.f32 %v2971, %v1349
  %v2980 = vmul.f32 %v2974, %v1349
  %v2981 = vmul.f32 %v2977, %v1349
  %v2982 = vadd.f32 %v2978, 1e-05
  %v2983 = vadd.f32 %v2979, 1e-05
  %v2984 = vadd.f32 %v2980, 1e-05
  %v2985 = vadd.f32 %v2981, 1e-05
  %v2986 = vrsqrt.pop %v2982
  %v2987 = vrsqrt.pop %v2983
  %v2988 = vrsqrt.pop %v2984
  %v2989 = vrsqrt.pop %v2985
  %v2990 = vmul.f32 %v2958, %v2986
  %v2991 = vmul.f32 %v2959, %v2987
  %v2992 = vmul.f32 %v2960, %v2988
  %v2993 = vmul.f32 %v2961, %v2989
  %v2994 = vlaneseq
  %v2995 = vshrl.u32 %v2994, 7
  %v2996 = vsub.s32 5, %v2995
  %v2997 = vrot.slane %v1671, %v2996
  %v2998 = vmul.f32 %v2990, %v2997
  %v2999 = vmul.f32 %v2991, %v2997
  %v3000 = vmul.f32 %v2992, %v2997
  %v3001 = vmul.f32 %v2993, %v2997
  %v3002 = vlaneseq
  %v3003 = vshrl.u32 %v3002, 7
  %v3004 = vsub.s32 6, %v3003
  %v3005 = vrot.slane %v1671, %v3004
  %v3006 = vadd.f32 %v2998, %v3005
  %v3007 = vadd.f32 %v2999, %v3005
  %v3008 = vadd.f32 %v3000, %v3005
  %v3009 = vadd.f32 %v3001, %v3005
  %v3010 = vpack.c.bf16 %v3007, %v3006
  %v3011 = vpack.c.bf16 %v3009, %v3008
  %v3012 = vlaneseq
  %v3013 = vshrl.u32 %v3012, 7
  %v3014 = vsub.s32 1, %v3013
  %v3015 = vrot.slane %v1671, %v3014
  %v3020 = vunpack.c.l.b16 %v1657
  %v3021 = vunpack.c.l.b16 %v1658
  %v3022 = vunpack.c.l.b16 %v1659
  %v3023 = vunpack.c.l.b16 %v1660
  %v3024 = vpack.c.b16 %v3021, %v3020
  %v3025 = vpack.c.b16 %v3023, %v3022
  %v3029 = vsel %vm86, %v3010, 0
  %v3032 = vsel %vm86, %v3011, 0
  %3034 = vmatprep.subr.bf16.mxu0 0
  %3035 = vmatpush1.bf16.msra.mxu0 0
  %3036 = vmatprep.subr.bf16.mxu0 0
  %3037 = vmatpush1.bf16.msra.mxu0 0
  %3038 = vmatprep.subr.bf16.mxu0 0
  %3039 = vmatpush1.bf16.msra.mxu0 0
  %3040 = vmatprep.subr.bf16.mxu0 0
  %3041 = vmatpush1.bf16.msra.mxu0 0
  %3042 = vmatprep.subr.bf16.mxu0 0
  %3043 = vmatpush1.bf16.msra.mxu0 0
  %3044 = vmatprep.subr.bf16.mxu0 0
  %3045 = vmatpush1.bf16.msra.mxu0 0
  %3046 = vmatprep.subr.bf16.mxu0 0
  %3047 = vmatpush1.bf16.msra.mxu0 %v3025
  %3048 = vmatprep.subr.bf16.mxu0 0
  %3049 = vmatpush1.bf16.msra.mxu0 %v3024
  %3050 = vmatprep.subr.bf16.mxu0 0
  %3051 = vmatpush2.bf16.msra.mxu0 0
  %3052 = vmatprep.subr.bf16.mxu0 0
  %3053 = vmatpush2.bf16.msra.mxu0 0
  %3054 = vmatprep.subr.bf16.mxu0 0
  %3055 = vmatpush2.bf16.msra.mxu0 0
  %3056 = vmatprep.subr.bf16.mxu0 0
  %3057 = vmatpush2.bf16.msra.mxu0 0
  %3058 = vmatprep.subr.bf16.mxu0 0
  %3059 = vmatpush2.bf16.msra.mxu0 0
  %3060 = vmatprep.subr.bf16.mxu0 0
  %3061 = vmatpush2.bf16.msra.mxu0 0
  %3062 = vmatprep.subr.bf16.mxu0 0
  %3063 = vmatpush2.bf16.msra.mxu0 0
  %3064 = vmatprep.subr.bf16.mxu0 0
  %3065 = vmatpush2.bf16.msra.mxu0 0
  %3066 = vmatprep.mubr.bf16.mxu0 0
  %3067 = vmatmul.mubr.bf16.gmra.mxu0 %v3029
  %v3068 = vpop.f32.mrf.mxu0
  %v3069 = vadd.f32 %v3015, %v3068
  %v3070 = vpop.f32.mrf.mxu0
  %v3071 = vpop.f32.mrf.mxu0
  %v3072 = vadd.f32 %v3015, %v3071
  %v3073 = vpop.f32.mrf.mxu0
  %3074 = vmatprep.mubr.bf16.mxu0 0
  %3075 = vmatmul.mubr.bf16.gmra.mxu0 %v3032
  %v3076 = vpop.f32.mrf.mxu0
  %v3077 = vadd.f32 %v3015, %v3076
  %v3078 = vpop.f32.mrf.mxu0
  %v3079 = vpop.f32.mrf.mxu0
  %v3080 = vadd.f32 %v3015, %v3079
  %v3081 = vpop.f32.mrf.mxu0
  %3082 = vdwg.mxu0
  %v3083 = vmax.f32 %v3069, 0.0
  %v3084 = vmax.f32 %v3072, 0.0
  %v3085 = vmax.f32 %v3077, 0.0
  %v3086 = vmax.f32 %v3080, 0.0
  %v3087 = vpack.c.bf16 %v3084, %v3083
  %v3088 = vpack.c.bf16 %v3086, %v3085
  %v3089 = vlaneseq
  %v3090 = vshrl.u32 %v3089, 7
  %v3091 = vsub.s32 4, %v3090
  %v3092 = vrot.slane %v1671, %v3091
  %v3101 = vunpack.c.l.b16 %v1662
  %v3102 = vunpack.c.l.b16 %v1663
  %v3103 = vunpack.c.l.b16 %v1664
  %v3104 = vunpack.c.l.b16 %v1665
  %v3105 = vunpack.c.l.b16 %v1666
  %v3106 = vunpack.c.l.b16 %v1667
  %v3107 = vunpack.c.l.b16 %v1668
  %v3108 = vunpack.c.l.b16 %v1669
  %v3109 = vpack.c.b16 %v3102, %v3101
  %v3110 = vpack.c.b16 %v3104, %v3103
  %v3111 = vpack.c.b16 %v3106, %v3105
  %v3112 = vpack.c.b16 %v3108, %v3107
  %v3118 = vsel %vm1513, %v3087, 0
  %v3121 = vsel %vm1513, %v3088, 0
  %3123 = vmatprep.subr.bf16.mxu0 0
  %3124 = vmatpush1.bf16.msra.mxu0 0
  %3125 = vmatprep.subr.bf16.mxu0 0
  %3126 = vmatpush1.bf16.msra.mxu0 0
  %3127 = vmatprep.subr.bf16.mxu0 0
  %3128 = vmatpush1.bf16.msra.mxu0 0
  %3129 = vmatprep.subr.bf16.mxu0 0
  %3130 = vmatpush1.bf16.msra.mxu0 0
  %3131 = vmatprep.subr.bf16.mxu0 0
  %3132 = vmatpush1.bf16.msra.mxu0 %v3112
  %3133 = vmatprep.subr.bf16.mxu0 0
  %3134 = vmatpush1.bf16.msra.mxu0 %v3111
  %3135 = vmatprep.subr.bf16.mxu0 0
  %3136 = vmatpush1.bf16.msra.mxu0 %v3110
  %3137 = vmatprep.subr.bf16.mxu0 0
  %3138 = vmatpush1.bf16.msra.mxu0 %v3109
  %3139 = vmatprep.subr.bf16.mxu0 0
  %3140 = vmatpush2.bf16.msra.mxu0 0
  %3141 = vmatprep.subr.bf16.mxu0 0
  %3142 = vmatpush2.bf16.msra.mxu0 0
  %3143 = vmatprep.subr.bf16.mxu0 0
  %3144 = vmatpush2.bf16.msra.mxu0 0
  %3145 = vmatprep.subr.bf16.mxu0 0
  %3146 = vmatpush2.bf16.msra.mxu0 0
  %3147 = vmatprep.subr.bf16.mxu0 0
  %3148 = vmatpush2.bf16.msra.mxu0 0
  %3149 = vmatprep.subr.bf16.mxu0 0
  %3150 = vmatpush2.bf16.msra.mxu0 0
  %3151 = vmatprep.subr.bf16.mxu0 0
  %3152 = vmatpush2.bf16.msra.mxu0 0
  %3153 = vmatprep.subr.bf16.mxu0 0
  %3154 = vmatpush2.bf16.msra.mxu0 0
  %3155 = vmatprep.mubr.bf16.mxu0 0
  %3156 = vmatmul.mubr.bf16.gmra.mxu0 %v3118
  %v3157 = vpop.f32.mrf.mxu0
  %v3158 = vadd.f32 %v3092, %v3157
  %v3159 = vpop.f32.mrf.mxu0
  %v3160 = vpop.f32.mrf.mxu0
  %v3161 = vadd.f32 %v3092, %v3160
  %v3162 = vpop.f32.mrf.mxu0
  %3163 = vmatprep.mubr.bf16.mxu0 0
  %3164 = vmatmul.mubr.bf16.gmra.mxu0 %v3121
  %v3165 = vpop.f32.mrf.mxu0
  %v3166 = vadd.f32 %v3092, %v3165
  %v3167 = vpop.f32.mrf.mxu0
  %v3168 = vpop.f32.mrf.mxu0
  %v3169 = vadd.f32 %v3092, %v3168
  %v3170 = vpop.f32.mrf.mxu0
  %3171 = vdwg.mxu0
  %v3172 = vadd.f32 %v3006, %v3158
  %v3173 = vadd.f32 %v3007, %v3161
  %v3174 = vadd.f32 %v3008, %v3166
  %v3175 = vadd.f32 %v3009, %v3169
  %v3176 = vsel %vm86, %v3172, 0.0
  %3177 = vadd.xlane.f32.xlu0 %v3176
  %v3178 = vpop.xlane.xlu0 %3177
  %v3179 = vsel %vm86, %v3173, 0.0
  %3180 = vadd.xlane.f32.xlu0 %v3179
  %v3181 = vpop.xlane.xlu0 %3180
  %v3182 = vsel %vm86, %v3174, 0.0
  %3183 = vadd.xlane.f32.xlu0 %v3182
  %v3184 = vpop.xlane.xlu0 %3183
  %v3185 = vsel %vm86, %v3175, 0.0
  %3186 = vadd.xlane.f32.xlu0 %v3185
  %v3187 = vpop.xlane.xlu0 %3186
  %v3188 = vmul.f32 %v3178, %v1349
  %v3189 = vmul.f32 %v3181, %v1349
  %v3190 = vmul.f32 %v3184, %v1349
  %v3191 = vmul.f32 %v3187, %v1349
  %v3192 = vsub.f32 %v3172, %v3188
  %v3193 = vsub.f32 %v3173, %v3189
  %v3194 = vsub.f32 %v3174, %v3190
  %v3195 = vsub.f32 %v3175, %v3191
  %v3196 = vmul.f32 %v3192, %v3192
  %v3197 = vmul.f32 %v3193, %v3193
  %v3198 = vmul.f32 %v3194, %v3194
  %v3199 = vmul.f32 %v3195, %v3195
  %v3200 = vsel %vm86, %v3196, 0.0
  %3201 = vadd.xlane.f32.xlu0 %v3200
  %v3202 = vpop.xlane.xlu0 %3201
  %v3203 = vsel %vm86, %v3197, 0.0
  %3204 = vadd.xlane.f32.xlu0 %v3203
  %v3205 = vpop.xlane.xlu0 %3204
  %v3206 = vsel %vm86, %v3198, 0.0
  %3207 = vadd.xlane.f32.xlu0 %v3206
  %v3208 = vpop.xlane.xlu0 %3207
  %v3209 = vsel %vm86, %v3199, 0.0
  %3210 = vadd.xlane.f32.xlu0 %v3209
  %v3211 = vpop.xlane.xlu0 %3210
  %v3212 = vmul.f32 %v3202, %v1349
  %v3213 = vmul.f32 %v3205, %v1349
  %v3214 = vmul.f32 %v3208, %v1349
  %v3215 = vmul.f32 %v3211, %v1349
  %v3216 = vadd.f32 %v3212, 1e-05
  %v3217 = vadd.f32 %v3213, 1e-05
  %v3218 = vadd.f32 %v3214, 1e-05
  %v3219 = vadd.f32 %v3215, 1e-05
  %v3220 = vrsqrt.pop %v3216
  %v3221 = vrsqrt.pop %v3217
  %v3222 = vrsqrt.pop %v3218
  %v3223 = vrsqrt.pop %v3219
  %v3224 = vmul.f32 %v3192, %v3220
  %v3225 = vmul.f32 %v3193, %v3221
  %v3226 = vmul.f32 %v3194, %v3222
  %v3227 = vmul.f32 %v3195, %v3223
  %v3228 = vlaneseq
  %v3229 = vshrl.u32 %v3228, 7
  %v3230 = vsub.s32 7, %v3229
  %v3231 = vrot.slane %v1671, %v3230
  %v3232 = vmul.f32 %v3224, %v3231
  %v3233 = vmul.f32 %v3225, %v3231
  %v3234 = vmul.f32 %v3226, %v3231
  %v3235 = vmul.f32 %v3227, %v3231
  %v3236 = vlaneseq
  %v3237 = vshrl.u32 %v3236, 7
  %v3238 = vsub.s32 0, %v3237
  %v3239 = vrot.slane %v1672, %v3238
  %v3240 = vadd.f32 %v3232, %v3239
  %v3241 = vadd.f32 %v3233, %v3239
  %v3242 = vadd.f32 %v3234, %v3239
  %v3243 = vadd.f32 %v3235, %v3239
  %3244 = vst.msk [vmem:[%s8] sm:$0xff] %vm86, %v3240
  %3245 = vst.msk [vmem:[%s8 + $0x8] sm:$0xff] %vm86, %v3241
  %3246 = vst.msk [vmem:[%s8 + $0x10] sm:$0xff] %vm86, %v3242
  %3247 = vst.msk [vmem:[%s8 + $0x18] sm:$0xff] %vm86, %v3243
  // Predicated region
  $region34: #{transformer_encoder.1} parent=0 // pred_check
    _
  $region35: #{transformer_encoder.1} parent=0 // pred_check_branch
    %3249 = sbr.rel (0) target = $region37
  $region36: #{transformer_encoder.1} parent=0 // pred_region
    _
  $region37: #{transformer_encoder.1} parent=0 // pred_fallthru
    _
  // Predicated region
  $region38: #{transformer_encoder.1} parent=0 // pred_check
    _
  $region39: #{transformer_encoder.1} parent=0 // pred_check_branch
    %3251 = sbr.rel (0) target = $region41
  $region40: #{transformer_encoder.1} parent=0 // pred_region
    _
  $region41: #{transformer_encoder.1} parent=0 // pred_fallthru
    _

</llo_original>
